<compile_context>
chip_gen: v7x
topology: tpu7x:2x2x1
jax: 0.10.0
libtpu: 0.0.40
codegen_flags: <defaults>
</compile_context>

<pallas_src>
import functools

import jax
import jax.numpy as jnp
from jax import lax
from jax.experimental import pallas as pl
from jax.experimental.pallas import tpu as pltpu

EPS = 1e-3  # nn.BatchNorm2d(..., eps=0.001)


def _round_up(x, m):
    return ((x + m - 1) // m) * m


def _cdiv(a, b):
    return -(-a // b)


def _pick_vmem_limit_bytes():
    # Generation-aware: ~3/4 of per-core VMEM (v5e/v6e: 128 MiB -> 96 MiB, v7x: 64 -> 48 MiB).
    try:
        cap = pltpu.get_tpu_info().vmem_capacity_bytes
    except Exception:
        cap = 64 * 1024 * 1024  # safe for v7x if the query is unavailable
    return int(min(cap * 3 // 4, 100 * 1024 * 1024))


# ---------------------------------------------------------------------------
# Pass 1: in-kernel im2col conv (kh*kw shifted MXU matmuls) + partial BN stats
# ---------------------------------------------------------------------------
def _conv_stats_kernel(x_ref, w_ref, conv_ref, stats_ref, *,
                       th, kh, kw, stride, h_out, w_out, cp):
    # x_ref    : (Hp_pad, Wp, C_in)   bf16  whole padded image of batch n (resident per n)
    # w_ref    : (kh*kw, C_in, Cp)    bf16  resident across the whole grid
    # conv_ref : (th, W_out, Cp)      bf16  conv slab tile
    # stats_ref: (8, Cp)              f32   row 0 = sum, row 1 = sum of squares, rest zero
    t = pl.program_id(1)
    h_base = t * th
    col_sum = jnp.zeros((1, cp), jnp.float32)
    col_sq = jnp.zeros((1, cp), jnp.float32)
    for r in range(th):                              # static unroll
        acc = jnp.zeros((w_out, cp), jnp.float32)
        h_in = (h_base + r) * stride
        for i in range(kh):
            for j in range(kw):
                if stride == 1:
                    cols = pl.ds(j, w_out)
                else:
                    # TODO(synk): strided window path is unexercised by the demo (stride=1).
                    cols = pl.ds(j, w_out, stride)
                lhs = x_ref[h_in + i, cols, :]                      # (W_out, C_in) bf16
                acc += jnp.dot(lhs, w_ref[i * kw + j],
                               preferred_element_type=jnp.float32)  # MXU, f32 accum
        conv_ref[r] = acc.astype(conv_ref.dtype)
        # Rows past H_out (H_out padded up to a multiple of th) must not bias the stats.
        valid = ((h_base + r) < h_out).astype(jnp.float32)
        col_sum = col_sum + valid * jnp.sum(acc, axis=0, keepdims=True)
        col_sq = col_sq + valid * jnp.sum(acc * acc, axis=0, keepdims=True)
    # Single full-block store (8 sublanes), no masked partial stores.
    stats_ref[...] = jnp.concatenate(
        [col_sum, col_sq, jnp.zeros((6, cp), jnp.float32)], axis=0)


# ---------------------------------------------------------------------------
# Pass 2: BN finalize (from partials) + scale/shift + ReLU, all in-kernel
# ---------------------------------------------------------------------------
def _bn_relu_kernel(conv_ref, stats_ref, gamma_ref, beta_ref, o_ref, *, inv_count):
    # conv_ref : (th, W_out, Cp) bf16 ; stats_ref: (N, n_h_tiles, 8, Cp) f32 (resident)
    # gamma_ref/beta_ref: (1, Cp) f32 (resident) ; o_ref: (th, W_out, Cp) f32
    sums = jnp.sum(stats_ref[...], axis=(0, 1))       # (8, Cp) -- tiny reduce, f32
    mean = sums[0:1, :] * inv_count
    ex2 = sums[1:2, :] * inv_count
    var = jnp.maximum(ex2 - mean * mean, 0.0)         # biased (train-mode) variance
    scale = gamma_ref[...] * lax.rsqrt(var + EPS)     # (1, Cp)
    shift = beta_ref[...] - mean * scale
    y = conv_ref[...].astype(jnp.float32) * scale + shift
    o_ref[...] = jnp.maximum(y, 0.0)


# ---------------------------------------------------------------------------
# Wrapper
# ---------------------------------------------------------------------------
@functools.partial(jax.jit, static_argnames=("stride", "padding", "tile_h"))
def conv_bn_relu(x_nchw, weight, gamma, beta, *, stride=1, padding=0, tile_h=None):
    """ConvBNReLU forward (PyTorch semantics, train-mode BN), groups=1.

    x_nchw : (N, C_in, H, W) f32 ; weight : (C_out, C_in, kH, kW) f32 (bias=False)
    gamma, beta : (C_out,) f32 ; returns (N, C_out, H_out, W_out) f32
    """
    N, C_in, H, W = x_nchw.shape
    C_out, C_in_w, kh, kw = weight.shape
    assert C_in_w == C_in, "groups != 1 not supported"  # TODO(synk): grouped conv

    H_out = (H + 2 * padding - kh) // stride + 1
    W_out = (W + 2 * padding - kw) // stride + 1

    # ---- tiling ------------------------------------------------------------
    if tile_h is None:
        tile_h = max(1, min(H_out, 8, 1024 // max(W_out, 1)))
    th = max(1, min(int(tile_h), H_out))
    n_h_tiles = _cdiv(H_out, th)
    if (N * n_h_tiles) % 2 == 1 and H_out > 1:
        # Prefer an even number of grid steps so both v7x TensorCores stay busy.
        th = max(1, _cdiv(th, 2))
        n_h_tiles = _cdiv(H_out, th)
    H_out_pad = n_h_tiles * th

    Cp = _round_up(C_out, 128)          # lane-dense output channels / MXU result width

    # ---- host-side layout prep (no im2col materialization) -----------------
    Wp = W + 2 * padding                              # >= (W_out-1)*stride + kw always
    Hp_pad = (H_out_pad - 1) * stride + kh            # rows the kernel may read
    x_nhwc = jnp.transpose(x_nchw, (0, 2, 3, 1))
    xp = jnp.pad(x_nhwc, ((0, 0), (padding, padding), (padding, padding), (0, 0)))
    if xp.shape[1] < Hp_pad:
        xp = jnp.pad(xp, ((0, 0), (0, Hp_pad - xp.shape[1]), (0, 0), (0, 0)))
    elif xp.shape[1] > Hp_pad:
        xp = xp[:, :Hp_pad]
    xp = xp.astype(jnp.bfloat16)                       # (N, Hp_pad, Wp, C_in)

    # weight -> (kh*kw, C_in, Cp); (i, j)-major so w_ref[i*kw + j] is (C_in, Cp)
    w_r = jnp.transpose(weight, (2, 3, 1, 0)).reshape(kh * kw, C_in, C_out)
    w_r = jnp.pad(w_r, ((0, 0), (0, 0), (0, Cp - C_out))).astype(jnp.bfloat16)

    gamma_p = jnp.pad(gamma.astype(jnp.float32), (0, Cp - C_out)).reshape(1, Cp)
    beta_p = jnp.pad(beta.astype(jnp.float32), (0, Cp - C_out)).reshape(1, Cp)

    grid = (N, n_h_tiles)
    cparams = pltpu.CompilerParams(
        dimension_semantics=("parallel", "parallel"),
        vmem_limit_bytes=_pick_vmem_limit_bytes(),
    )

    conv_elems = N * H_out_pad * W_out * Cp
    stats_bytes = N * n_h_tiles * 8 * Cp * 4
    cost1 = pl.CostEstimate(
        flops=2 * N * H_out_pad * W_out * kh * kw * C_in * Cp,
        transcendentals=0,
        bytes_accessed=xp.size * 2 + w_r.size * 2 + conv_elems * 2 + stats_bytes,
    )
    cost2 = pl.CostEstimate(
        flops=4 * conv_elems,
        transcendentals=N * n_h_tiles * Cp,
        bytes_accessed=conv_elems * 2 + conv_elems * 4 + stats_bytes + 2 * Cp * 4,
    )

    kern1 = functools.partial(_conv_stats_kernel, th=th, kh=kh, kw=kw,
                              stride=stride, h_out=H_out, w_out=W_out, cp=Cp)

    # ---- pass 1: conv (in-kernel im2col) + partial stats --------------------
    conv_slab, partial_stats = pl.pallas_call(
        kern1,
        out_shape=(
            jax.ShapeDtypeStruct((N, H_out_pad, W_out, Cp), jnp.bfloat16),  # bf16 slab
            jax.ShapeDtypeStruct((N, n_h_tiles, 8, Cp), jnp.float32),
        ),
        grid=grid,
        in_specs=[
            # whole padded image of batch n stays resident while its h-tiles run
            pl.BlockSpec((None, Hp_pad, Wp, C_in), lambda n, t: (n, 0, 0, 0)),
            # weight resident across the whole grid (constant index_map)
            pl.BlockSpec((kh * kw, C_in, Cp), lambda n, t: (0, 0, 0)),
        ],
        out_specs=(
            pl.BlockSpec((None, th, W_out, Cp), lambda n, t: (n, t, 0, 0)),
            pl.BlockSpec((None, None, 8, Cp), lambda n, t: (n, t, 0, 0)),
        ),
        compiler_params=cparams,
        cost_estimate=cost1,
    )(xp, w_r)

    # ---- pass 2: finalize BN from partials + scale/shift + ReLU -------------
    inv_count = 1.0 / float(N * H_out * W_out)  # true element count (padded rows masked)
    kern2 = functools.partial(_bn_relu_kernel, inv_count=inv_count)

    out_slab = pl.pallas_call(
        kern2,
        out_shape=jax.ShapeDtypeStruct((N, H_out_pad, W_out, Cp), jnp.float32),
        grid=grid,
        in_specs=[
            pl.BlockSpec((None, th, W_out, Cp), lambda n, t: (n, t, 0, 0)),
            pl.BlockSpec((N, n_h_tiles, 8, Cp), lambda n, t: (0, 0, 0, 0)),
            pl.BlockSpec((1, Cp), lambda n, t: (0, 0)),
            pl.BlockSpec((1, Cp), lambda n, t: (0, 0)),
        ],
        out_specs=pl.BlockSpec((None, th, W_out, Cp), lambda n, t: (n, t, 0, 0)),
        compiler_params=cparams,
        cost_estimate=cost2,
    )(conv_slab, partial_stats, gamma_p, beta_p)

    out = out_slab[:, :H_out, :, :C_out]
    # NHWC->NCHW only to honour the PyTorch module's layout contract; in a real
    # pipeline keep NHWC and fuse this transpose into the consumer (perf review #10).
    return jnp.transpose(out, (0, 3, 1, 2))


def _reference(x, w, gamma, beta, stride, padding):
    """Pure-JAX reference mirroring the PyTorch module (train-mode BN)."""
    conv = lax.conv_general_dilated(
        x, w, (stride, stride), [(padding, padding), (padding, padding)],
        dimension_numbers=("NCHW", "OIHW", "NCHW"))
    mean = conv.mean(axis=(0, 2, 3), keepdims=True)
    var = ((conv - mean) ** 2).mean(axis=(0, 2, 3), keepdims=True)
    xhat = (conv - mean) / jnp.sqrt(var + EPS)
    y = xhat * gamma.reshape(1, -1, 1, 1) + beta.reshape(1, -1, 1, 1)
    return jnp.maximum(y, 0.0)


if __name__ == "__main__":
    # ConvBNReLU(in_channels=4, out_channels=8, kernel_size=3, stride=1, padding=1)
    N, C_in, H, W = 2, 4, 16, 16
    C_out, ksize, stride, padding = 8, 3, 1, 1

    key = jax.random.PRNGKey(0)
    kx, kw_, kg, kb = jax.random.split(key, 4)

    x = jax.random.normal(kx, (N, C_in, H, W), dtype=jnp.float32)
    fan_in = C_in * ksize * ksize
    weight = jax.random.normal(kw_, (C_out, C_in, ksize, ksize), dtype=jnp.float32) / jnp.sqrt(fan_in)
    gamma = 1.0 + 0.1 * jax.random.normal(kg, (C_out,), dtype=jnp.float32)
    beta = 0.1 * jax.random.normal(kb, (C_out,), dtype=jnp.float32)

    # tile_h=4 -> 4 h-tiles per image (8 grid steps), exercising multi-tile BN stats.
    out = conv_bn_relu(x, weight, gamma, beta, stride=stride, padding=padding, tile_h=4)
    out = jax.block_until_ready(out)

    ref = _reference(x, weight, gamma, beta, stride, padding)
    assert out.shape == (N, C_out, H, W), out.shape
    # bf16 MXU inputs + bf16 conv slab -> slightly looser tolerance vs the f32 reference.
    max_err = float(jnp.max(jnp.abs(out - ref)))
    assert jnp.allclose(out, ref, atol=2e-2, rtol=2e-2), max_err

    print("KERNEL_OK")
</pallas_src>

<mosaic_0001>
module attributes {stable_mosaic.version = 11 : i64} {
  func.func @_bn_relu_kernel(%arg0: i32, %arg1: i32, %arg2: memref<1x4x16x128xbf16, #tpu.memory_space<vmem>>, %arg3: memref<2x4x8x128xf32, #tpu.memory_space<vmem>>, %arg4: memref<1x128xf32, #tpu.memory_space<vmem>>, %arg5: memref<1x128xf32, #tpu.memory_space<vmem>>, %arg6: memref<1x4x16x128xf32, #tpu.memory_space<vmem>>) attributes {dimension_semantics = [#tpu.dimension_semantics<parallel>, #tpu.dimension_semantics<parallel>], iteration_bounds = array<i64: 2, 4>, scalar_prefetch = 0 : i64, scratch_operands = 0 : i64, tpu.core_type = #tpu.core_type<tc>, window_params = [{transform_indices = @transform_0, window_bounds = array<i64: 1, 4, 16, 128>}, {pipeline_mode = #tpu.pipeline_mode<synchronous>, transform_indices = @transform_1, window_bounds = array<i64: 2, 4, 8, 128>}, {pipeline_mode = #tpu.pipeline_mode<synchronous>, transform_indices = @transform_2, window_bounds = array<i64: 1, 128>}, {pipeline_mode = #tpu.pipeline_mode<synchronous>, transform_indices = @transform_3, window_bounds = array<i64: 1, 128>}, {transform_indices = @transform_4, window_bounds = array<i64: 1, 4, 16, 128>}]} {
    %c0 = arith.constant 0 : index
    %c0_0 = arith.constant 0 : index
    %c0_1 = arith.constant 0 : index
    %c0_2 = arith.constant 0 : index
    %0 = vector.load %arg3[%c0, %c0_0, %c0_1, %c0_2] : memref<2x4x8x128xf32, #tpu.memory_space<vmem>>, vector<2x4x8x128xf32>
    %cst = arith.constant dense<0.000000e+00> : vector<8x128xf32>
    %1 = vector.multi_reduction <add>, %0, %cst [0, 1] : vector<2x4x8x128xf32> to vector<8x128xf32>
    %2 = vector.extract_strided_slice %1 {offsets = [0, 0], sizes = [1, 128], strides = [1, 1]} : vector<8x128xf32> to vector<1x128xf32>
    %cst_3 = arith.constant 0.001953125 : f32
    %3 = vector.broadcast %cst_3 : f32 to vector<1x128xf32>
    %4 = arith.mulf %2, %3 : vector<1x128xf32>
    %5 = vector.extract_strided_slice %1 {offsets = [1, 0], sizes = [1, 128], strides = [1, 1]} : vector<8x128xf32> to vector<1x128xf32>
    %cst_4 = arith.constant 0.001953125 : f32
    %6 = vector.broadcast %cst_4 : f32 to vector<1x128xf32>
    %7 = arith.mulf %5, %6 : vector<1x128xf32>
    %8 = arith.mulf %4, %4 : vector<1x128xf32>
    %9 = arith.subf %7, %8 : vector<1x128xf32>
    %cst_5 = arith.constant 0.000000e+00 : f32
    %10 = vector.broadcast %cst_5 : f32 to vector<1x128xf32>
    %11 = arith.maximumf %9, %10 : vector<1x128xf32>
    %c0_6 = arith.constant 0 : index
    %c0_7 = arith.constant 0 : index
    %12 = vector.load %arg4[%c0_6, %c0_7] : memref<1x128xf32, #tpu.memory_space<vmem>>, vector<1x128xf32>
    %cst_8 = arith.constant 1.000000e-03 : f32
    %13 = vector.broadcast %cst_8 : f32 to vector<1x128xf32>
    %14 = arith.addf %11, %13 : vector<1x128xf32>
    %15 = math.rsqrt %14 : vector<1x128xf32>
    %16 = arith.mulf %12, %15 : vector<1x128xf32>
    %c0_9 = arith.constant 0 : index
    %c0_10 = arith.constant 0 : index
    %17 = vector.load %arg5[%c0_9, %c0_10] : memref<1x128xf32, #tpu.memory_space<vmem>>, vector<1x128xf32>
    %18 = arith.mulf %4, %16 : vector<1x128xf32>
    %19 = arith.subf %17, %18 : vector<1x128xf32>
    %c0_11 = arith.constant 0 : index
    %c0_12 = arith.constant 0 : index
    %c0_13 = arith.constant 0 : index
    %c0_14 = arith.constant 0 : index
    %20 = vector.load %arg2[%c0_11, %c0_12, %c0_13, %c0_14] : memref<1x4x16x128xbf16, #tpu.memory_space<vmem>>, vector<1x4x16x128xbf16>
    %21 = vector.shape_cast %20 : vector<1x4x16x128xbf16> to vector<4x16x128xbf16>
    %22 = arith.extf %21 : vector<4x16x128xbf16> to vector<4x16x128xf32>
    %23 = vector.shape_cast %16 : vector<1x128xf32> to vector<1x1x128xf32>
    %24 = vector.broadcast %23 : vector<1x1x128xf32> to vector<4x16x128xf32>
    %25 = arith.mulf %22, %24 : vector<4x16x128xf32>
    %26 = vector.shape_cast %19 : vector<1x128xf32> to vector<1x1x128xf32>
    %27 = vector.broadcast %26 : vector<1x1x128xf32> to vector<4x16x128xf32>
    %28 = arith.addf %25, %27 : vector<4x16x128xf32>
    %cst_15 = arith.constant 0.000000e+00 : f32
    %29 = vector.broadcast %cst_15 : f32 to vector<4x16x128xf32>
    %30 = arith.maximumf %28, %29 : vector<4x16x128xf32>
    %c0_16 = arith.constant 0 : index
    %c0_17 = arith.constant 0 : index
    %c0_18 = arith.constant 0 : index
    %c0_19 = arith.constant 0 : index
    %31 = vector.load %arg6[%c0_16, %c0_17, %c0_18, %c0_19] : memref<1x4x16x128xf32, #tpu.memory_space<vmem>>, vector<1x4x16x128xf32>
    %32 = vector.shape_cast %31 : vector<1x4x16x128xf32> to vector<4x16x128xf32>
    %33 = vector.shape_cast %30 : vector<4x16x128xf32> to vector<1x4x16x128xf32>
    tpu.vector_store %arg6[%c0_16, %c0_17, %c0_18, %c0_19], %33 {strides = array<i32>} : memref<1x4x16x128xf32, #tpu.memory_space<vmem>>, vector<1x4x16x128xf32>,
    return
  }
  func.func @transform_0(%arg0: i32, %arg1: i32) -> (i32, i32, i32, i32) {
    %c0_i32 = arith.constant 0 : i32
    %c0_i32_0 = arith.constant 0 : i32
    %c0_i32_1 = arith.constant 0 : i32
    return %arg0, %arg1, %c0_i32, %c0_i32_0 : i32, i32, i32, i32
  }
  func.func @transform_1(%arg0: i32, %arg1: i32) -> (i32, i32, i32, i32) {
    %c0_i32 = arith.constant 0 : i32
    %c0_i32_0 = arith.constant 0 : i32
    %c0_i32_1 = arith.constant 0 : i32
    %c0_i32_2 = arith.constant 0 : i32
    %c0_i32_3 = arith.constant 0 : i32
    return %c0_i32, %c0_i32_0, %c0_i32_1, %c0_i32_2 : i32, i32, i32, i32
  }
  func.func @transform_2(%arg0: i32, %arg1: i32) -> (i32, i32) {
    %c0_i32 = arith.constant 0 : i32
    %c0_i32_0 = arith.constant 0 : i32
    %c0_i32_1 = arith.constant 0 : i32
    return %c0_i32, %c0_i32_0 : i32, i32
  }
  func.func @transform_3(%arg0: i32, %arg1: i32) -> (i32, i32) {
    %c0_i32 = arith.constant 0 : i32
    %c0_i32_0 = arith.constant 0 : i32
    %c0_i32_1 = arith.constant 0 : i32
    return %c0_i32, %c0_i32_0 : i32, i32
  }
  func.func @transform_4(%arg0: i32, %arg1: i32) -> (i32, i32, i32, i32) {
    %c0_i32 = arith.constant 0 : i32
    %c0_i32_0 = arith.constant 0 : i32
    %c0_i32_1 = arith.constant 0 : i32
    return %arg0, %arg1, %c0_i32, %c0_i32_0 : i32, i32, i32, i32
  }
}

module attributes {stable_mosaic.version = 11 : i64} {
  func.func @_conv_stats_kernel(%arg0: i32, %arg1: i32, %arg2: memref<1x18x18x4xbf16, #tpu.memory_space<vmem>>, %arg3: memref<9x4x128xbf16, #tpu.memory_space<vmem>>, %arg4: memref<1x4x16x128xbf16, #tpu.memory_space<vmem>>, %arg5: memref<1x1x8x128xf32, #tpu.memory_space<vmem>>) attributes {dimension_semantics = [#tpu.dimension_semantics<parallel>, #tpu.dimension_semantics<parallel>], iteration_bounds = array<i64: 2, 4>, scalar_prefetch = 0 : i64, scratch_operands = 0 : i64, tpu.core_type = #tpu.core_type<tc>, window_params = [{transform_indices = @transform_0, window_bounds = array<i64: 1, 18, 18, 4>}, {pipeline_mode = #tpu.pipeline_mode<synchronous>, transform_indices = @transform_1, window_bounds = array<i64: 9, 4, 128>}, {transform_indices = @transform_2, window_bounds = array<i64: 1, 4, 16, 128>}, {transform_indices = @transform_3, window_bounds = array<i64: 1, 1, 8, 128>}]} {
    %c4_i32 = arith.constant 4 : i32
    %0 = arith.muli %arg1, %c4_i32 : i32
    %cst = arith.constant 0.000000e+00 : f32
    %1 = vector.broadcast %cst : f32 to vector<1x128xf32>
    %cst_0 = arith.constant 0.000000e+00 : f32
    %2 = vector.broadcast %cst_0 : f32 to vector<1x128xf32>
    %cst_1 = arith.constant 0.000000e+00 : f32
    %3 = vector.broadcast %cst_1 : f32 to vector<16x128xf32>
    %c0_i32 = arith.constant 0 : i32
    %4 = arith.addi %0, %c0_i32 : i32
    %c1_i32 = arith.constant 1 : i32
    %5 = arith.muli %4, %c1_i32 : i32
    %c0_i32_2 = arith.constant 0 : i32
    %6 = arith.addi %5, %c0_i32_2 : i32
    %c0 = arith.constant 0 : index
    %7 = arith.index_cast %6 : i32 to index
    %c0_3 = arith.constant 0 : index
    %c0_4 = arith.constant 0 : index
    %8 = vector.load %arg2[%c0, %7, %c0_3, %c0_4] : memref<1x18x18x4xbf16, #tpu.memory_space<vmem>>, vector<1x1x16x4xbf16>
    %9 = vector.shape_cast %8 : vector<1x1x16x4xbf16> to vector<16x4xbf16>
    %c0_5 = arith.constant 0 : index
    %c0_6 = arith.constant 0 : index
    %c0_7 = arith.constant 0 : index
    %10 = vector.load %arg3[%c0_5, %c0_6, %c0_7] : memref<9x4x128xbf16, #tpu.memory_space<vmem>>, vector<1x4x128xbf16>
    %11 = vector.shape_cast %10 : vector<1x4x128xbf16> to vector<4x128xbf16>
    %cst_8 = arith.constant dense<0.000000e+00> : vector<16x128xf32>
    %12 = tpu.matmul %9, %11, %cst_8 {dimension_numbers = #tpu.dot_dimension_numbers<[1], [0], [0], [1], [0, 0, 1, 1], [], []>} : vector<16x4xbf16>, vector<4x128xbf16>, vector<16x128xf32> -> vector<16x128xf32>
    %13 = arith.addf %3, %12 : vector<16x128xf32>
    %c0_i32_9 = arith.constant 0 : i32
    %14 = arith.addi %5, %c0_i32_9 : i32
    %c0_10 = arith.constant 0 : index
    %15 = arith.index_cast %14 : i32 to index
    %c1 = arith.constant 1 : index
    %c0_11 = arith.constant 0 : index
    %16 = vector.load %arg2[%c0_10, %15, %c1, %c0_11] : memref<1x18x18x4xbf16, #tpu.memory_space<vmem>>, vector<1x1x16x4xbf16>
    %17 = vector.shape_cast %16 : vector<1x1x16x4xbf16> to vector<16x4xbf16>
    %c1_12 = arith.constant 1 : index
    %c0_13 = arith.constant 0 : index
    %c0_14 = arith.constant 0 : index
    %18 = vector.load %arg3[%c1_12, %c0_13, %c0_14] : memref<9x4x128xbf16, #tpu.memory_space<vmem>>, vector<1x4x128xbf16>
    %19 = vector.shape_cast %18 : vector<1x4x128xbf16> to vector<4x128xbf16>
    %cst_15 = arith.constant dense<0.000000e+00> : vector<16x128xf32>
    %20 = tpu.matmul %17, %19, %cst_15 {dimension_numbers = #tpu.dot_dimension_numbers<[1], [0], [0], [1], [0, 0, 1, 1], [], []>} : vector<16x4xbf16>, vector<4x128xbf16>, vector<16x128xf32> -> vector<16x128xf32>
    %21 = arith.addf %13, %20 : vector<16x128xf32>
    %c0_i32_16 = arith.constant 0 : i32
    %22 = arith.addi %5, %c0_i32_16 : i32
    %c0_17 = arith.constant 0 : index
    %23 = arith.index_cast %22 : i32 to index
    %c2 = arith.constant 2 : index
    %c0_18 = arith.constant 0 : index
    %24 = vector.load %arg2[%c0_17, %23, %c2, %c0_18] : memref<1x18x18x4xbf16, #tpu.memory_space<vmem>>, vector<1x1x16x4xbf16>
    %25 = vector.shape_cast %24 : vector<1x1x16x4xbf16> to vector<16x4xbf16>
    %c2_19 = arith.constant 2 : index
    %c0_20 = arith.constant 0 : index
    %c0_21 = arith.constant 0 : index
    %26 = vector.load %arg3[%c2_19, %c0_20, %c0_21] : memref<9x4x128xbf16, #tpu.memory_space<vmem>>, vector<1x4x128xbf16>
    %27 = vector.shape_cast %26 : vector<1x4x128xbf16> to vector<4x128xbf16>
    %cst_22 = arith.constant dense<0.000000e+00> : vector<16x128xf32>
    %28 = tpu.matmul %25, %27, %cst_22 {dimension_numbers = #tpu.dot_dimension_numbers<[1], [0], [0], [1], [0, 0, 1, 1], [], []>} : vector<16x4xbf16>, vector<4x128xbf16>, vector<16x128xf32> -> vector<16x128xf32>
    %29 = arith.addf %21, %28 : vector<16x128xf32>
    %c1_i32_23 = arith.constant 1 : i32
    %30 = arith.addi %5, %c1_i32_23 : i32
    %c0_24 = arith.constant 0 : index
    %31 = arith.index_cast %30 : i32 to index
    %c0_25 = arith.constant 0 : index
    %c0_26 = arith.constant 0 : index
    %32 = vector.load %arg2[%c0_24, %31, %c0_25, %c0_26] : memref<1x18x18x4xbf16, #tpu.memory_space<vmem>>, vector<1x1x16x4xbf16>
    %33 = vector.shape_cast %32 : vector<1x1x16x4xbf16> to vector<16x4xbf16>
    %c3 = arith.constant 3 : index
    %c0_27 = arith.constant 0 : index
    %c0_28 = arith.constant 0 : index
    %34 = vector.load %arg3[%c3, %c0_27, %c0_28] : memref<9x4x128xbf16, #tpu.memory_space<vmem>>, vector<1x4x128xbf16>
    %35 = vector.shape_cast %34 : vector<1x4x128xbf16> to vector<4x128xbf16>
    %cst_29 = arith.constant dense<0.000000e+00> : vector<16x128xf32>
    %36 = tpu.matmul %33, %35, %cst_29 {dimension_numbers = #tpu.dot_dimension_numbers<[1], [0], [0], [1], [0, 0, 1, 1], [], []>} : vector<16x4xbf16>, vector<4x128xbf16>, vector<16x128xf32> -> vector<16x128xf32>
    %37 = arith.addf %29, %36 : vector<16x128xf32>
    %c1_i32_30 = arith.constant 1 : i32
    %38 = arith.addi %5, %c1_i32_30 : i32
    %c0_31 = arith.constant 0 : index
    %39 = arith.index_cast %38 : i32 to index
    %c1_32 = arith.constant 1 : index
    %c0_33 = arith.constant 0 : index
    %40 = vector.load %arg2[%c0_31, %39, %c1_32, %c0_33] : memref<1x18x18x4xbf16, #tpu.memory_space<vmem>>, vector<1x1x16x4xbf16>
    %41 = vector.shape_cast %40 : vector<1x1x16x4xbf16> to vector<16x4xbf16>
    %c4 = arith.constant 4 : index
    %c0_34 = arith.constant 0 : index
    %c0_35 = arith.constant 0 : index
    %42 = vector.load %arg3[%c4, %c0_34, %c0_35] : memref<9x4x128xbf16, #tpu.memory_space<vmem>>, vector<1x4x128xbf16>
    %43 = vector.shape_cast %42 : vector<1x4x128xbf16> to vector<4x128xbf16>
    %cst_36 = arith.constant dense<0.000000e+00> : vector<16x128xf32>
    %44 = tpu.matmul %41, %43, %cst_36 {dimension_numbers = #tpu.dot_dimension_numbers<[1], [0], [0], [1], [0, 0, 1, 1], [], []>} : vector<16x4xbf16>, vector<4x128xbf16>, vector<16x128xf32> -> vector<16x128xf32>
    %45 = arith.addf %37, %44 : vector<16x128xf32>
    %c1_i32_37 = arith.constant 1 : i32
    %46 = arith.addi %5, %c1_i32_37 : i32
    %c0_38 = arith.constant 0 : index
    %47 = arith.index_cast %46 : i32 to index
    %c2_39 = arith.constant 2 : index
    %c0_40 = arith.constant 0 : index
    %48 = vector.load %arg2[%c0_38, %47, %c2_39, %c0_40] : memref<1x18x18x4xbf16, #tpu.memory_space<vmem>>, vector<1x1x16x4xbf16>
    %49 = vector.shape_cast %48 : vector<1x1x16x4xbf16> to vector<16x4xbf16>
    %c5 = arith.constant 5 : index
    %c0_41 = arith.constant 0 : index
    %c0_42 = arith.constant 0 : index
    %50 = vector.load %arg3[%c5, %c0_41, %c0_42] : memref<9x4x128xbf16, #tpu.memory_space<vmem>>, vector<1x4x128xbf16>
    %51 = vector.shape_cast %50 : vector<1x4x128xbf16> to vector<4x128xbf16>
    %cst_43 = arith.constant dense<0.000000e+00> : vector<16x128xf32>
    %52 = tpu.matmul %49, %51, %cst_43 {dimension_numbers = #tpu.dot_dimension_numbers<[1], [0], [0], [1], [0, 0, 1, 1], [], []>} : vector<16x4xbf16>, vector<4x128xbf16>, vector<16x128xf32> -> vector<16x128xf32>
    %53 = arith.addf %45, %52 : vector<16x128xf32>
    %c2_i32 = arith.constant 2 : i32
    %54 = arith.addi %5, %c2_i32 : i32
    %c0_44 = arith.constant 0 : index
    %55 = arith.index_cast %54 : i32 to index
    %c0_45 = arith.constant 0 : index
    %c0_46 = arith.constant 0 : index
    %56 = vector.load %arg2[%c0_44, %55, %c0_45, %c0_46] : memref<1x18x18x4xbf16, #tpu.memory_space<vmem>>, vector<1x1x16x4xbf16>
    %57 = vector.shape_cast %56 : vector<1x1x16x4xbf16> to vector<16x4xbf16>
    %c6 = arith.constant 6 : index
    %c0_47 = arith.constant 0 : index
    %c0_48 = arith.constant 0 : index
    %58 = vector.load %arg3[%c6, %c0_47, %c0_48] : memref<9x4x128xbf16, #tpu.memory_space<vmem>>, vector<1x4x128xbf16>
    %59 = vector.shape_cast %58 : vector<1x4x128xbf16> to vector<4x128xbf16>
    %cst_49 = arith.constant dense<0.000000e+00> : vector<16x128xf32>
    %60 = tpu.matmul %57, %59, %cst_49 {dimension_numbers = #tpu.dot_dimension_numbers<[1], [0], [0], [1], [0, 0, 1, 1], [], []>} : vector<16x4xbf16>, vector<4x128xbf16>, vector<16x128xf32> -> vector<16x128xf32>
    %61 = arith.addf %53, %60 : vector<16x128xf32>
    %c2_i32_50 = arith.constant 2 : i32
    %62 = arith.addi %5, %c2_i32_50 : i32
    %c0_51 = arith.constant 0 : index
    %63 = arith.index_cast %62 : i32 to index
    %c1_52 = arith.constant 1 : index
    %c0_53 = arith.constant 0 : index
    %64 = vector.load %arg2[%c0_51, %63, %c1_52, %c0_53] : memref<1x18x18x4xbf16, #tpu.memory_space<vmem>>, vector<1x1x16x4xbf16>
    %65 = vector.shape_cast %64 : vector<1x1x16x4xbf16> to vector<16x4xbf16>
    %c7 = arith.constant 7 : index
    %c0_54 = arith.constant 0 : index
    %c0_55 = arith.constant 0 : index
    %66 = vector.load %arg3[%c7, %c0_54, %c0_55] : memref<9x4x128xbf16, #tpu.memory_space<vmem>>, vector<1x4x128xbf16>
    %67 = vector.shape_cast %66 : vector<1x4x128xbf16> to vector<4x128xbf16>
    %cst_56 = arith.constant dense<0.000000e+00> : vector<16x128xf32>
    %68 = tpu.matmul %65, %67, %cst_56 {dimension_numbers = #tpu.dot_dimension_numbers<[1], [0], [0], [1], [0, 0, 1, 1], [], []>} : vector<16x4xbf16>, vector<4x128xbf16>, vector<16x128xf32> -> vector<16x128xf32>
    %69 = arith.addf %61, %68 : vector<16x128xf32>
    %c2_i32_57 = arith.constant 2 : i32
    %70 = arith.addi %5, %c2_i32_57 : i32
    %c0_58 = arith.constant 0 : index
    %71 = arith.index_cast %70 : i32 to index
    %c2_59 = arith.constant 2 : index
    %c0_60 = arith.constant 0 : index
    %72 = vector.load %arg2[%c0_58, %71, %c2_59, %c0_60] : memref<1x18x18x4xbf16, #tpu.memory_space<vmem>>, vector<1x1x16x4xbf16>
    %73 = vector.shape_cast %72 : vector<1x1x16x4xbf16> to vector<16x4xbf16>
    %c8 = arith.constant 8 : index
    %c0_61 = arith.constant 0 : index
    %c0_62 = arith.constant 0 : index
    %74 = vector.load %arg3[%c8, %c0_61, %c0_62] : memref<9x4x128xbf16, #tpu.memory_space<vmem>>, vector<1x4x128xbf16>
    %75 = vector.shape_cast %74 : vector<1x4x128xbf16> to vector<4x128xbf16>
    %cst_63 = arith.constant dense<0.000000e+00> : vector<16x128xf32>
    %76 = tpu.matmul %73, %75, %cst_63 {dimension_numbers = #tpu.dot_dimension_numbers<[1], [0], [0], [1], [0, 0, 1, 1], [], []>} : vector<16x4xbf16>, vector<4x128xbf16>, vector<16x128xf32> -> vector<16x128xf32>
    %77 = arith.addf %69, %76 : vector<16x128xf32>
    %78 = arith.truncf %77 : vector<16x128xf32> to vector<16x128xbf16>
    %c0_64 = arith.constant 0 : index
    %c0_65 = arith.constant 0 : index
    %c0_66 = arith.constant 0 : index
    %c0_67 = arith.constant 0 : index
    %79 = vector.load %arg4[%c0_64, %c0_65, %c0_66, %c0_67] : memref<1x4x16x128xbf16, #tpu.memory_space<vmem>>, vector<1x1x16x128xbf16>
    %80 = vector.shape_cast %79 : vector<1x1x16x128xbf16> to vector<16x128xbf16>
    %81 = vector.shape_cast %78 : vector<16x128xbf16> to vector<1x1x16x128xbf16>
    tpu.vector_store %arg4[%c0_64, %c0_65, %c0_66, %c0_67], %81 {strides = array<i32>} : memref<1x4x16x128xbf16, #tpu.memory_space<vmem>>, vector<1x1x16x128xbf16>,
    %c0_i32_68 = arith.constant 0 : i32
    %82 = arith.addi %0, %c0_i32_68 : i32
    %c16_i32 = arith.constant 16 : i32
    %83 = arith.cmpi slt, %82, %c16_i32 : i32
    %84 = arith.extui %83 : i1 to i32
    %85 = arith.sitofp %84 : i32 to f32
    %cst_69 = arith.constant dense<0.000000e+00> : vector<128xf32>
    %86 = vector.multi_reduction <add>, %77, %cst_69 [0] : vector<16x128xf32> to vector<128xf32>
    %87 = vector.shape_cast %86 : vector<128xf32> to vector<1x128xf32>
    %88 = vector.broadcast %85 : f32 to vector<1x128xf32>
    %89 = arith.mulf %88, %87 : vector<1x128xf32>
    %90 = arith.addf %1, %89 : vector<1x128xf32>
    %91 = arith.mulf %77, %77 : vector<16x128xf32>
    %cst_70 = arith.constant dense<0.000000e+00> : vector<128xf32>
    %92 = vector.multi_reduction <add>, %91, %cst_70 [0] : vector<16x128xf32> to vector<128xf32>
    %93 = vector.shape_cast %92 : vector<128xf32> to vector<1x128xf32>
    %94 = vector.broadcast %85 : f32 to vector<1x128xf32>
    %95 = arith.mulf %94, %93 : vector<1x128xf32>
    %96 = arith.addf %2, %95 : vector<1x128xf32>
    %cst_71 = arith.constant 0.000000e+00 : f32
    %97 = vector.broadcast %cst_71 : f32 to vector<16x128xf32>
    %c1_i32_72 = arith.constant 1 : i32
    %98 = arith.addi %0, %c1_i32_72 : i32
    %c1_i32_73 = arith.constant 1 : i32
    %99 = arith.muli %98, %c1_i32_73 : i32
    %c0_i32_74 = arith.constant 0 : i32
    %100 = arith.addi %99, %c0_i32_74 : i32
    %c0_75 = arith.constant 0 : index
    %101 = arith.index_cast %100 : i32 to index
    %c0_76 = arith.constant 0 : index
    %c0_77 = arith.constant 0 : index
    %102 = vector.load %arg2[%c0_75, %101, %c0_76, %c0_77] : memref<1x18x18x4xbf16, #tpu.memory_space<vmem>>, vector<1x1x16x4xbf16>
    %103 = vector.shape_cast %102 : vector<1x1x16x4xbf16> to vector<16x4xbf16>
    %c0_78 = arith.constant 0 : index
    %c0_79 = arith.constant 0 : index
    %c0_80 = arith.constant 0 : index
    %104 = vector.load %arg3[%c0_78, %c0_79, %c0_80] : memref<9x4x128xbf16, #tpu.memory_space<vmem>>, vector<1x4x128xbf16>
    %105 = vector.shape_cast %104 : vector<1x4x128xbf16> to vector<4x128xbf16>
    %cst_81 = arith.constant dense<0.000000e+00> : vector<16x128xf32>
    %106 = tpu.matmul %103, %105, %cst_81 {dimension_numbers = #tpu.dot_dimension_numbers<[1], [0], [0], [1], [0, 0, 1, 1], [], []>} : vector<16x4xbf16>, vector<4x128xbf16>, vector<16x128xf32> -> vector<16x128xf32>
    %107 = arith.addf %97, %106 : vector<16x128xf32>
    %c0_i32_82 = arith.constant 0 : i32
    %108 = arith.addi %99, %c0_i32_82 : i32
    %c0_83 = arith.constant 0 : index
    %109 = arith.index_cast %108 : i32 to index
    %c1_84 = arith.constant 1 : index
    %c0_85 = arith.constant 0 : index
    %110 = vector.load %arg2[%c0_83, %109, %c1_84, %c0_85] : memref<1x18x18x4xbf16, #tpu.memory_space<vmem>>, vector<1x1x16x4xbf16>
    %111 = vector.shape_cast %110 : vector<1x1x16x4xbf16> to vector<16x4xbf16>
    %c1_86 = arith.constant 1 : index
    %c0_87 = arith.constant 0 : index
    %c0_88 = arith.constant 0 : index
    %112 = vector.load %arg3[%c1_86, %c0_87, %c0_88] : memref<9x4x128xbf16, #tpu.memory_space<vmem>>, vector<1x4x128xbf16>
    %113 = vector.shape_cast %112 : vector<1x4x128xbf16> to vector<4x128xbf16>
    %cst_89 = arith.constant dense<0.000000e+00> : vector<16x128xf32>
    %114 = tpu.matmul %111, %113, %cst_89 {dimension_numbers = #tpu.dot_dimension_numbers<[1], [0], [0], [1], [0, 0, 1, 1], [], []>} : vector<16x4xbf16>, vector<4x128xbf16>, vector<16x128xf32> -> vector<16x128xf32>
    %115 = arith.addf %107, %114 : vector<16x128xf32>
    %c0_i32_90 = arith.constant 0 : i32
    %116 = arith.addi %99, %c0_i32_90 : i32
    %c0_91 = arith.constant 0 : index
    %117 = arith.index_cast %116 : i32 to index
    %c2_92 = arith.constant 2 : index
    %c0_93 = arith.constant 0 : index
    %118 = vector.load %arg2[%c0_91, %117, %c2_92, %c0_93] : memref<1x18x18x4xbf16, #tpu.memory_space<vmem>>, vector<1x1x16x4xbf16>
    %119 = vector.shape_cast %118 : vector<1x1x16x4xbf16> to vector<16x4xbf16>
    %c2_94 = arith.constant 2 : index
    %c0_95 = arith.constant 0 : index
    %c0_96 = arith.constant 0 : index
    %120 = vector.load %arg3[%c2_94, %c0_95, %c0_96] : memref<9x4x128xbf16, #tpu.memory_space<vmem>>, vector<1x4x128xbf16>
    %121 = vector.shape_cast %120 : vector<1x4x128xbf16> to vector<4x128xbf16>
    %cst_97 = arith.constant dense<0.000000e+00> : vector<16x128xf32>
    %122 = tpu.matmul %119, %121, %cst_97 {dimension_numbers = #tpu.dot_dimension_numbers<[1], [0], [0], [1], [0, 0, 1, 1], [], []>} : vector<16x4xbf16>, vector<4x128xbf16>, vector<16x128xf32> -> vector<16x128xf32>
    %123 = arith.addf %115, %122 : vector<16x128xf32>
    %c1_i32_98 = arith.constant 1 : i32
    %124 = arith.addi %99, %c1_i32_98 : i32
    %c0_99 = arith.constant 0 : index
    %125 = arith.index_cast %124 : i32 to index
    %c0_100 = arith.constant 0 : index
    %c0_101 = arith.constant 0 : index
    %126 = vector.load %arg2[%c0_99, %125, %c0_100, %c0_101] : memref<1x18x18x4xbf16, #tpu.memory_space<vmem>>, vector<1x1x16x4xbf16>
    %127 = vector.shape_cast %126 : vector<1x1x16x4xbf16> to vector<16x4xbf16>
    %c3_102 = arith.constant 3 : index
    %c0_103 = arith.constant 0 : index
    %c0_104 = arith.constant 0 : index
    %128 = vector.load %arg3[%c3_102, %c0_103, %c0_104] : memref<9x4x128xbf16, #tpu.memory_space<vmem>>, vector<1x4x128xbf16>
    %129 = vector.shape_cast %128 : vector<1x4x128xbf16> to vector<4x128xbf16>
    %cst_105 = arith.constant dense<0.000000e+00> : vector<16x128xf32>
    %130 = tpu.matmul %127, %129, %cst_105 {dimension_numbers = #tpu.dot_dimension_numbers<[1], [0], [0], [1], [0, 0, 1, 1], [], []>} : vector<16x4xbf16>, vector<4x128xbf16>, vector<16x128xf32> -> vector<16x128xf32>
    %131 = arith.addf %123, %130 : vector<16x128xf32>
    %c1_i32_106 = arith.constant 1 : i32
    %132 = arith.addi %99, %c1_i32_106 : i32
    %c0_107 = arith.constant 0 : index
    %133 = arith.index_cast %132 : i32 to index
    %c1_108 = arith.constant 1 : index
    %c0_109 = arith.constant 0 : index
    %134 = vector.load %arg2[%c0_107, %133, %c1_108, %c0_109] : memref<1x18x18x4xbf16, #tpu.memory_space<vmem>>, vector<1x1x16x4xbf16>
    %135 = vector.shape_cast %134 : vector<1x1x16x4xbf16> to vector<16x4xbf16>
    %c4_110 = arith.constant 4 : index
    %c0_111 = arith.constant 0 : index
    %c0_112 = arith.constant 0 : index
    %136 = vector.load %arg3[%c4_110, %c0_111, %c0_112] : memref<9x4x128xbf16, #tpu.memory_space<vmem>>, vector<1x4x128xbf16>
    %137 = vector.shape_cast %136 : vector<1x4x128xbf16> to vector<4x128xbf16>
    %cst_113 = arith.constant dense<0.000000e+00> : vector<16x128xf32>
    %138 = tpu.matmul %135, %137, %cst_113 {dimension_numbers = #tpu.dot_dimension_numbers<[1], [0], [0], [1], [0, 0, 1, 1], [], []>} : vector<16x4xbf16>, vector<4x128xbf16>, vector<16x128xf32> -> vector<16x128xf32>
    %139 = arith.addf %131, %138 : vector<16x128xf32>
    %c1_i32_114 = arith.constant 1 : i32
    %140 = arith.addi %99, %c1_i32_114 : i32
    %c0_115 = arith.constant 0 : index
    %141 = arith.index_cast %140 : i32 to index
    %c2_116 = arith.constant 2 : index
    %c0_117 = arith.constant 0 : index
    %142 = vector.load %arg2[%c0_115, %141, %c2_116, %c0_117] : memref<1x18x18x4xbf16, #tpu.memory_space<vmem>>, vector<1x1x16x4xbf16>
    %143 = vector.shape_cast %142 : vector<1x1x16x4xbf16> to vector<16x4xbf16>
    %c5_118 = arith.constant 5 : index
    %c0_119 = arith.constant 0 : index
    %c0_120 = arith.constant 0 : index
    %144 = vector.load %arg3[%c5_118, %c0_119, %c0_120] : memref<9x4x128xbf16, #tpu.memory_space<vmem>>, vector<1x4x128xbf16>
    %145 = vector.shape_cast %144 : vector<1x4x128xbf16> to vector<4x128xbf16>
    %cst_121 = arith.constant dense<0.000000e+00> : vector<16x128xf32>
    %146 = tpu.matmul %143, %145, %cst_121 {dimension_numbers = #tpu.dot_dimension_numbers<[1], [0], [0], [1], [0, 0, 1, 1], [], []>} : vector<16x4xbf16>, vector<4x128xbf16>, vector<16x128xf32> -> vector<16x128xf32>
    %147 = arith.addf %139, %146 : vector<16x128xf32>
    %c2_i32_122 = arith.constant 2 : i32
    %148 = arith.addi %99, %c2_i32_122 : i32
    %c0_123 = arith.constant 0 : index
    %149 = arith.index_cast %148 : i32 to index
    %c0_124 = arith.constant 0 : index
    %c0_125 = arith.constant 0 : index
    %150 = vector.load %arg2[%c0_123, %149, %c0_124, %c0_125] : memref<1x18x18x4xbf16, #tpu.memory_space<vmem>>, vector<1x1x16x4xbf16>
    %151 = vector.shape_cast %150 : vector<1x1x16x4xbf16> to vector<16x4xbf16>
    %c6_126 = arith.constant 6 : index
    %c0_127 = arith.constant 0 : index
    %c0_128 = arith.constant 0 : index
    %152 = vector.load %arg3[%c6_126, %c0_127, %c0_128] : memref<9x4x128xbf16, #tpu.memory_space<vmem>>, vector<1x4x128xbf16>
    %153 = vector.shape_cast %152 : vector<1x4x128xbf16> to vector<4x128xbf16>
    %cst_129 = arith.constant dense<0.000000e+00> : vector<16x128xf32>
    %154 = tpu.matmul %151, %153, %cst_129 {dimension_numbers = #tpu.dot_dimension_numbers<[1], [0], [0], [1], [0, 0, 1, 1], [], []>} : vector<16x4xbf16>, vector<4x128xbf16>, vector<16x128xf32> -> vector<16x128xf32>
    %155 = arith.addf %147, %154 : vector<16x128xf32>
    %c2_i32_130 = arith.constant 2 : i32
    %156 = arith.addi %99, %c2_i32_130 : i32
    %c0_131 = arith.constant 0 : index
    %157 = arith.index_cast %156 : i32 to index
    %c1_132 = arith.constant 1 : index
    %c0_133 = arith.constant 0 : index
    %158 = vector.load %arg2[%c0_131, %157, %c1_132, %c0_133] : memref<1x18x18x4xbf16, #tpu.memory_space<vmem>>, vector<1x1x16x4xbf16>
    %159 = vector.shape_cast %158 : vector<1x1x16x4xbf16> to vector<16x4xbf16>
    %c7_134 = arith.constant 7 : index
    %c0_135 = arith.constant 0 : index
    %c0_136 = arith.constant 0 : index
    %160 = vector.load %arg3[%c7_134, %c0_135, %c0_136] : memref<9x4x128xbf16, #tpu.memory_space<vmem>>, vector<1x4x128xbf16>
    %161 = vector.shape_cast %160 : vector<1x4x128xbf16> to vector<4x128xbf16>
    %cst_137 = arith.constant dense<0.000000e+00> : vector<16x128xf32>
    %162 = tpu.matmul %159, %161, %cst_137 {dimension_numbers = #tpu.dot_dimension_numbers<[1], [0], [0], [1], [0, 0, 1, 1], [], []>} : vector<16x4xbf16>, vector<4x128xbf16>, vector<16x128xf32> -> vector<16x128xf32>
    %163 = arith.addf %155, %162 : vector<16x128xf32>
    %c2_i32_138 = arith.constant 2 : i32
    %164 = arith.addi %99, %c2_i32_138 : i32
    %c0_139 = arith.constant 0 : index
    %165 = arith.index_cast %164 : i32 to index
    %c2_140 = arith.constant 2 : index
    %c0_141 = arith.constant 0 : index
    %166 = vector.load %arg2[%c0_139, %165, %c2_140, %c0_141] : memref<1x18x18x4xbf16, #tpu.memory_space<vmem>>, vector<1x1x16x4xbf16>
    %167 = vector.shape_cast %166 : vector<1x1x16x4xbf16> to vector<16x4xbf16>
    %c8_142 = arith.constant 8 : index
    %c0_143 = arith.constant 0 : index
    %c0_144 = arith.constant 0 : index
    %168 = vector.load %arg3[%c8_142, %c0_143, %c0_144] : memref<9x4x128xbf16, #tpu.memory_space<vmem>>, vector<1x4x128xbf16>
    %169 = vector.shape_cast %168 : vector<1x4x128xbf16> to vector<4x128xbf16>
    %cst_145 = arith.constant dense<0.000000e+00> : vector<16x128xf32>
    %170 = tpu.matmul %167, %169, %cst_145 {dimension_numbers = #tpu.dot_dimension_numbers<[1], [0], [0], [1], [0, 0, 1, 1], [], []>} : vector<16x4xbf16>, vector<4x128xbf16>, vector<16x128xf32> -> vector<16x128xf32>
    %171 = arith.addf %163, %170 : vector<16x128xf32>
    %172 = arith.truncf %171 : vector<16x128xf32> to vector<16x128xbf16>
    %c0_146 = arith.constant 0 : index
    %c1_147 = arith.constant 1 : index
    %c0_148 = arith.constant 0 : index
    %c0_149 = arith.constant 0 : index
    %173 = vector.load %arg4[%c0_146, %c1_147, %c0_148, %c0_149] : memref<1x4x16x128xbf16, #tpu.memory_space<vmem>>, vector<1x1x16x128xbf16>
    %174 = vector.shape_cast %173 : vector<1x1x16x128xbf16> to vector<16x128xbf16>
    %175 = vector.shape_cast %172 : vector<16x128xbf16> to vector<1x1x16x128xbf16>
    tpu.vector_store %arg4[%c0_146, %c1_147, %c0_148, %c0_149], %175 {strides = array<i32>} : memref<1x4x16x128xbf16, #tpu.memory_space<vmem>>, vector<1x1x16x128xbf16>,
    %c1_i32_150 = arith.constant 1 : i32
    %176 = arith.addi %0, %c1_i32_150 : i32
    %c16_i32_151 = arith.constant 16 : i32
    %177 = arith.cmpi slt, %176, %c16_i32_151 : i32
    %178 = arith.extui %177 : i1 to i32
    %179 = arith.sitofp %178 : i32 to f32
    %cst_152 = arith.constant dense<0.000000e+00> : vector<128xf32>
    %180 = vector.multi_reduction <add>, %171, %cst_152 [0] : vector<16x128xf32> to vector<128xf32>
    %181 = vector.shape_cast %180 : vector<128xf32> to vector<1x128xf32>
    %182 = vector.broadcast %179 : f32 to vector<1x128xf32>
    %183 = arith.mulf %182, %181 : vector<1x128xf32>
    %184 = arith.addf %90, %183 : vector<1x128xf32>
    %185 = arith.mulf %171, %171 : vector<16x128xf32>
    %cst_153 = arith.constant dense<0.000000e+00> : vector<128xf32>
    %186 = vector.multi_reduction <add>, %185, %cst_153 [0] : vector<16x128xf32> to vector<128xf32>
    %187 = vector.shape_cast %186 : vector<128xf32> to vector<1x128xf32>
    %188 = vector.broadcast %179 : f32 to vector<1x128xf32>
    %189 = arith.mulf %188, %187 : vector<1x128xf32>
    %190 = arith.addf %96, %189 : vector<1x128xf32>
    %cst_154 = arith.constant 0.000000e+00 : f32
    %191 = vector.broadcast %cst_154 : f32 to vector<16x128xf32>
    %c2_i32_155 = arith.constant 2 : i32
    %192 = arith.addi %0, %c2_i32_155 : i32
    %c1_i32_156 = arith.constant 1 : i32
    %193 = arith.muli %192, %c1_i32_156 : i32
    %c0_i32_157 = arith.constant 0 : i32
    %194 = arith.addi %193, %c0_i32_157 : i32
    %c0_158 = arith.constant 0 : index
    %195 = arith.index_cast %194 : i32 to index
    %c0_159 = arith.constant 0 : index
    %c0_160 = arith.constant 0 : index
    %196 = vector.load %arg2[%c0_158, %195, %c0_159, %c0_160] : memref<1x18x18x4xbf16, #tpu.memory_space<vmem>>, vector<1x1x16x4xbf16>
    %197 = vector.shape_cast %196 : vector<1x1x16x4xbf16> to vector<16x4xbf16>
    %c0_161 = arith.constant 0 : index
    %c0_162 = arith.constant 0 : index
    %c0_163 = arith.constant 0 : index
    %198 = vector.load %arg3[%c0_161, %c0_162, %c0_163] : memref<9x4x128xbf16, #tpu.memory_space<vmem>>, vector<1x4x128xbf16>
    %199 = vector.shape_cast %198 : vector<1x4x128xbf16> to vector<4x128xbf16>
    %cst_164 = arith.constant dense<0.000000e+00> : vector<16x128xf32>
    %200 = tpu.matmul %197, %199, %cst_164 {dimension_numbers = #tpu.dot_dimension_numbers<[1], [0], [0], [1], [0, 0, 1, 1], [], []>} : vector<16x4xbf16>, vector<4x128xbf16>, vector<16x128xf32> -> vector<16x128xf32>
    %201 = arith.addf %191, %200 : vector<16x128xf32>
    %c0_i32_165 = arith.constant 0 : i32
    %202 = arith.addi %193, %c0_i32_165 : i32
    %c0_166 = arith.constant 0 : index
    %203 = arith.index_cast %202 : i32 to index
    %c1_167 = arith.constant 1 : index
    %c0_168 = arith.constant 0 : index
    %204 = vector.load %arg2[%c0_166, %203, %c1_167, %c0_168] : memref<1x18x18x4xbf16, #tpu.memory_space<vmem>>, vector<1x1x16x4xbf16>
    %205 = vector.shape_cast %204 : vector<1x1x16x4xbf16> to vector<16x4xbf16>
    %c1_169 = arith.constant 1 : index
    %c0_170 = arith.constant 0 : index
    %c0_171 = arith.constant 0 : index
    %206 = vector.load %arg3[%c1_169, %c0_170, %c0_171] : memref<9x4x128xbf16, #tpu.memory_space<vmem>>, vector<1x4x128xbf16>
    %207 = vector.shape_cast %206 : vector<1x4x128xbf16> to vector<4x128xbf16>
    %cst_172 = arith.constant dense<0.000000e+00> : vector<16x128xf32>
    %208 = tpu.matmul %205, %207, %cst_172 {dimension_numbers = #tpu.dot_dimension_numbers<[1], [0], [0], [1], [0, 0, 1, 1], [], []>} : vector<16x4xbf16>, vector<4x128xbf16>, vector<16x128xf32> -> vector<16x128xf32>
    %209 = arith.addf %201, %208 : vector<16x128xf32>
    %c0_i32_173 = arith.constant 0 : i32
    %210 = arith.addi %193, %c0_i32_173 : i32
    %c0_174 = arith.constant 0 : index
    %211 = arith.index_cast %210 : i32 to index
    %c2_175 = arith.constant 2 : index
    %c0_176 = arith.constant 0 : index
    %212 = vector.load %arg2[%c0_174, %211, %c2_175, %c0_176] : memref<1x18x18x4xbf16, #tpu.memory_space<vmem>>, vector<1x1x16x4xbf16>
    %213 = vector.shape_cast %212 : vector<1x1x16x4xbf16> to vector<16x4xbf16>
    %c2_177 = arith.constant 2 : index
    %c0_178 = arith.constant 0 : index
    %c0_179 = arith.constant 0 : index
    %214 = vector.load %arg3[%c2_177, %c0_178, %c0_179] : memref<9x4x128xbf16, #tpu.memory_space<vmem>>, vector<1x4x128xbf16>
    %215 = vector.shape_cast %214 : vector<1x4x128xbf16> to vector<4x128xbf16>
    %cst_180 = arith.constant dense<0.000000e+00> : vector<16x128xf32>
    %216 = tpu.matmul %213, %215, %cst_180 {dimension_numbers = #tpu.dot_dimension_numbers<[1], [0], [0], [1], [0, 0, 1, 1], [], []>} : vector<16x4xbf16>, vector<4x128xbf16>, vector<16x128xf32> -> vector<16x128xf32>
    %217 = arith.addf %209, %216 : vector<16x128xf32>
    %c1_i32_181 = arith.constant 1 : i32
    %218 = arith.addi %193, %c1_i32_181 : i32
    %c0_182 = arith.constant 0 : index
    %219 = arith.index_cast %218 : i32 to index
    %c0_183 = arith.constant 0 : index
    %c0_184 = arith.constant 0 : index
    %220 = vector.load %arg2[%c0_182, %219, %c0_183, %c0_184] : memref<1x18x18x4xbf16, #tpu.memory_space<vmem>>, vector<1x1x16x4xbf16>
    %221 = vector.shape_cast %220 : vector<1x1x16x4xbf16> to vector<16x4xbf16>
    %c3_185 = arith.constant 3 : index
    %c0_186 = arith.constant 0 : index
    %c0_187 = arith.constant 0 : index
    %222 = vector.load %arg3[%c3_185, %c0_186, %c0_187] : memref<9x4x128xbf16, #tpu.memory_space<vmem>>, vector<1x4x128xbf16>
    %223 = vector.shape_cast %222 : vector<1x4x128xbf16> to vector<4x128xbf16>
    %cst_188 = arith.constant dense<0.000000e+00> : vector<16x128xf32>
    %224 = tpu.matmul %221, %223, %cst_188 {dimension_numbers = #tpu.dot_dimension_numbers<[1], [0], [0], [1], [0, 0, 1, 1], [], []>} : vector<16x4xbf16>, vector<4x128xbf16>, vector<16x128xf32> -> vector<16x128xf32>
    %225 = arith.addf %217, %224 : vector<16x128xf32>
    %c1_i32_189 = arith.constant 1 : i32
    %226 = arith.addi %193, %c1_i32_189 : i32
    %c0_190 = arith.constant 0 : index
    %227 = arith.index_cast %226 : i32 to index
    %c1_191 = arith.constant 1 : index
    %c0_192 = arith.constant 0 : index
    %228 = vector.load %arg2[%c0_190, %227, %c1_191, %c0_192] : memref<1x18x18x4xbf16, #tpu.memory_space<vmem>>, vector<1x1x16x4xbf16>
    %229 = vector.shape_cast %228 : vector<1x1x16x4xbf16> to vector<16x4xbf16>
    %c4_193 = arith.constant 4 : index
    %c0_194 = arith.constant 0 : index
    %c0_195 = arith.constant 0 : index
    %230 = vector.load %arg3[%c4_193, %c0_194, %c0_195] : memref<9x4x128xbf16, #tpu.memory_space<vmem>>, vector<1x4x128xbf16>
    %231 = vector.shape_cast %230 : vector<1x4x128xbf16> to vector<4x128xbf16>
    %cst_196 = arith.constant dense<0.000000e+00> : vector<16x128xf32>
    %232 = tpu.matmul %229, %231, %cst_196 {dimension_numbers = #tpu.dot_dimension_numbers<[1], [0], [0], [1], [0, 0, 1, 1], [], []>} : vector<16x4xbf16>, vector<4x128xbf16>, vector<16x128xf32> -> vector<16x128xf32>
    %233 = arith.addf %225, %232 : vector<16x128xf32>
    %c1_i32_197 = arith.constant 1 : i32
    %234 = arith.addi %193, %c1_i32_197 : i32
    %c0_198 = arith.constant 0 : index
    %235 = arith.index_cast %234 : i32 to index
    %c2_199 = arith.constant 2 : index
    %c0_200 = arith.constant 0 : index
    %236 = vector.load %arg2[%c0_198, %235, %c2_199, %c0_200] : memref<1x18x18x4xbf16, #tpu.memory_space<vmem>>, vector<1x1x16x4xbf16>
    %237 = vector.shape_cast %236 : vector<1x1x16x4xbf16> to vector<16x4xbf16>
    %c5_201 = arith.constant 5 : index
    %c0_202 = arith.constant 0 : index
    %c0_203 = arith.constant 0 : index
    %238 = vector.load %arg3[%c5_201, %c0_202, %c0_203] : memref<9x4x128xbf16, #tpu.memory_space<vmem>>, vector<1x4x128xbf16>
    %239 = vector.shape_cast %238 : vector<1x4x128xbf16> to vector<4x128xbf16>
    %cst_204 = arith.constant dense<0.000000e+00> : vector<16x128xf32>
    %240 = tpu.matmul %237, %239, %cst_204 {dimension_numbers = #tpu.dot_dimension_numbers<[1], [0], [0], [1], [0, 0, 1, 1], [], []>} : vector<16x4xbf16>, vector<4x128xbf16>, vector<16x128xf32> -> vector<16x128xf32>
    %241 = arith.addf %233, %240 : vector<16x128xf32>
    %c2_i32_205 = arith.constant 2 : i32
    %242 = arith.addi %193, %c2_i32_205 : i32
    %c0_206 = arith.constant 0 : index
    %243 = arith.index_cast %242 : i32 to index
    %c0_207 = arith.constant 0 : index
    %c0_208 = arith.constant 0 : index
    %244 = vector.load %arg2[%c0_206, %243, %c0_207, %c0_208] : memref<1x18x18x4xbf16, #tpu.memory_space<vmem>>, vector<1x1x16x4xbf16>
    %245 = vector.shape_cast %244 : vector<1x1x16x4xbf16> to vector<16x4xbf16>
    %c6_209 = arith.constant 6 : index
    %c0_210 = arith.constant 0 : index
    %c0_211 = arith.constant 0 : index
    %246 = vector.load %arg3[%c6_209, %c0_210, %c0_211] : memref<9x4x128xbf16, #tpu.memory_space<vmem>>, vector<1x4x128xbf16>
    %247 = vector.shape_cast %246 : vector<1x4x128xbf16> to vector<4x128xbf16>
    %cst_212 = arith.constant dense<0.000000e+00> : vector<16x128xf32>
    %248 = tpu.matmul %245, %247, %cst_212 {dimension_numbers = #tpu.dot_dimension_numbers<[1], [0], [0], [1], [0, 0, 1, 1], [], []>} : vector<16x4xbf16>, vector<4x128xbf16>, vector<16x128xf32> -> vector<16x128xf32>
    %249 = arith.addf %241, %248 : vector<16x128xf32>
    %c2_i32_213 = arith.constant 2 : i32
    %250 = arith.addi %193, %c2_i32_213 : i32
    %c0_214 = arith.constant 0 : index
    %251 = arith.index_cast %250 : i32 to index
    %c1_215 = arith.constant 1 : index
    %c0_216 = arith.constant 0 : index
    %252 = vector.load %arg2[%c0_214, %251, %c1_215, %c0_216] : memref<1x18x18x4xbf16, #tpu.memory_space<vmem>>, vector<1x1x16x4xbf16>
    %253 = vector.shape_cast %252 : vector<1x1x16x4xbf16> to vector<16x4xbf16>
    %c7_217 = arith.constant 7 : index
    %c0_218 = arith.constant 0 : index
    %c0_219 = arith.constant 0 : index
    %254 = vector.load %arg3[%c7_217, %c0_218, %c0_219] : memref<9x4x128xbf16, #tpu.memory_space<vmem>>, vector<1x4x128xbf16>
    %255 = vector.shape_cast %254 : vector<1x4x128xbf16> to vector<4x128xbf16>
    %cst_220 = arith.constant dense<0.000000e+00> : vector<16x128xf32>
    %256 = tpu.matmul %253, %255, %cst_220 {dimension_numbers = #tpu.dot_dimension_numbers<[1], [0], [0], [1], [0, 0, 1, 1], [], []>} : vector<16x4xbf16>, vector<4x128xbf16>, vector<16x128xf32> -> vector<16x128xf32>
    %257 = arith.addf %249, %256 : vector<16x128xf32>
    %c2_i32_221 = arith.constant 2 : i32
    %258 = arith.addi %193, %c2_i32_221 : i32
    %c0_222 = arith.constant 0 : index
    %259 = arith.index_cast %258 : i32 to index
    %c2_223 = arith.constant 2 : index
    %c0_224 = arith.constant 0 : index
    %260 = vector.load %arg2[%c0_222, %259, %c2_223, %c0_224] : memref<1x18x18x4xbf16, #tpu.memory_space<vmem>>, vector<1x1x16x4xbf16>
    %261 = vector.shape_cast %260 : vector<1x1x16x4xbf16> to vector<16x4xbf16>
    %c8_225 = arith.constant 8 : index
    %c0_226 = arith.constant 0 : index
    %c0_227 = arith.constant 0 : index
    %262 = vector.load %arg3[%c8_225, %c0_226, %c0_227] : memref<9x4x128xbf16, #tpu.memory_space<vmem>>, vector<1x4x128xbf16>
    %263 = vector.shape_cast %262 : vector<1x4x128xbf16> to vector<4x128xbf16>
    %cst_228 = arith.constant dense<0.000000e+00> : vector<16x128xf32>
    %264 = tpu.matmul %261, %263, %cst_228 {dimension_numbers = #tpu.dot_dimension_numbers<[1], [0], [0], [1], [0, 0, 1, 1], [], []>} : vector<16x4xbf16>, vector<4x128xbf16>, vector<16x128xf32> -> vector<16x128xf32>
    %265 = arith.addf %257, %264 : vector<16x128xf32>
    %266 = arith.truncf %265 : vector<16x128xf32> to vector<16x128xbf16>
    %c0_229 = arith.constant 0 : index
    %c2_230 = arith.constant 2 : index
    %c0_231 = arith.constant 0 : index
    %c0_232 = arith.constant 0 : index
    %267 = vector.load %arg4[%c0_229, %c2_230, %c0_231, %c0_232] : memref<1x4x16x128xbf16, #tpu.memory_space<vmem>>, vector<1x1x16x128xbf16>
    %268 = vector.shape_cast %267 : vector<1x1x16x128xbf16> to vector<16x128xbf16>
    %269 = vector.shape_cast %266 : vector<16x128xbf16> to vector<1x1x16x128xbf16>
    tpu.vector_store %arg4[%c0_229, %c2_230, %c0_231, %c0_232], %269 {strides = array<i32>} : memref<1x4x16x128xbf16, #tpu.memory_space<vmem>>, vector<1x1x16x128xbf16>,
    %c2_i32_233 = arith.constant 2 : i32
    %270 = arith.addi %0, %c2_i32_233 : i32
    %c16_i32_234 = arith.constant 16 : i32
    %271 = arith.cmpi slt, %270, %c16_i32_234 : i32
    %272 = arith.extui %271 : i1 to i32
    %273 = arith.sitofp %272 : i32 to f32
    %cst_235 = arith.constant dense<0.000000e+00> : vector<128xf32>
    %274 = vector.multi_reduction <add>, %265, %cst_235 [0] : vector<16x128xf32> to vector<128xf32>
    %275 = vector.shape_cast %274 : vector<128xf32> to vector<1x128xf32>
    %276 = vector.broadcast %273 : f32 to vector<1x128xf32>
    %277 = arith.mulf %276, %275 : vector<1x128xf32>
    %278 = arith.addf %184, %277 : vector<1x128xf32>
    %279 = arith.mulf %265, %265 : vector<16x128xf32>
    %cst_236 = arith.constant dense<0.000000e+00> : vector<128xf32>
    %280 = vector.multi_reduction <add>, %279, %cst_236 [0] : vector<16x128xf32> to vector<128xf32>
    %281 = vector.shape_cast %280 : vector<128xf32> to vector<1x128xf32>
    %282 = vector.broadcast %273 : f32 to vector<1x128xf32>
    %283 = arith.mulf %282, %281 : vector<1x128xf32>
    %284 = arith.addf %190, %283 : vector<1x128xf32>
    %cst_237 = arith.constant 0.000000e+00 : f32
    %285 = vector.broadcast %cst_237 : f32 to vector<16x128xf32>
    %c3_i32 = arith.constant 3 : i32
    %286 = arith.addi %0, %c3_i32 : i32
    %c1_i32_238 = arith.constant 1 : i32
    %287 = arith.muli %286, %c1_i32_238 : i32
    %c0_i32_239 = arith.constant 0 : i32
    %288 = arith.addi %287, %c0_i32_239 : i32
    %c0_240 = arith.constant 0 : index
    %289 = arith.index_cast %288 : i32 to index
    %c0_241 = arith.constant 0 : index
    %c0_242 = arith.constant 0 : index
    %290 = vector.load %arg2[%c0_240, %289, %c0_241, %c0_242] : memref<1x18x18x4xbf16, #tpu.memory_space<vmem>>, vector<1x1x16x4xbf16>
    %291 = vector.shape_cast %290 : vector<1x1x16x4xbf16> to vector<16x4xbf16>
    %c0_243 = arith.constant 0 : index
    %c0_244 = arith.constant 0 : index
    %c0_245 = arith.constant 0 : index
    %292 = vector.load %arg3[%c0_243, %c0_244, %c0_245] : memref<9x4x128xbf16, #tpu.memory_space<vmem>>, vector<1x4x128xbf16>
    %293 = vector.shape_cast %292 : vector<1x4x128xbf16> to vector<4x128xbf16>
    %cst_246 = arith.constant dense<0.000000e+00> : vector<16x128xf32>
    %294 = tpu.matmul %291, %293, %cst_246 {dimension_numbers = #tpu.dot_dimension_numbers<[1], [0], [0], [1], [0, 0, 1, 1], [], []>} : vector<16x4xbf16>, vector<4x128xbf16>, vector<16x128xf32> -> vector<16x128xf32>
    %295 = arith.addf %285, %294 : vector<16x128xf32>
    %c0_i32_247 = arith.constant 0 : i32
    %296 = arith.addi %287, %c0_i32_247 : i32
    %c0_248 = arith.constant 0 : index
    %297 = arith.index_cast %296 : i32 to index
    %c1_249 = arith.constant 1 : index
    %c0_250 = arith.constant 0 : index
    %298 = vector.load %arg2[%c0_248, %297, %c1_249, %c0_250] : memref<1x18x18x4xbf16, #tpu.memory_space<vmem>>, vector<1x1x16x4xbf16>
    %299 = vector.shape_cast %298 : vector<1x1x16x4xbf16> to vector<16x4xbf16>
    %c1_251 = arith.constant 1 : index
    %c0_252 = arith.constant 0 : index
    %c0_253 = arith.constant 0 : index
    %300 = vector.load %arg3[%c1_251, %c0_252, %c0_253] : memref<9x4x128xbf16, #tpu.memory_space<vmem>>, vector<1x4x128xbf16>
    %301 = vector.shape_cast %300 : vector<1x4x128xbf16> to vector<4x128xbf16>
    %cst_254 = arith.constant dense<0.000000e+00> : vector<16x128xf32>
    %302 = tpu.matmul %299, %301, %cst_254 {dimension_numbers = #tpu.dot_dimension_numbers<[1], [0], [0], [1], [0, 0, 1, 1], [], []>} : vector<16x4xbf16>, vector<4x128xbf16>, vector<16x128xf32> -> vector<16x128xf32>
    %303 = arith.addf %295, %302 : vector<16x128xf32>
    %c0_i32_255 = arith.constant 0 : i32
    %304 = arith.addi %287, %c0_i32_255 : i32
    %c0_256 = arith.constant 0 : index
    %305 = arith.index_cast %304 : i32 to index
    %c2_257 = arith.constant 2 : index
    %c0_258 = arith.constant 0 : index
    %306 = vector.load %arg2[%c0_256, %305, %c2_257, %c0_258] : memref<1x18x18x4xbf16, #tpu.memory_space<vmem>>, vector<1x1x16x4xbf16>
    %307 = vector.shape_cast %306 : vector<1x1x16x4xbf16> to vector<16x4xbf16>
    %c2_259 = arith.constant 2 : index
    %c0_260 = arith.constant 0 : index
    %c0_261 = arith.constant 0 : index
    %308 = vector.load %arg3[%c2_259, %c0_260, %c0_261] : memref<9x4x128xbf16, #tpu.memory_space<vmem>>, vector<1x4x128xbf16>
    %309 = vector.shape_cast %308 : vector<1x4x128xbf16> to vector<4x128xbf16>
    %cst_262 = arith.constant dense<0.000000e+00> : vector<16x128xf32>
    %310 = tpu.matmul %307, %309, %cst_262 {dimension_numbers = #tpu.dot_dimension_numbers<[1], [0], [0], [1], [0, 0, 1, 1], [], []>} : vector<16x4xbf16>, vector<4x128xbf16>, vector<16x128xf32> -> vector<16x128xf32>
    %311 = arith.addf %303, %310 : vector<16x128xf32>
    %c1_i32_263 = arith.constant 1 : i32
    %312 = arith.addi %287, %c1_i32_263 : i32
    %c0_264 = arith.constant 0 : index
    %313 = arith.index_cast %312 : i32 to index
    %c0_265 = arith.constant 0 : index
    %c0_266 = arith.constant 0 : index
    %314 = vector.load %arg2[%c0_264, %313, %c0_265, %c0_266] : memref<1x18x18x4xbf16, #tpu.memory_space<vmem>>, vector<1x1x16x4xbf16>
    %315 = vector.shape_cast %314 : vector<1x1x16x4xbf16> to vector<16x4xbf16>
    %c3_267 = arith.constant 3 : index
    %c0_268 = arith.constant 0 : index
    %c0_269 = arith.constant 0 : index
    %316 = vector.load %arg3[%c3_267, %c0_268, %c0_269] : memref<9x4x128xbf16, #tpu.memory_space<vmem>>, vector<1x4x128xbf16>
    %317 = vector.shape_cast %316 : vector<1x4x128xbf16> to vector<4x128xbf16>
    %cst_270 = arith.constant dense<0.000000e+00> : vector<16x128xf32>
    %318 = tpu.matmul %315, %317, %cst_270 {dimension_numbers = #tpu.dot_dimension_numbers<[1], [0], [0], [1], [0, 0, 1, 1], [], []>} : vector<16x4xbf16>, vector<4x128xbf16>, vector<16x128xf32> -> vector<16x128xf32>
    %319 = arith.addf %311, %318 : vector<16x128xf32>
    %c1_i32_271 = arith.constant 1 : i32
    %320 = arith.addi %287, %c1_i32_271 : i32
    %c0_272 = arith.constant 0 : index
    %321 = arith.index_cast %320 : i32 to index
    %c1_273 = arith.constant 1 : index
    %c0_274 = arith.constant 0 : index
    %322 = vector.load %arg2[%c0_272, %321, %c1_273, %c0_274] : memref<1x18x18x4xbf16, #tpu.memory_space<vmem>>, vector<1x1x16x4xbf16>
    %323 = vector.shape_cast %322 : vector<1x1x16x4xbf16> to vector<16x4xbf16>
    %c4_275 = arith.constant 4 : index
    %c0_276 = arith.constant 0 : index
    %c0_277 = arith.constant 0 : index
    %324 = vector.load %arg3[%c4_275, %c0_276, %c0_277] : memref<9x4x128xbf16, #tpu.memory_space<vmem>>, vector<1x4x128xbf16>
    %325 = vector.shape_cast %324 : vector<1x4x128xbf16> to vector<4x128xbf16>
    %cst_278 = arith.constant dense<0.000000e+00> : vector<16x128xf32>
    %326 = tpu.matmul %323, %325, %cst_278 {dimension_numbers = #tpu.dot_dimension_numbers<[1], [0], [0], [1], [0, 0, 1, 1], [], []>} : vector<16x4xbf16>, vector<4x128xbf16>, vector<16x128xf32> -> vector<16x128xf32>
    %327 = arith.addf %319, %326 : vector<16x128xf32>
    %c1_i32_279 = arith.constant 1 : i32
    %328 = arith.addi %287, %c1_i32_279 : i32
    %c0_280 = arith.constant 0 : index
    %329 = arith.index_cast %328 : i32 to index
    %c2_281 = arith.constant 2 : index
    %c0_282 = arith.constant 0 : index
    %330 = vector.load %arg2[%c0_280, %329, %c2_281, %c0_282] : memref<1x18x18x4xbf16, #tpu.memory_space<vmem>>, vector<1x1x16x4xbf16>
    %331 = vector.shape_cast %330 : vector<1x1x16x4xbf16> to vector<16x4xbf16>
    %c5_283 = arith.constant 5 : index
    %c0_284 = arith.constant 0 : index
    %c0_285 = arith.constant 0 : index
    %332 = vector.load %arg3[%c5_283, %c0_284, %c0_285] : memref<9x4x128xbf16, #tpu.memory_space<vmem>>, vector<1x4x128xbf16>
    %333 = vector.shape_cast %332 : vector<1x4x128xbf16> to vector<4x128xbf16>
    %cst_286 = arith.constant dense<0.000000e+00> : vector<16x128xf32>
    %334 = tpu.matmul %331, %333, %cst_286 {dimension_numbers = #tpu.dot_dimension_numbers<[1], [0], [0], [1], [0, 0, 1, 1], [], []>} : vector<16x4xbf16>, vector<4x128xbf16>, vector<16x128xf32> -> vector<16x128xf32>
    %335 = arith.addf %327, %334 : vector<16x128xf32>
    %c2_i32_287 = arith.constant 2 : i32
    %336 = arith.addi %287, %c2_i32_287 : i32
    %c0_288 = arith.constant 0 : index
    %337 = arith.index_cast %336 : i32 to index
    %c0_289 = arith.constant 0 : index
    %c0_290 = arith.constant 0 : index
    %338 = vector.load %arg2[%c0_288, %337, %c0_289, %c0_290] : memref<1x18x18x4xbf16, #tpu.memory_space<vmem>>, vector<1x1x16x4xbf16>
    %339 = vector.shape_cast %338 : vector<1x1x16x4xbf16> to vector<16x4xbf16>
    %c6_291 = arith.constant 6 : index
    %c0_292 = arith.constant 0 : index
    %c0_293 = arith.constant 0 : index
    %340 = vector.load %arg3[%c6_291, %c0_292, %c0_293] : memref<9x4x128xbf16, #tpu.memory_space<vmem>>, vector<1x4x128xbf16>
    %341 = vector.shape_cast %340 : vector<1x4x128xbf16> to vector<4x128xbf16>
    %cst_294 = arith.constant dense<0.000000e+00> : vector<16x128xf32>
    %342 = tpu.matmul %339, %341, %cst_294 {dimension_numbers = #tpu.dot_dimension_numbers<[1], [0], [0], [1], [0, 0, 1, 1], [], []>} : vector<16x4xbf16>, vector<4x128xbf16>, vector<16x128xf32> -> vector<16x128xf32>
    %343 = arith.addf %335, %342 : vector<16x128xf32>
    %c2_i32_295 = arith.constant 2 : i32
    %344 = arith.addi %287, %c2_i32_295 : i32
    %c0_296 = arith.constant 0 : index
    %345 = arith.index_cast %344 : i32 to index
    %c1_297 = arith.constant 1 : index
    %c0_298 = arith.constant 0 : index
    %346 = vector.load %arg2[%c0_296, %345, %c1_297, %c0_298] : memref<1x18x18x4xbf16, #tpu.memory_space<vmem>>, vector<1x1x16x4xbf16>
    %347 = vector.shape_cast %346 : vector<1x1x16x4xbf16> to vector<16x4xbf16>
    %c7_299 = arith.constant 7 : index
    %c0_300 = arith.constant 0 : index
    %c0_301 = arith.constant 0 : index
    %348 = vector.load %arg3[%c7_299, %c0_300, %c0_301] : memref<9x4x128xbf16, #tpu.memory_space<vmem>>, vector<1x4x128xbf16>
    %349 = vector.shape_cast %348 : vector<1x4x128xbf16> to vector<4x128xbf16>
    %cst_302 = arith.constant dense<0.000000e+00> : vector<16x128xf32>
    %350 = tpu.matmul %347, %349, %cst_302 {dimension_numbers = #tpu.dot_dimension_numbers<[1], [0], [0], [1], [0, 0, 1, 1], [], []>} : vector<16x4xbf16>, vector<4x128xbf16>, vector<16x128xf32> -> vector<16x128xf32>
    %351 = arith.addf %343, %350 : vector<16x128xf32>
    %c2_i32_303 = arith.constant 2 : i32
    %352 = arith.addi %287, %c2_i32_303 : i32
    %c0_304 = arith.constant 0 : index
    %353 = arith.index_cast %352 : i32 to index
    %c2_305 = arith.constant 2 : index
    %c0_306 = arith.constant 0 : index
    %354 = vector.load %arg2[%c0_304, %353, %c2_305, %c0_306] : memref<1x18x18x4xbf16, #tpu.memory_space<vmem>>, vector<1x1x16x4xbf16>
    %355 = vector.shape_cast %354 : vector<1x1x16x4xbf16> to vector<16x4xbf16>
    %c8_307 = arith.constant 8 : index
    %c0_308 = arith.constant 0 : index
    %c0_309 = arith.constant 0 : index
    %356 = vector.load %arg3[%c8_307, %c0_308, %c0_309] : memref<9x4x128xbf16, #tpu.memory_space<vmem>>, vector<1x4x128xbf16>
    %357 = vector.shape_cast %356 : vector<1x4x128xbf16> to vector<4x128xbf16>
    %cst_310 = arith.constant dense<0.000000e+00> : vector<16x128xf32>
    %358 = tpu.matmul %355, %357, %cst_310 {dimension_numbers = #tpu.dot_dimension_numbers<[1], [0], [0], [1], [0, 0, 1, 1], [], []>} : vector<16x4xbf16>, vector<4x128xbf16>, vector<16x128xf32> -> vector<16x128xf32>
    %359 = arith.addf %351, %358 : vector<16x128xf32>
    %360 = arith.truncf %359 : vector<16x128xf32> to vector<16x128xbf16>
    %c0_311 = arith.constant 0 : index
    %c3_312 = arith.constant 3 : index
    %c0_313 = arith.constant 0 : index
    %c0_314 = arith.constant 0 : index
    %361 = vector.load %arg4[%c0_311, %c3_312, %c0_313, %c0_314] : memref<1x4x16x128xbf16, #tpu.memory_space<vmem>>, vector<1x1x16x128xbf16>
    %362 = vector.shape_cast %361 : vector<1x1x16x128xbf16> to vector<16x128xbf16>
    %363 = vector.shape_cast %360 : vector<16x128xbf16> to vector<1x1x16x128xbf16>
    tpu.vector_store %arg4[%c0_311, %c3_312, %c0_313, %c0_314], %363 {strides = array<i32>} : memref<1x4x16x128xbf16, #tpu.memory_space<vmem>>, vector<1x1x16x128xbf16>,
    %c3_i32_315 = arith.constant 3 : i32
    %364 = arith.addi %0, %c3_i32_315 : i32
    %c16_i32_316 = arith.constant 16 : i32
    %365 = arith.cmpi slt, %364, %c16_i32_316 : i32
    %366 = arith.extui %365 : i1 to i32
    %367 = arith.sitofp %366 : i32 to f32
    %cst_317 = arith.constant dense<0.000000e+00> : vector<128xf32>
    %368 = vector.multi_reduction <add>, %359, %cst_317 [0] : vector<16x128xf32> to vector<128xf32>
    %369 = vector.shape_cast %368 : vector<128xf32> to vector<1x128xf32>
    %370 = vector.broadcast %367 : f32 to vector<1x128xf32>
    %371 = arith.mulf %370, %369 : vector<1x128xf32>
    %372 = arith.addf %278, %371 : vector<1x128xf32>
    %373 = arith.mulf %359, %359 : vector<16x128xf32>
    %cst_318 = arith.constant dense<0.000000e+00> : vector<128xf32>
    %374 = vector.multi_reduction <add>, %373, %cst_318 [0] : vector<16x128xf32> to vector<128xf32>
    %375 = vector.shape_cast %374 : vector<128xf32> to vector<1x128xf32>
    %376 = vector.broadcast %367 : f32 to vector<1x128xf32>
    %377 = arith.mulf %376, %375 : vector<1x128xf32>
    %378 = arith.addf %284, %377 : vector<1x128xf32>
    %cst_319 = arith.constant 0.000000e+00 : f32
    %379 = vector.broadcast %cst_319 : f32 to vector<6x128xf32>
    %380 = tpu.concatenate %372, %378, %379 in 0 : vector<1x128xf32>, vector<1x128xf32>, vector<6x128xf32> -> vector<8x128xf32>
    %c0_320 = arith.constant 0 : index
    %c0_321 = arith.constant 0 : index
    %c0_322 = arith.constant 0 : index
    %c0_323 = arith.constant 0 : index
    %381 = vector.load %arg5[%c0_320, %c0_321, %c0_322, %c0_323] : memref<1x1x8x128xf32, #tpu.memory_space<vmem>>, vector<1x1x8x128xf32>
    %382 = vector.shape_cast %381 : vector<1x1x8x128xf32> to vector<8x128xf32>
    %383 = vector.shape_cast %380 : vector<8x128xf32> to vector<1x1x8x128xf32>
    tpu.vector_store %arg5[%c0_320, %c0_321, %c0_322, %c0_323], %383 {strides = array<i32>} : memref<1x1x8x128xf32, #tpu.memory_space<vmem>>, vector<1x1x8x128xf32>,
    return
  }
  func.func @transform_0(%arg0: i32, %arg1: i32) -> (i32, i32, i32, i32) {
    %c0_i32 = arith.constant 0 : i32
    %c0_i32_0 = arith.constant 0 : i32
    %c0_i32_1 = arith.constant 0 : i32
    %c0_i32_2 = arith.constant 0 : i32
    return %arg0, %c0_i32, %c0_i32_0, %c0_i32_1 : i32, i32, i32, i32
  }
  func.func @transform_1(%arg0: i32, %arg1: i32) -> (i32, i32, i32) {
    %c0_i32 = arith.constant 0 : i32
    %c0_i32_0 = arith.constant 0 : i32
    %c0_i32_1 = arith.constant 0 : i32
    %c0_i32_2 = arith.constant 0 : i32
    return %c0_i32, %c0_i32_0, %c0_i32_1 : i32, i32, i32
  }
  func.func @transform_2(%arg0: i32, %arg1: i32) -> (i32, i32, i32, i32) {
    %c0_i32 = arith.constant 0 : i32
    %c0_i32_0 = arith.constant 0 : i32
    %c0_i32_1 = arith.constant 0 : i32
    return %arg0, %arg1, %c0_i32, %c0_i32_0 : i32, i32, i32, i32
  }
  func.func @transform_3(%arg0: i32, %arg1: i32) -> (i32, i32, i32, i32) {
    %c0_i32 = arith.constant 0 : i32
    %c0_i32_0 = arith.constant 0 : i32
    %c0_i32_1 = arith.constant 0 : i32
    return %arg0, %arg1, %c0_i32, %c0_i32_0 : i32, i32, i32, i32
  }
}

</mosaic_0001>

<llo_original>
// kernel: conv_bn_relu.3
$region0: #{conv_bn_relu.3}
  #allocation0 [shape = 'u32[]', space=smem, size = 0x4, offset = 0x4, fixed_abs, tag = 'smem constant byte address 0x4 - core index']
  #allocation1 [shape = 'u32[144,128]{1,0:T(1,128)}', space=vmem, size = 0x12000, scoped, tag = 'internal scratch']
  %s0 = inlined_call_operand.vmem [shape: bf16[2,16,16,128], index: 0, kind: input, shape index: {}]
  %s1 = inlined_call_operand.vmem [shape: f32[2,4,8,128], index: 1, kind: input, shape index: {}]
  %s2 = inlined_call_operand.vmem [shape: f32[1,128], index: 2, kind: input, shape index: {}]
  %s3 = inlined_call_operand.vmem [shape: f32[1,128], index: 3, kind: input, shape index: {}]
  %s4 = inlined_call_operand.vmem [shape: f32[2,16,16,128], index: 4, kind: output, shape index: {}]
  %s5 = sld [smem:[#allocation0]]
  $region49: #{conv_bn_relu.3} parent=0
    _
  %s7 = ssub.s32 1, %s5
  %s8 = scalar_select 0, %s7, %s5
  loop: start=0, step=1, limit=10
  $region2: #{conv_bn_relu.3} parent=0 // loop_pre_header
    _
  $region3: #{conv_bn_relu.3} parent=0 // loop_header
    %s10 = sphi 0, %s14
    %p11 = scmp.ge.s32.totalorder %s10, 10
    %s17 = sphi 0, %s29
    %s18 = sphi 0, %s25
    %s19 = sphi 0, %s17
    %s20 = sphi 0, %s18
    %s21 = sphi 0, %s19
    %s22 = sphi 0, %s20
    %s34 = sphi 0, %s36
    %s37 = sphi 0, %s34
    %s38 = sphi 0, %s37
    %s54 = sphi 0, %s38
    %s58 = sphi 0, %s58
    %s60 = sphi 0, %s58
    %s61 = sphi 0, %s60
    %s75 = sphi 0, %s61
    %s79 = sphi 0, %s79
    %s81 = sphi 0, %s79
    %s82 = sphi 0, %s81
    %s96 = sphi 0, %s82
    %s100 = sphi 0, %s100
    %s102 = sphi 0, %s100
    %s103 = sphi 0, %s102
    %s117 = sphi 0, %s103
    %s125 = sphi 0, %s127
    %s128 = sphi 0, %s125
    %s129 = sphi 0, %s128
    %s145 = sphi 0, %s129
  $region4: #{conv_bn_relu.3} parent=0 // loop_header_branch
    %13 = sbr.rel (%p11) target = $region8
  $region5: #{conv_bn_relu.3} parent=0 // loop_body
    %s15 = ssub.s32 %s10, 1
    %s16 = ssub.s32 %s10, 2
    %s23 = sadd.s32 1, %s18
    %p24 = scmp.ge.s32.totalorder %s23, 4
    %s25 = scalar_select %p24, 0, %s23
    %s26 = sadd.s32 1, %s17
    %s27 = scalar_select %p24, %s26, %s17
    %p28 = scmp.ge.s32.totalorder %s27, 2
    %s29 = scalar_select %p28, 0, %s27
    %s30 = ssub.s32 %s17, %s29
    %s31 = ssub.s32 %s18, %s25
    %s32 = sor.u32 %s30, %s31
    %p33 = scmp.eq.s32.totalorder %s32, 0
    %s35 = sadd.s32 %s34, 1
    %s36 = scalar_select %p33, %s34, %s35
    %p39 = pneg %p33
    %p40 = scmp.eq.s32.totalorder %s10, 7
    %p41 = por %p39, %p40
    %p42 = scmp.ne.s32.totalorder %s34, %s37
    %p43 = scmp.eq.s32.totalorder %s10, 0
    %p44 = por %p42, %p43
    %p45 = scmp.ne.s32.totalorder %s34, %s37
    %p46 = scmp.eq.s32.totalorder %s15, 7
    %p47 = por %p45, %p46
    %p48 = scmp.ne.s32.totalorder %s37, %s38
    %p49 = scmp.eq.s32.totalorder %s15, 0
    %p50 = por %p48, %p49
    %p51 = scmp.ne.s32.totalorder %s37, %s38
    %p52 = scmp.eq.s32.totalorder %s16, 7
    %p53 = por %p51, %p52
    %p55 = scmp.ne.s32.totalorder %s38, %s54
    %p56 = scmp.eq.s32.totalorder %s16, 0
    %p57 = por %p55, %p56
    %s59 = sadd.s32 %s58, 1
    %p62 = scmp.eq.s32.totalorder %s10, 7
    %p63 = scmp.ne.s32.totalorder %s58, %s60
    %p64 = scmp.eq.s32.totalorder %s10, 0
    %p65 = por %p63, %p64
    %p66 = scmp.ne.s32.totalorder %s58, %s60
    %p67 = scmp.eq.s32.totalorder %s15, 7
    %p68 = por %p66, %p67
    %p69 = scmp.ne.s32.totalorder %s60, %s61
    %p70 = scmp.eq.s32.totalorder %s15, 0
    %p71 = por %p69, %p70
    %p72 = scmp.ne.s32.totalorder %s60, %s61
    %p73 = scmp.eq.s32.totalorder %s16, 7
    %p74 = por %p72, %p73
    %p76 = scmp.ne.s32.totalorder %s61, %s75
    %p77 = scmp.eq.s32.totalorder %s16, 0
    %p78 = por %p76, %p77
    %s80 = sadd.s32 %s79, 1
    %p83 = scmp.eq.s32.totalorder %s10, 7
    %p84 = scmp.ne.s32.totalorder %s79, %s81
    %p85 = scmp.eq.s32.totalorder %s10, 0
    %p86 = por %p84, %p85
    %p87 = scmp.ne.s32.totalorder %s79, %s81
    %p88 = scmp.eq.s32.totalorder %s15, 7
    %p89 = por %p87, %p88
    %p90 = scmp.ne.s32.totalorder %s81, %s82
    %p91 = scmp.eq.s32.totalorder %s15, 0
    %p92 = por %p90, %p91
    %p93 = scmp.ne.s32.totalorder %s81, %s82
    %p94 = scmp.eq.s32.totalorder %s16, 7
    %p95 = por %p93, %p94
    %p97 = scmp.ne.s32.totalorder %s82, %s96
    %p98 = scmp.eq.s32.totalorder %s16, 0
    %p99 = por %p97, %p98
    %s101 = sadd.s32 %s100, 1
    %p104 = scmp.eq.s32.totalorder %s10, 7
    %p105 = scmp.ne.s32.totalorder %s100, %s102
    %p106 = scmp.eq.s32.totalorder %s10, 0
    %p107 = por %p105, %p106
    %p108 = scmp.ne.s32.totalorder %s100, %s102
    %p109 = scmp.eq.s32.totalorder %s15, 7
    %p110 = por %p108, %p109
    %p111 = scmp.ne.s32.totalorder %s102, %s103
    %p112 = scmp.eq.s32.totalorder %s15, 0
    %p113 = por %p111, %p112
    %p114 = scmp.ne.s32.totalorder %s102, %s103
    %p115 = scmp.eq.s32.totalorder %s16, 7
    %p116 = por %p114, %p115
    %p118 = scmp.ne.s32.totalorder %s103, %s117
    %p119 = scmp.eq.s32.totalorder %s16, 0
    %p120 = por %p118, %p119
    %s121 = ssub.s32 %s17, %s29
    %s122 = ssub.s32 %s18, %s25
    %s123 = sor.u32 %s121, %s122
    %p124 = scmp.eq.s32.totalorder %s123, 0
    %s126 = sadd.s32 %s125, 1
    %s127 = scalar_select %p124, %s125, %s126
    %p130 = pneg %p124
    %p131 = scmp.eq.s32.totalorder %s10, 7
    %p132 = por %p130, %p131
    %p133 = scmp.ne.s32.totalorder %s125, %s128
    %p134 = scmp.eq.s32.totalorder %s10, 0
    %p135 = por %p133, %p134
    %p136 = scmp.ne.s32.totalorder %s125, %s128
    %p137 = scmp.eq.s32.totalorder %s15, 7
    %p138 = por %p136, %p137
    %p139 = scmp.ne.s32.totalorder %s128, %s129
    %p140 = scmp.eq.s32.totalorder %s15, 0
    %p141 = por %p139, %p140
    %p142 = scmp.ne.s32.totalorder %s128, %s129
    %p143 = scmp.eq.s32.totalorder %s16, 7
    %p144 = por %p142, %p143
    %p146 = scmp.ne.s32.totalorder %s129, %s145
    %p147 = scmp.eq.s32.totalorder %s16, 0
    %p148 = por %p146, %p147
    %p149 = scmp.le.s32.totalorder 1, %s10
    %p150 = scmp.lt.s32.totalorder %s10, 9
    %p151 = pnand %p149, %p150
    %p152 = pneg %p151
    // Predicated region
    $region9: #{conv_bn_relu.3} parent=5 // pred_check
      _
    $region10: #{conv_bn_relu.3} parent=5 // pred_check_branch
      %154 = sbr.rel (%p151) target = $region12
    $region11: #{conv_bn_relu.3} parent=5 // pred_region
      %s155 = ssub.s32 %s10, 1
      // Predicated region
      $region13: #{conv_bn_relu.3} parent=11 // pred_check
        %p156 = pneg %p71
      $region14: #{conv_bn_relu.3} parent=11 // pred_check_branch
        %158 = sbr.rel (%p156) target = $region16
      $region15: #{conv_bn_relu.3} parent=11 // pred_region
        _
      $region16: #{conv_bn_relu.3} parent=11 // pred_fallthru
        _
      // Predicated region
      $region17: #{conv_bn_relu.3} parent=11 // pred_check
        %p159 = pneg %p92
      $region18: #{conv_bn_relu.3} parent=11 // pred_check_branch
        %161 = sbr.rel (%p159) target = $region20
      $region19: #{conv_bn_relu.3} parent=11 // pred_region
        _
      $region20: #{conv_bn_relu.3} parent=11 // pred_fallthru
        _
      // Predicated region
      $region21: #{conv_bn_relu.3} parent=11 // pred_check
        %p162 = pneg %p113
      $region22: #{conv_bn_relu.3} parent=11 // pred_check_branch
        %164 = sbr.rel (%p162) target = $region24
      $region23: #{conv_bn_relu.3} parent=11 // pred_region
        _
      $region24: #{conv_bn_relu.3} parent=11 // pred_fallthru
        _
    $region12: #{conv_bn_relu.3} parent=5 // pred_fallthru
      _
    %p165 = scmp.lt.s32.totalorder %s10, 8
    // Predicated region
    $region25: #{conv_bn_relu.3} parent=5 // pred_check
      %p166 = pneg %p165
    $region26: #{conv_bn_relu.3} parent=5 // pred_check_branch
      %168 = sbr.rel (%p166) target = $region28
    $region27: #{conv_bn_relu.3} parent=5 // pred_region
      // Predicated region
      $region29: #{conv_bn_relu.3} parent=27 // pred_check
        %p169 = pneg %p44
      $region30: #{conv_bn_relu.3} parent=27 // pred_check_branch
        %171 = sbr.rel (%p169) target = $region32
      $region31: #{conv_bn_relu.3} parent=27 // pred_region
        %s172 = smul.u32 4, %s18
        %p173 = scmp.lt.s32.totalorder %s17, 1
        %s174 = scalar_select %p173, %s17, 1
        %p175 = scmp.lt.s32.totalorder %s172, 15
        %s176 = scalar_select %p175, %s172, 15
        %s177 = smul.addr %s176, 2
        %s178 = smul.addr %s174, 32
        %s179 = sadd.s32 %s177, %s178
        %s180 = smul.addr %s179, 4
        %s181 = scalar_lea.vmem %s0, %s180
        %s182 = smul.u32 4, %s18
      $region32: #{conv_bn_relu.3} parent=27 // pred_fallthru
        _
    $region28: #{conv_bn_relu.3} parent=5 // pred_fallthru
      _
    %p183 = scmp.le.s32.totalorder 1, %s10
    %p184 = scmp.lt.s32.totalorder %s10, 9
    %p185 = pnand %p183, %p184
    %p186 = pneg %p185
    // Predicated region
    $region33: #{conv_bn_relu.3} parent=5 // pred_check
      _
    $region34: #{conv_bn_relu.3} parent=5 // pred_check_branch
      %188 = sbr.rel (%p185) target = $region36
    $region35: #{conv_bn_relu.3} parent=5 // pred_region
      %s189 = ssub.s32 %s10, 1
      %s190 = smul.u32 4, %s20
      %p191 = scmp.lt.s32.totalorder %s19, 1
      %s192 = scalar_select %p191, %s19, 1
      %p193 = scmp.lt.s32.totalorder %s190, 15
      %s194 = scalar_select %p193, %s190, 15
      %s195 = smul.addr %s194, 2
      %s196 = smul.addr %s192, 32
      %s197 = sadd.s32 %s195, %s196
      %s198 = smul.addr %s197, 4
      %s199 = scalar_lea.vmem %s0, %s198
      %p200 = pneg %p50
      %p201 = pneg %p47
      %p202 = pneg %p71
      %p203 = pneg %p68
      %p204 = pneg %p92
      %p205 = pneg %p89
      %p206 = pneg %p113
      %p207 = pneg %p110
      %p208 = pneg %p141
      %p209 = pneg %p138
      %s210 = smul.u32 4, %s20
      %p211 = scmp.lt.s32.totalorder %s19, 1
      %s212 = scalar_select %p211, %s19, 1
      %p213 = scmp.lt.s32.totalorder %s210, 15
      %s214 = scalar_select %p213, %s210, 15
      %s215 = smul.addr %s214, 2
      %s216 = smul.addr %s212, 32
      %s217 = sadd.s32 %s215, %s216
      %s218 = smul.addr %s217, 8
      %s219 = scalar_lea.vmem %s4, %s218
      %s220 = smul.u32 4, %s20
      %p221 = scmp.lt.s32.totalorder %s19, 1
      %s222 = scalar_select %p221, %s19, 1
      %p223 = scmp.lt.s32.totalorder %s220, 15
      %s224 = scalar_select %p223, %s220, 15
      %s225 = smul.addr %s224, 2
      %s226 = smul.addr %s222, 32
      %s227 = sadd.s32 %s225, %s226
      %s228 = smul.addr %s227, 4
      %s229 = scalar_lea.vmem %s0, %s228
      %s230 = smul.u32 4, %s20
      %s231 = smul.u32 4, %s20
      %p232 = scmp.lt.s32.totalorder %s19, 1
      %s233 = scalar_select %p232, %s19, 1
      %p234 = scmp.lt.s32.totalorder %s231, 15
      %s235 = scalar_select %p234, %s231, 15
      %s236 = smul.addr %s235, 2
      %s237 = smul.addr %s233, 32
      %s238 = sadd.s32 %s236, %s237
      %s239 = smul.addr %s238, 8
      %s240 = scalar_lea.vmem %s4, %s239
      %s241 = smul.u32 4, %s20
      %v242 = vld [vmem:[%s1] sm:$0xff]
      %v243 = vld [vmem:[%s1 + $0x8] sm:$0xff]
      %v244 = vld [vmem:[%s1 + $0x10] sm:$0xff]
      %v245 = vld [vmem:[%s1 + $0x18] sm:$0xff]
      %v246 = vld [vmem:[%s1 + $0x20] sm:$0xff]
      %v247 = vld [vmem:[%s1 + $0x28] sm:$0xff]
      %v248 = vld [vmem:[%s1 + $0x30] sm:$0xff]
      %v249 = vld [vmem:[%s1 + $0x38] sm:$0xff]
      %v250 = vadd.f32 %v242, %v243
      %v251 = vadd.f32 %v250, %v244
      %v252 = vadd.f32 %v251, %v245
      %v253 = vadd.f32 %v252, %v246
      %v254 = vadd.f32 %v253, %v247
      %v255 = vadd.f32 %v254, %v248
      %v256 = vadd.f32 %v255, %v249
      %v257 = vmul.f32 %v256, 0.001953125
      %v258 = vmul.f32 %v257, %v257
      %v260 = vrot.slane %v258, 7
      %v262 = vsub.f32 %v257, %v260
      %v263 = vmax.f32 %v262, 0.0
      %v264 = vld [vmem:[%s2] sm:$0x1]
      %v265 = vadd.f32 %v263, 0.001
      %v266 = vrsqrt.pop %v265
      %v269 = vunpack.c.l.s4 1966171168
      %v270 = vunpack.c.0.s8 %v269
      %v271 = vlaneseq
      %v272 = vshrl.u32 %v271, 7
      %v273 = vsub.s32 %v270, %v272
      %v274 = vrot.slane %v266, %v273
      %v275 = vcombine.high %v274, %v274
      %v277 = vunpack.c.l.s4 1966171168
      %v278 = vunpack.c.0.s8 %v277
      %v279 = vlaneseq
      %v280 = vshrl.u32 %v279, 7
      %v281 = vsub.s32 %v278, %v280
      %v282 = vrot.slane %v275, %v281
      %v284 = vmul.f32 %v264, %v282
      %v285 = vld [vmem:[%s3] sm:$0x1]
      %v286 = vmul.f32 %v257, %v284
      %v287 = vsub.f32 %v285, %v286
      %v288 = vld [vmem:[%s229] sm:$0xf]
      %v289 = vld [vmem:[%s229 + $0x4] sm:$0xf]
      %v290 = vld [vmem:[%s229 + $0x8] sm:$0xf]
      %v291 = vld [vmem:[%s229 + $0xc] sm:$0xf]
      %v292 = vld [vmem:[%s229 + $0x10] sm:$0xf]
      %v293 = vld [vmem:[%s229 + $0x14] sm:$0xf]
      %v294 = vld [vmem:[%s229 + $0x18] sm:$0xf]
      %v295 = vld [vmem:[%s229 + $0x1c] sm:$0xf]
      %v296 = vunpack.c.l.bf16 %v288
      %v297 = vunpack.c.l.bf16 %v289
      %v298 = vunpack.c.l.bf16 %v290
      %v299 = vunpack.c.l.bf16 %v291
      %v300 = vunpack.c.l.bf16 %v292
      %v301 = vunpack.c.l.bf16 %v293
      %v302 = vunpack.c.l.bf16 %v294
      %v303 = vunpack.c.l.bf16 %v295
      %v305 = vlaneseq
      %v306 = vshrl.u32 %v305, 7
      %v307 = vsub.s32 0, %v306
      %v308 = vrot.slane %v284, %v307
      %v310 = vmul.f32 %v296, %v308
      %v311 = vmul.f32 %v297, %v308
      %v312 = vmul.f32 %v298, %v308
      %v313 = vmul.f32 %v299, %v308
      %v314 = vmul.f32 %v300, %v308
      %v315 = vmul.f32 %v301, %v308
      %v316 = vmul.f32 %v302, %v308
      %v317 = vmul.f32 %v303, %v308
      %v319 = vlaneseq
      %v320 = vshrl.u32 %v319, 7
      %v321 = vsub.s32 0, %v320
      %v322 = vrot.slane %v287, %v321
      %v324 = vadd.f32 %v310, %v322
      %v325 = vadd.f32 %v311, %v322
      %v326 = vadd.f32 %v312, %v322
      %v327 = vadd.f32 %v313, %v322
      %v328 = vadd.f32 %v314, %v322
      %v329 = vadd.f32 %v315, %v322
      %v330 = vadd.f32 %v316, %v322
      %v331 = vadd.f32 %v317, %v322
      %v332 = vmax.f32 %v324, 0.0
      %v333 = vmax.f32 %v325, 0.0
      %v334 = vmax.f32 %v326, 0.0
      %v335 = vmax.f32 %v327, 0.0
      %v336 = vmax.f32 %v328, 0.0
      %v337 = vmax.f32 %v329, 0.0
      %v338 = vmax.f32 %v330, 0.0
      %v339 = vmax.f32 %v331, 0.0
      %340 = vst [vmem:[%s240] sm:$0xff] %v332
      %341 = vst [vmem:[%s240 + $0x8] sm:$0xff] %v333
      %342 = vst [vmem:[%s240 + $0x10] sm:$0xff] %v334
      %343 = vst [vmem:[%s240 + $0x18] sm:$0xff] %v335
      %344 = vst [vmem:[%s240 + $0x20] sm:$0xff] %v336
      %345 = vst [vmem:[%s240 + $0x28] sm:$0xff] %v337
      %346 = vst [vmem:[%s240 + $0x30] sm:$0xff] %v338
      %347 = vst [vmem:[%s240 + $0x38] sm:$0xff] %v339
      %s348 = smul.u32 4, %s20
      %p349 = scmp.lt.s32.totalorder %s19, 1
      %s350 = scalar_select %p349, %s19, 1
      %p351 = scmp.lt.s32.totalorder %s348, 15
      %s352 = scalar_select %p351, %s348, 15
      %s353 = smul.addr %s352, 2
      %s354 = smul.addr %s350, 32
      %s355 = sadd.s32 %s353, %s354
      %s356 = smul.addr %s355, 8
      %s357 = scalar_lea.vmem %s4, %s356
      // Predicated region
      $region37: #{conv_bn_relu.3} parent=35 // pred_check
        %p358 = pneg %p138
      $region38: #{conv_bn_relu.3} parent=35 // pred_check_branch
        %360 = sbr.rel (%p358) target = $region40
      $region39: #{conv_bn_relu.3} parent=35 // pred_region
        %s361 = smul.u32 4, %s20
      $region40: #{conv_bn_relu.3} parent=35 // pred_fallthru
        _
    $region36: #{conv_bn_relu.3} parent=5 // pred_fallthru
      _
    %p362 = scmp.le.s32.totalorder 2, %s10
    // Predicated region
    $region41: #{conv_bn_relu.3} parent=5 // pred_check
      %p363 = pneg %p362
    $region42: #{conv_bn_relu.3} parent=5 // pred_check_branch
      %365 = sbr.rel (%p363) target = $region44
    $region43: #{conv_bn_relu.3} parent=5 // pred_region
      %s366 = ssub.s32 %s10, 2
      // Predicated region
      $region45: #{conv_bn_relu.3} parent=43 // pred_check
        %p367 = pneg %p144
      $region46: #{conv_bn_relu.3} parent=43 // pred_check_branch
        %369 = sbr.rel (%p367) target = $region48
      $region47: #{conv_bn_relu.3} parent=43 // pred_region
        %s370 = smul.u32 4, %s22
        %p371 = scmp.lt.s32.totalorder %s21, 1
        %s372 = scalar_select %p371, %s21, 1
        %p373 = scmp.lt.s32.totalorder %s370, 15
        %s374 = scalar_select %p373, %s370, 15
        %s375 = smul.addr %s374, 2
        %s376 = smul.addr %s372, 32
        %s377 = sadd.s32 %s375, %s376
        %s378 = smul.addr %s377, 8
        %s379 = scalar_lea.vmem %s4, %s378
      $region48: #{conv_bn_relu.3} parent=43 // pred_fallthru
        _
    $region44: #{conv_bn_relu.3} parent=5 // pred_fallthru
      _
  $region6: #{conv_bn_relu.3} parent=0 // loop_footer
    %s14 = sadd.s32 1, %s10
  $region7: #{conv_bn_relu.3} parent=0 // loop_footer_branch
    %9 = sbr.rel target = $region3
  $region8: #{conv_bn_relu.3} parent=0 // loop_exit
    _

// kernel: conv_bn_relu.2
$region0: #{conv_bn_relu.2}
  #allocation0 [shape = 'u32[]', space=smem, size = 0x4, offset = 0x4, fixed_abs, tag = 'smem constant byte address 0x4 - core index']
  #allocation1 [shape = 'u32[144,128]{1,0:T(1,128)}', space=vmem, size = 0x12000, scoped, tag = 'internal scratch']
  %s0 = inlined_call_operand.vmem [shape: bf16[2,18,18,4], index: 0, kind: input, shape index: {}]
  %s1 = inlined_call_operand.vmem [shape: bf16[9,4,128], index: 1, kind: input, shape index: {}]
  %s2 = inlined_call_operand.vmem [shape: bf16[2,16,16,128], index: 2, kind: output, shape index: {0}]
  %s3 = inlined_call_operand.vmem [shape: f32[2,4,8,128], index: 3, kind: output, shape index: {1}]
  %4 = xla_tuple %s2, %s3
  %s5 = sld [smem:[#allocation0]]
  $region49: #{conv_bn_relu.2} parent=0
    _
  %s7 = ssub.s32 1, %s5
  %s8 = scalar_select 0, %s7, %s5
  loop: start=0, step=1, limit=10
  $region2: #{conv_bn_relu.2} parent=0 // loop_pre_header
    _
  $region3: #{conv_bn_relu.2} parent=0 // loop_header
    %s10 = sphi 0, %s14
    %p11 = scmp.ge.s32.totalorder %s10, 10
    %s17 = sphi 0, %s29
    %s18 = sphi 0, %s25
    %s19 = sphi 0, %s17
    %s20 = sphi 0, %s18
    %s21 = sphi 0, %s19
    %s22 = sphi 0, %s20
    %s32 = sphi 0, %s34
    %s35 = sphi 0, %s32
    %s36 = sphi 0, %s35
    %s52 = sphi 0, %s36
    %s56 = sphi 0, %s56
    %s58 = sphi 0, %s56
    %s59 = sphi 0, %s58
    %s73 = sphi 0, %s59
    %s81 = sphi 0, %s83
    %s84 = sphi 0, %s81
    %s85 = sphi 0, %s84
    %s101 = sphi 0, %s85
    %s109 = sphi 0, %s111
    %s112 = sphi 0, %s109
    %s113 = sphi 0, %s112
    %s129 = sphi 0, %s113
  $region4: #{conv_bn_relu.2} parent=0 // loop_header_branch
    %13 = sbr.rel (%p11) target = $region8
  $region5: #{conv_bn_relu.2} parent=0 // loop_body
    %s15 = ssub.s32 %s10, 1
    %s16 = ssub.s32 %s10, 2
    %s23 = sadd.s32 1, %s18
    %p24 = scmp.ge.s32.totalorder %s23, 4
    %s25 = scalar_select %p24, 0, %s23
    %s26 = sadd.s32 1, %s17
    %s27 = scalar_select %p24, %s26, %s17
    %p28 = scmp.ge.s32.totalorder %s27, 2
    %s29 = scalar_select %p28, 0, %s27
    %s30 = ssub.s32 %s17, %s29
    %p31 = scmp.eq.s32.totalorder %s30, 0
    %s33 = sadd.s32 %s32, 1
    %s34 = scalar_select %p31, %s32, %s33
    %p37 = pneg %p31
    %p38 = scmp.eq.s32.totalorder %s10, 7
    %p39 = por %p37, %p38
    %p40 = scmp.ne.s32.totalorder %s32, %s35
    %p41 = scmp.eq.s32.totalorder %s10, 0
    %p42 = por %p40, %p41
    %p43 = scmp.ne.s32.totalorder %s32, %s35
    %p44 = scmp.eq.s32.totalorder %s15, 7
    %p45 = por %p43, %p44
    %p46 = scmp.ne.s32.totalorder %s35, %s36
    %p47 = scmp.eq.s32.totalorder %s15, 0
    %p48 = por %p46, %p47
    %p49 = scmp.ne.s32.totalorder %s35, %s36
    %p50 = scmp.eq.s32.totalorder %s16, 7
    %p51 = por %p49, %p50
    %p53 = scmp.ne.s32.totalorder %s36, %s52
    %p54 = scmp.eq.s32.totalorder %s16, 0
    %p55 = por %p53, %p54
    %s57 = sadd.s32 %s56, 1
    %p60 = scmp.eq.s32.totalorder %s10, 7
    %p61 = scmp.ne.s32.totalorder %s56, %s58
    %p62 = scmp.eq.s32.totalorder %s10, 0
    %p63 = por %p61, %p62
    %p64 = scmp.ne.s32.totalorder %s56, %s58
    %p65 = scmp.eq.s32.totalorder %s15, 7
    %p66 = por %p64, %p65
    %p67 = scmp.ne.s32.totalorder %s58, %s59
    %p68 = scmp.eq.s32.totalorder %s15, 0
    %p69 = por %p67, %p68
    %p70 = scmp.ne.s32.totalorder %s58, %s59
    %p71 = scmp.eq.s32.totalorder %s16, 7
    %p72 = por %p70, %p71
    %p74 = scmp.ne.s32.totalorder %s59, %s73
    %p75 = scmp.eq.s32.totalorder %s16, 0
    %p76 = por %p74, %p75
    %s77 = ssub.s32 %s17, %s29
    %s78 = ssub.s32 %s18, %s25
    %s79 = sor.u32 %s77, %s78
    %p80 = scmp.eq.s32.totalorder %s79, 0
    %s82 = sadd.s32 %s81, 1
    %s83 = scalar_select %p80, %s81, %s82
    %p86 = pneg %p80
    %p87 = scmp.eq.s32.totalorder %s10, 7
    %p88 = por %p86, %p87
    %p89 = scmp.ne.s32.totalorder %s81, %s84
    %p90 = scmp.eq.s32.totalorder %s10, 0
    %p91 = por %p89, %p90
    %p92 = scmp.ne.s32.totalorder %s81, %s84
    %p93 = scmp.eq.s32.totalorder %s15, 7
    %p94 = por %p92, %p93
    %p95 = scmp.ne.s32.totalorder %s84, %s85
    %p96 = scmp.eq.s32.totalorder %s15, 0
    %p97 = por %p95, %p96
    %p98 = scmp.ne.s32.totalorder %s84, %s85
    %p99 = scmp.eq.s32.totalorder %s16, 7
    %p100 = por %p98, %p99
    %p102 = scmp.ne.s32.totalorder %s85, %s101
    %p103 = scmp.eq.s32.totalorder %s16, 0
    %p104 = por %p102, %p103
    %s105 = ssub.s32 %s17, %s29
    %s106 = ssub.s32 %s18, %s25
    %s107 = sor.u32 %s105, %s106
    %p108 = scmp.eq.s32.totalorder %s107, 0
    %s110 = sadd.s32 %s109, 1
    %s111 = scalar_select %p108, %s109, %s110
    %p114 = pneg %p108
    %p115 = scmp.eq.s32.totalorder %s10, 7
    %p116 = por %p114, %p115
    %p117 = scmp.ne.s32.totalorder %s109, %s112
    %p118 = scmp.eq.s32.totalorder %s10, 0
    %p119 = por %p117, %p118
    %p120 = scmp.ne.s32.totalorder %s109, %s112
    %p121 = scmp.eq.s32.totalorder %s15, 7
    %p122 = por %p120, %p121
    %p123 = scmp.ne.s32.totalorder %s112, %s113
    %p124 = scmp.eq.s32.totalorder %s15, 0
    %p125 = por %p123, %p124
    %p126 = scmp.ne.s32.totalorder %s112, %s113
    %p127 = scmp.eq.s32.totalorder %s16, 7
    %p128 = por %p126, %p127
    %p130 = scmp.ne.s32.totalorder %s113, %s129
    %p131 = scmp.eq.s32.totalorder %s16, 0
    %p132 = por %p130, %p131
    %p133 = scmp.le.s32.totalorder 1, %s10
    %p134 = scmp.lt.s32.totalorder %s10, 9
    %p135 = pnand %p133, %p134
    %p136 = pneg %p135
    // Predicated region
    $region9: #{conv_bn_relu.2} parent=5 // pred_check
      _
    $region10: #{conv_bn_relu.2} parent=5 // pred_check_branch
      %138 = sbr.rel (%p135) target = $region12
    $region11: #{conv_bn_relu.2} parent=5 // pred_region
      %s139 = ssub.s32 %s10, 1
      // Predicated region
      $region13: #{conv_bn_relu.2} parent=11 // pred_check
        %p140 = pneg %p69
      $region14: #{conv_bn_relu.2} parent=11 // pred_check_branch
        %142 = sbr.rel (%p140) target = $region16
      $region15: #{conv_bn_relu.2} parent=11 // pred_region
        _
      $region16: #{conv_bn_relu.2} parent=11 // pred_fallthru
        _
    $region12: #{conv_bn_relu.2} parent=5 // pred_fallthru
      _
    %p143 = scmp.lt.s32.totalorder %s10, 8
    // Predicated region
    $region17: #{conv_bn_relu.2} parent=5 // pred_check
      %p144 = pneg %p143
    $region18: #{conv_bn_relu.2} parent=5 // pred_check_branch
      %146 = sbr.rel (%p144) target = $region20
    $region19: #{conv_bn_relu.2} parent=5 // pred_region
      // Predicated region
      $region21: #{conv_bn_relu.2} parent=19 // pred_check
        %p147 = pneg %p42
      $region22: #{conv_bn_relu.2} parent=19 // pred_check_branch
        %149 = sbr.rel (%p147) target = $region24
      $region23: #{conv_bn_relu.2} parent=19 // pred_region
        %p150 = scmp.lt.s32.totalorder %s17, 1
        %s151 = scalar_select %p150, %s17, 1
        %s152 = smul.addr %s151, 54
        %s153 = smul.addr %s152, 4
        %s154 = scalar_lea.vmem %s0, %s153
      $region24: #{conv_bn_relu.2} parent=19 // pred_fallthru
        _
    $region20: #{conv_bn_relu.2} parent=5 // pred_fallthru
      _
    %p155 = scmp.le.s32.totalorder 1, %s10
    %p156 = scmp.lt.s32.totalorder %s10, 9
    %p157 = pnand %p155, %p156
    %p158 = pneg %p157
    // Predicated region
    $region25: #{conv_bn_relu.2} parent=5 // pred_check
      _
    $region26: #{conv_bn_relu.2} parent=5 // pred_check_branch
      %160 = sbr.rel (%p157) target = $region28
    $region27: #{conv_bn_relu.2} parent=5 // pred_region
      %s161 = ssub.s32 %s10, 1
      %p162 = scmp.lt.s32.totalorder %s19, 1
      %s163 = scalar_select %p162, %s19, 1
      %s164 = smul.addr %s163, 54
      %s165 = smul.addr %s164, 4
      %s166 = scalar_lea.vmem %s0, %s165
      %p167 = pneg %p48
      %p168 = pneg %p45
      %p169 = pneg %p69
      %p170 = pneg %p66
      %p171 = pneg %p97
      %p172 = pneg %p94
      %s173 = smul.u32 4, %s20
      %p174 = scmp.lt.s32.totalorder %s19, 1
      %s175 = scalar_select %p174, %s19, 1
      %p176 = scmp.lt.s32.totalorder %s173, 15
      %s177 = scalar_select %p176, %s173, 15
      %s178 = smul.addr %s177, 2
      %s179 = smul.addr %s175, 32
      %s180 = sadd.s32 %s178, %s179
      %s181 = smul.addr %s180, 4
      %s182 = scalar_lea.vmem %s2, %s181
      %p183 = pneg %p125
      %p184 = pneg %p122
      %p185 = scmp.lt.s32.totalorder %s19, 1
      %s186 = scalar_select %p185, %s19, 1
      %p187 = scmp.lt.s32.totalorder %s20, 3
      %s188 = scalar_select %p187, %s20, 3
      %s189 = smul.addr %s186, 4
      %s190 = sadd.s32 %s188, %s189
      %s191 = smul.addr %s190, 8
      %s192 = scalar_lea.vmem %s3, %s191
      %p193 = scmp.lt.s32.totalorder %s19, 1
      %s194 = scalar_select %p193, %s19, 1
      %s195 = smul.addr %s194, 54
      %s196 = smul.addr %s195, 4
      %s197 = scalar_lea.vmem %s0, %s196
      %s198 = smul.u32 4, %s20
      %p199 = scmp.lt.s32.totalorder %s19, 1
      %s200 = scalar_select %p199, %s19, 1
      %p201 = scmp.lt.s32.totalorder %s198, 15
      %s202 = scalar_select %p201, %s198, 15
      %s203 = smul.addr %s202, 2
      %s204 = smul.addr %s200, 32
      %s205 = sadd.s32 %s203, %s204
      %s206 = smul.addr %s205, 4
      %s207 = scalar_lea.vmem %s2, %s206
      %s208 = smul.u32 4, %s20
      %p209 = scmp.lt.s32.totalorder %s19, 1
      %s210 = scalar_select %p209, %s19, 1
      %p211 = scmp.lt.s32.totalorder %s20, 3
      %s212 = scalar_select %p211, %s20, 3
      %s213 = smul.addr %s210, 4
      %s214 = sadd.s32 %s212, %s213
      %s215 = smul.addr %s214, 8
      %s216 = scalar_lea.vmem %s3, %s215
      %s218 = smul.u32 %s20, 4
      %s219 = smul.u32 %s218, 3
      %s220 = smul.addr %s219, 4
      %s221 = scalar_lea.vmem %s197, %s220
      %v222 = vld [vmem:[%s221] sm:$0xf]
      %v223 = vld [vmem:[%s221 + $0x4] sm:$0xf]
      %v224 = vld [vmem:[%s1] sm:$0x3]
      %v225 = vld [vmem:[%s221 + $0x8] sm:$0x1]
      %s226 = scalar_lea.vmem %s1, 2
      %v227 = vld [vmem:[%s226] sm:$0x3]
      %v231 = vunpack.c.l.b16 %v222
      %v232 = vunpack.c.l.b16 %v223
      %v233 = vunpack.c.l.b16 %v225
      %v234 = vpack.c.b16 %v232, %v231
      %v235 = vpack.c.b16 %v233, %v233
      %vm236 = vsmask.f32 7424
      %v238 = vshrl.u32 %v234, 16
      %v240 = vshll.u32 %v234, 16
      %v242 = vrot.slane %v240, 1
      %v243 = vor.u32 %v238, %v242
      %v245 = vshll.u32 %v235, 16
      %v247 = vrot.slane %v245, 1
      %v248 = vsel %vm236, %v243, %v247
      %vm249 = vcmask 31744
      %v251 = vsel %vm249, %v248, 0
      %vm253 = vcmask 1041408
      %v255 = vsel %vm253, %v227, 0
      %257 = vmatprep.subr.bf16.mxu0 0
      %258 = vmatpush1.bf16.msra.mxu0 %v255
      %259 = vmatprep.subr.bf16.mxu0 0
      %260 = vmatpush1.bf16.msra.mxu0 0
      %261 = vmatprep.subr.bf16.mxu0 0
      %262 = vmatpush1.bf16.msra.mxu0 0
      %263 = vmatprep.subr.bf16.mxu0 0
      %264 = vmatpush1.bf16.msra.mxu0 0
      %265 = vmatprep.subr.bf16.mxu0 0
      %266 = vmatpush1.bf16.msra.mxu0 0
      %267 = vmatprep.subr.bf16.mxu0 0
      %268 = vmatpush1.bf16.msra.mxu0 0
      %269 = vmatprep.subr.bf16.mxu0 0
      %270 = vmatpush1.bf16.msra.mxu0 0
      %271 = vmatprep.subr.bf16.mxu0 0
      %272 = vmatpush1.bf16.msra.mxu0 0
      %273 = vmatprep.subr.bf16.mxu0 0
      %274 = vmatpush1.bf16.msra.mxu0 0
      %275 = vmatprep.subr.bf16.mxu0 0
      %276 = vmatpush1.bf16.msra.mxu0 0
      %277 = vmatprep.subr.bf16.mxu0 0
      %278 = vmatpush1.bf16.msra.mxu0 0
      %279 = vmatprep.subr.bf16.mxu0 0
      %280 = vmatpush1.bf16.msra.mxu0 0
      %281 = vmatprep.subr.bf16.mxu0 0
      %282 = vmatpush1.bf16.msra.mxu0 0
      %283 = vmatprep.subr.bf16.mxu0 0
      %284 = vmatpush1.bf16.msra.mxu0 0
      %285 = vmatprep.subr.bf16.mxu0 0
      %286 = vmatpush1.bf16.msra.mxu0 0
      %287 = vmatprep.subr.bf16.mxu0 0
      %288 = vmatpush1.bf16.msra.mxu0 0
      %289 = vmatprep.mubr.bf16.mxu0 0
      %290 = vmatmul.mubr.bf16.gmra.mrb[0].mxu0 %v251
      %v291 = vpop.f32.mrb[0].mxu0
      %v292 = vadd.f32 0.0, %v291
      %v293 = vpop.f32.mrb[0].mxu0
      %v294 = vpop.f32.mrb[0].mxu0
      %v295 = vadd.f32 0.0, %v294
      %v296 = vpop.f32.mrb[0].mxu0
      %297 = vdwg.mxu0
      %v298 = vsel %vm249, %v234, 0
      %v301 = vsel %vm253, %v224, 0
      %303 = vmatprep.subr.bf16.mxu0 0
      %304 = vmatpush1.bf16.msra.mxu0 %v301
      %305 = vmatprep.subr.bf16.mxu0 0
      %306 = vmatpush1.bf16.msra.mxu0 0
      %307 = vmatprep.subr.bf16.mxu0 0
      %308 = vmatpush1.bf16.msra.mxu0 0
      %309 = vmatprep.subr.bf16.mxu0 0
      %310 = vmatpush1.bf16.msra.mxu0 0
      %311 = vmatprep.subr.bf16.mxu0 0
      %312 = vmatpush1.bf16.msra.mxu0 0
      %313 = vmatprep.subr.bf16.mxu0 0
      %314 = vmatpush1.bf16.msra.mxu0 0
      %315 = vmatprep.subr.bf16.mxu0 0
      %316 = vmatpush1.bf16.msra.mxu0 0
      %317 = vmatprep.subr.bf16.mxu0 0
      %318 = vmatpush1.bf16.msra.mxu0 0
      %319 = vmatprep.subr.bf16.mxu0 0
      %320 = vmatpush1.bf16.msra.mxu0 0
      %321 = vmatprep.subr.bf16.mxu0 0
      %322 = vmatpush1.bf16.msra.mxu0 0
      %323 = vmatprep.subr.bf16.mxu0 0
      %324 = vmatpush1.bf16.msra.mxu0 0
      %325 = vmatprep.subr.bf16.mxu0 0
      %326 = vmatpush1.bf16.msra.mxu0 0
      %327 = vmatprep.subr.bf16.mxu0 0
      %328 = vmatpush1.bf16.msra.mxu0 0
      %329 = vmatprep.subr.bf16.mxu0 0
      %330 = vmatpush1.bf16.msra.mxu0 0
      %331 = vmatprep.subr.bf16.mxu0 0
      %332 = vmatpush1.bf16.msra.mxu0 0
      %333 = vmatprep.subr.bf16.mxu0 0
      %334 = vmatpush1.bf16.msra.mxu0 0
      %335 = vmatprep.mubr.bf16.mxu0 0
      %336 = vmatmul.mubr.bf16.gmra.mrb[0].mxu0 %v298
      %v337 = vpop.f32.mrb[0].mxu0
      %v338 = vadd.f32 %v292, %v337
      %v339 = vpop.f32.mrb[0].mxu0
      %v340 = vpop.f32.mrb[0].mxu0
      %v341 = vadd.f32 %v295, %v340
      %v342 = vpop.f32.mrb[0].mxu0
      %343 = vdwg.mxu0
      %v344 = vld [vmem:[%s221] sm:$0xe]
      %s345 = scalar_lea.vmem %s1, 4
      %v346 = vld [vmem:[%s345] sm:$0x3]
      %v348 = vunpack.c.l.b16 %v344
      %v349 = vpack.c.b16 %v232, %v348
      %vm350 = vcmask 1046528
      %v351 = vrot.slane %v349, 1
      %v352 = vrot.slane %v235, 1
      %v353 = vsel %vm350, %v351, %v352
      %v355 = vsel %vm249, %v353, 0
      %v358 = vsel %vm253, %v346, 0
      %360 = vmatprep.subr.bf16.mxu0 0
      %361 = vmatpush1.bf16.msra.mxu0 %v358
      %362 = vmatprep.subr.bf16.mxu0 0
      %363 = vmatpush1.bf16.msra.mxu0 0
      %364 = vmatprep.subr.bf16.mxu0 0
      %365 = vmatpush1.bf16.msra.mxu0 0
      %366 = vmatprep.subr.bf16.mxu0 0
      %367 = vmatpush1.bf16.msra.mxu0 0
      %368 = vmatprep.subr.bf16.mxu0 0
      %369 = vmatpush1.bf16.msra.mxu0 0
      %370 = vmatprep.subr.bf16.mxu0 0
      %371 = vmatpush1.bf16.msra.mxu0 0
      %372 = vmatprep.subr.bf16.mxu0 0
      %373 = vmatpush1.bf16.msra.mxu0 0
      %374 = vmatprep.subr.bf16.mxu0 0
      %375 = vmatpush1.bf16.msra.mxu0 0
      %376 = vmatprep.subr.bf16.mxu0 0
      %377 = vmatpush1.bf16.msra.mxu0 0
      %378 = vmatprep.subr.bf16.mxu0 0
      %379 = vmatpush1.bf16.msra.mxu0 0
      %380 = vmatprep.subr.bf16.mxu0 0
      %381 = vmatpush1.bf16.msra.mxu0 0
      %382 = vmatprep.subr.bf16.mxu0 0
      %383 = vmatpush1.bf16.msra.mxu0 0
      %384 = vmatprep.subr.bf16.mxu0 0
      %385 = vmatpush1.bf16.msra.mxu0 0
      %386 = vmatprep.subr.bf16.mxu0 0
      %387 = vmatpush1.bf16.msra.mxu0 0
      %388 = vmatprep.subr.bf16.mxu0 0
      %389 = vmatpush1.bf16.msra.mxu0 0
      %390 = vmatprep.subr.bf16.mxu0 0
      %391 = vmatpush1.bf16.msra.mxu0 0
      %392 = vmatprep.mubr.bf16.mxu0 0
      %393 = vmatmul.mubr.bf16.gmra.mrb[0].mxu0 %v355
      %v394 = vpop.f32.mrb[0].mxu0
      %v395 = vadd.f32 0.0, %v394
      %v396 = vpop.f32.mrb[0].mxu0
      %v397 = vpop.f32.mrb[0].mxu0
      %v398 = vadd.f32 0.0, %v397
      %v399 = vpop.f32.mrb[0].mxu0
      %400 = vdwg.mxu0
      %v401 = vadd.f32 %v338, %v395
      %v402 = vadd.f32 %v341, %v398
      %s403 = sadd.s32 %s218, 1
      %s404 = smul.u32 %s403, 3
      %s405 = smul.addr %s404, 4
      %s406 = scalar_lea.vmem %s197, %s405
      %v407 = vld [vmem:[%s406] sm:$0xf]
      %v408 = vld [vmem:[%s406 + $0x4] sm:$0xf]
      %s409 = scalar_lea.vmem %s1, 6
      %v410 = vld [vmem:[%s409] sm:$0x3]
      %v413 = vunpack.c.l.b16 %v407
      %v414 = vunpack.c.l.b16 %v408
      %v415 = vpack.c.b16 %v414, %v413
      %v417 = vsel %vm249, %v415, 0
      %v420 = vsel %vm253, %v410, 0
      %422 = vmatprep.subr.bf16.mxu0 0
      %423 = vmatpush1.bf16.msra.mxu0 %v420
      %424 = vmatprep.subr.bf16.mxu0 0
      %425 = vmatpush1.bf16.msra.mxu0 0
      %426 = vmatprep.subr.bf16.mxu0 0
      %427 = vmatpush1.bf16.msra.mxu0 0
      %428 = vmatprep.subr.bf16.mxu0 0
      %429 = vmatpush1.bf16.msra.mxu0 0
      %430 = vmatprep.subr.bf16.mxu0 0
      %431 = vmatpush1.bf16.msra.mxu0 0
      %432 = vmatprep.subr.bf16.mxu0 0
      %433 = vmatpush1.bf16.msra.mxu0 0
      %434 = vmatprep.subr.bf16.mxu0 0
      %435 = vmatpush1.bf16.msra.mxu0 0
      %436 = vmatprep.subr.bf16.mxu0 0
      %437 = vmatpush1.bf16.msra.mxu0 0
      %438 = vmatprep.subr.bf16.mxu0 0
      %439 = vmatpush1.bf16.msra.mxu0 0
      %440 = vmatprep.subr.bf16.mxu0 0
      %441 = vmatpush1.bf16.msra.mxu0 0
      %442 = vmatprep.subr.bf16.mxu0 0
      %443 = vmatpush1.bf16.msra.mxu0 0
      %444 = vmatprep.subr.bf16.mxu0 0
      %445 = vmatpush1.bf16.msra.mxu0 0
      %446 = vmatprep.subr.bf16.mxu0 0
      %447 = vmatpush1.bf16.msra.mxu0 0
      %448 = vmatprep.subr.bf16.mxu0 0
      %449 = vmatpush1.bf16.msra.mxu0 0
      %450 = vmatprep.subr.bf16.mxu0 0
      %451 = vmatpush1.bf16.msra.mxu0 0
      %452 = vmatprep.subr.bf16.mxu0 0
      %453 = vmatpush1.bf16.msra.mxu0 0
      %454 = vmatprep.mubr.bf16.mxu0 0
      %455 = vmatmul.mubr.bf16.gmra.mrb[0].mxu0 %v417
      %v456 = vpop.f32.mrb[0].mxu0
      %v457 = vadd.f32 0.0, %v456
      %v458 = vpop.f32.mrb[0].mxu0
      %v459 = vpop.f32.mrb[0].mxu0
      %v460 = vadd.f32 0.0, %v459
      %v461 = vpop.f32.mrb[0].mxu0
      %462 = vdwg.mxu0
      %v463 = vadd.f32 %v401, %v457
      %v464 = vadd.f32 %v402, %v460
      %v465 = vld [vmem:[%s406] sm:$0xf]
      %v466 = vld [vmem:[%s406 + $0x4] sm:$0xf]
      %v467 = vld [vmem:[%s406 + $0x8] sm:$0x1]
      %s468 = scalar_lea.vmem %s1, 8
      %v469 = vld [vmem:[%s468] sm:$0x3]
      %v473 = vunpack.c.l.b16 %v465
      %v474 = vunpack.c.l.b16 %v466
      %v475 = vunpack.c.l.b16 %v467
      %v476 = vpack.c.b16 %v474, %v473
      %v477 = vpack.c.b16 %v475, %v475
      %v479 = vshrl.u32 %v476, 16
      %v481 = vshll.u32 %v476, 16
      %v483 = vrot.slane %v481, 1
      %v484 = vor.u32 %v479, %v483
      %v486 = vshll.u32 %v477, 16
      %v488 = vrot.slane %v486, 1
      %v489 = vsel %vm236, %v484, %v488
      %v491 = vsel %vm249, %v489, 0
      %v494 = vsel %vm253, %v469, 0
      %496 = vmatprep.subr.bf16.mxu0 0
      %497 = vmatpush1.bf16.msra.mxu0 %v494
      %498 = vmatprep.subr.bf16.mxu0 0
      %499 = vmatpush1.bf16.msra.mxu0 0
      %500 = vmatprep.subr.bf16.mxu0 0
      %501 = vmatpush1.bf16.msra.mxu0 0
      %502 = vmatprep.subr.bf16.mxu0 0
      %503 = vmatpush1.bf16.msra.mxu0 0
      %504 = vmatprep.subr.bf16.mxu0 0
      %505 = vmatpush1.bf16.msra.mxu0 0
      %506 = vmatprep.subr.bf16.mxu0 0
      %507 = vmatpush1.bf16.msra.mxu0 0
      %508 = vmatprep.subr.bf16.mxu0 0
      %509 = vmatpush1.bf16.msra.mxu0 0
      %510 = vmatprep.subr.bf16.mxu0 0
      %511 = vmatpush1.bf16.msra.mxu0 0
      %512 = vmatprep.subr.bf16.mxu0 0
      %513 = vmatpush1.bf16.msra.mxu0 0
      %514 = vmatprep.subr.bf16.mxu0 0
      %515 = vmatpush1.bf16.msra.mxu0 0
      %516 = vmatprep.subr.bf16.mxu0 0
      %517 = vmatpush1.bf16.msra.mxu0 0
      %518 = vmatprep.subr.bf16.mxu0 0
      %519 = vmatpush1.bf16.msra.mxu0 0
      %520 = vmatprep.subr.bf16.mxu0 0
      %521 = vmatpush1.bf16.msra.mxu0 0
      %522 = vmatprep.subr.bf16.mxu0 0
      %523 = vmatpush1.bf16.msra.mxu0 0
      %524 = vmatprep.subr.bf16.mxu0 0
      %525 = vmatpush1.bf16.msra.mxu0 0
      %526 = vmatprep.subr.bf16.mxu0 0
      %527 = vmatpush1.bf16.msra.mxu0 0
      %528 = vmatprep.mubr.bf16.mxu0 0
      %529 = vmatmul.mubr.bf16.gmra.mrb[0].mxu0 %v491
      %v530 = vpop.f32.mrb[0].mxu0
      %v531 = vadd.f32 0.0, %v530
      %v532 = vpop.f32.mrb[0].mxu0
      %v533 = vpop.f32.mrb[0].mxu0
      %v534 = vadd.f32 0.0, %v533
      %v535 = vpop.f32.mrb[0].mxu0
      %536 = vdwg.mxu0
      %v537 = vadd.f32 %v463, %v531
      %v538 = vadd.f32 %v464, %v534
      %v539 = vld [vmem:[%s406] sm:$0xe]
      %s540 = scalar_lea.vmem %s1, 10
      %v541 = vld [vmem:[%s540] sm:$0x3]
      %v543 = vunpack.c.l.b16 %v539
      %v544 = vpack.c.b16 %v474, %v543
      %v545 = vrot.slane %v544, 1
      %v546 = vrot.slane %v477, 1
      %v547 = vsel %vm350, %v545, %v546
      %v549 = vsel %vm249, %v547, 0
      %v552 = vsel %vm253, %v541, 0
      %554 = vmatprep.subr.bf16.mxu0 0
      %555 = vmatpush1.bf16.msra.mxu0 %v552
      %556 = vmatprep.subr.bf16.mxu0 0
      %557 = vmatpush1.bf16.msra.mxu0 0
      %558 = vmatprep.subr.bf16.mxu0 0
      %559 = vmatpush1.bf16.msra.mxu0 0
      %560 = vmatprep.subr.bf16.mxu0 0
      %561 = vmatpush1.bf16.msra.mxu0 0
      %562 = vmatprep.subr.bf16.mxu0 0
      %563 = vmatpush1.bf16.msra.mxu0 0
      %564 = vmatprep.subr.bf16.mxu0 0
      %565 = vmatpush1.bf16.msra.mxu0 0
      %566 = vmatprep.subr.bf16.mxu0 0
      %567 = vmatpush1.bf16.msra.mxu0 0
      %568 = vmatprep.subr.bf16.mxu0 0
      %569 = vmatpush1.bf16.msra.mxu0 0
      %570 = vmatprep.subr.bf16.mxu0 0
      %571 = vmatpush1.bf16.msra.mxu0 0
      %572 = vmatprep.subr.bf16.mxu0 0
      %573 = vmatpush1.bf16.msra.mxu0 0
      %574 = vmatprep.subr.bf16.mxu0 0
      %575 = vmatpush1.bf16.msra.mxu0 0
      %576 = vmatprep.subr.bf16.mxu0 0
      %577 = vmatpush1.bf16.msra.mxu0 0
      %578 = vmatprep.subr.bf16.mxu0 0
      %579 = vmatpush1.bf16.msra.mxu0 0
      %580 = vmatprep.subr.bf16.mxu0 0
      %581 = vmatpush1.bf16.msra.mxu0 0
      %582 = vmatprep.subr.bf16.mxu0 0
      %583 = vmatpush1.bf16.msra.mxu0 0
      %584 = vmatprep.subr.bf16.mxu0 0
      %585 = vmatpush1.bf16.msra.mxu0 0
      %586 = vmatprep.mubr.bf16.mxu0 0
      %587 = vmatmul.mubr.bf16.gmra.mrb[0].mxu0 %v549
      %v588 = vpop.f32.mrb[0].mxu0
      %v589 = vadd.f32 0.0, %v588
      %v590 = vpop.f32.mrb[0].mxu0
      %v591 = vpop.f32.mrb[0].mxu0
      %v592 = vadd.f32 0.0, %v591
      %v593 = vpop.f32.mrb[0].mxu0
      %594 = vdwg.mxu0
      %v595 = vadd.f32 %v537, %v589
      %v596 = vadd.f32 %v538, %v592
      %s597 = sadd.s32 %s218, 2
      %s598 = smul.u32 %s597, 3
      %s599 = smul.addr %s598, 4
      %s600 = scalar_lea.vmem %s197, %s599
      %v601 = vld [vmem:[%s600] sm:$0xf]
      %v602 = vld [vmem:[%s600 + $0x4] sm:$0xf]
      %s603 = scalar_lea.vmem %s1, 12
      %v604 = vld [vmem:[%s603] sm:$0x3]
      %v607 = vunpack.c.l.b16 %v601
      %v608 = vunpack.c.l.b16 %v602
      %v609 = vpack.c.b16 %v608, %v607
      %v611 = vsel %vm249, %v609, 0
      %v614 = vsel %vm253, %v604, 0
      %616 = vmatprep.subr.bf16.mxu0 0
      %617 = vmatpush1.bf16.msra.mxu0 %v614
      %618 = vmatprep.subr.bf16.mxu0 0
      %619 = vmatpush1.bf16.msra.mxu0 0
      %620 = vmatprep.subr.bf16.mxu0 0
      %621 = vmatpush1.bf16.msra.mxu0 0
      %622 = vmatprep.subr.bf16.mxu0 0
      %623 = vmatpush1.bf16.msra.mxu0 0
      %624 = vmatprep.subr.bf16.mxu0 0
      %625 = vmatpush1.bf16.msra.mxu0 0
      %626 = vmatprep.subr.bf16.mxu0 0
      %627 = vmatpush1.bf16.msra.mxu0 0
      %628 = vmatprep.subr.bf16.mxu0 0
      %629 = vmatpush1.bf16.msra.mxu0 0
      %630 = vmatprep.subr.bf16.mxu0 0
      %631 = vmatpush1.bf16.msra.mxu0 0
      %632 = vmatprep.subr.bf16.mxu0 0
      %633 = vmatpush1.bf16.msra.mxu0 0
      %634 = vmatprep.subr.bf16.mxu0 0
      %635 = vmatpush1.bf16.msra.mxu0 0
      %636 = vmatprep.subr.bf16.mxu0 0
      %637 = vmatpush1.bf16.msra.mxu0 0
      %638 = vmatprep.subr.bf16.mxu0 0
      %639 = vmatpush1.bf16.msra.mxu0 0
      %640 = vmatprep.subr.bf16.mxu0 0
      %641 = vmatpush1.bf16.msra.mxu0 0
      %642 = vmatprep.subr.bf16.mxu0 0
      %643 = vmatpush1.bf16.msra.mxu0 0
      %644 = vmatprep.subr.bf16.mxu0 0
      %645 = vmatpush1.bf16.msra.mxu0 0
      %646 = vmatprep.subr.bf16.mxu0 0
      %647 = vmatpush1.bf16.msra.mxu0 0
      %648 = vmatprep.mubr.bf16.mxu0 0
      %649 = vmatmul.mubr.bf16.gmra.mrb[0].mxu0 %v611
      %v650 = vpop.f32.mrb[0].mxu0
      %v651 = vadd.f32 0.0, %v650
      %v652 = vpop.f32.mrb[0].mxu0
      %v653 = vpop.f32.mrb[0].mxu0
      %v654 = vadd.f32 0.0, %v653
      %v655 = vpop.f32.mrb[0].mxu0
      %656 = vdwg.mxu0
      %v657 = vadd.f32 %v595, %v651
      %v658 = vadd.f32 %v596, %v654
      %v659 = vld [vmem:[%s600] sm:$0xf]
      %v660 = vld [vmem:[%s600 + $0x4] sm:$0xf]
      %v661 = vld [vmem:[%s600 + $0x8] sm:$0x1]
      %s662 = scalar_lea.vmem %s1, 14
      %v663 = vld [vmem:[%s662] sm:$0x3]
      %v667 = vunpack.c.l.b16 %v659
      %v668 = vunpack.c.l.b16 %v660
      %v669 = vunpack.c.l.b16 %v661
      %v670 = vpack.c.b16 %v668, %v667
      %v671 = vpack.c.b16 %v669, %v669
      %v673 = vshrl.u32 %v670, 16
      %v675 = vshll.u32 %v670, 16
      %v677 = vrot.slane %v675, 1
      %v678 = vor.u32 %v673, %v677
      %v680 = vshll.u32 %v671, 16
      %v682 = vrot.slane %v680, 1
      %v683 = vsel %vm236, %v678, %v682
      %v685 = vsel %vm249, %v683, 0
      %v688 = vsel %vm253, %v663, 0
      %690 = vmatprep.subr.bf16.mxu0 0
      %691 = vmatpush1.bf16.msra.mxu0 %v688
      %692 = vmatprep.subr.bf16.mxu0 0
      %693 = vmatpush1.bf16.msra.mxu0 0
      %694 = vmatprep.subr.bf16.mxu0 0
      %695 = vmatpush1.bf16.msra.mxu0 0
      %696 = vmatprep.subr.bf16.mxu0 0
      %697 = vmatpush1.bf16.msra.mxu0 0
      %698 = vmatprep.subr.bf16.mxu0 0
      %699 = vmatpush1.bf16.msra.mxu0 0
      %700 = vmatprep.subr.bf16.mxu0 0
      %701 = vmatpush1.bf16.msra.mxu0 0
      %702 = vmatprep.subr.bf16.mxu0 0
      %703 = vmatpush1.bf16.msra.mxu0 0
      %704 = vmatprep.subr.bf16.mxu0 0
      %705 = vmatpush1.bf16.msra.mxu0 0
      %706 = vmatprep.subr.bf16.mxu0 0
      %707 = vmatpush1.bf16.msra.mxu0 0
      %708 = vmatprep.subr.bf16.mxu0 0
      %709 = vmatpush1.bf16.msra.mxu0 0
      %710 = vmatprep.subr.bf16.mxu0 0
      %711 = vmatpush1.bf16.msra.mxu0 0
      %712 = vmatprep.subr.bf16.mxu0 0
      %713 = vmatpush1.bf16.msra.mxu0 0
      %714 = vmatprep.subr.bf16.mxu0 0
      %715 = vmatpush1.bf16.msra.mxu0 0
      %716 = vmatprep.subr.bf16.mxu0 0
      %717 = vmatpush1.bf16.msra.mxu0 0
      %718 = vmatprep.subr.bf16.mxu0 0
      %719 = vmatpush1.bf16.msra.mxu0 0
      %720 = vmatprep.subr.bf16.mxu0 0
      %721 = vmatpush1.bf16.msra.mxu0 0
      %722 = vmatprep.mubr.bf16.mxu0 0
      %723 = vmatmul.mubr.bf16.gmra.mrb[0].mxu0 %v685
      %v724 = vpop.f32.mrb[0].mxu0
      %v725 = vadd.f32 0.0, %v724
      %v726 = vpop.f32.mrb[0].mxu0
      %v727 = vpop.f32.mrb[0].mxu0
      %v728 = vadd.f32 0.0, %v727
      %v729 = vpop.f32.mrb[0].mxu0
      %730 = vdwg.mxu0
      %v731 = vadd.f32 %v657, %v725
      %v732 = vadd.f32 %v658, %v728
      %v733 = vld [vmem:[%s600] sm:$0xe]
      %s734 = scalar_lea.vmem %s1, 16
      %v735 = vld [vmem:[%s734] sm:$0x3]
      %v737 = vunpack.c.l.b16 %v733
      %v738 = vpack.c.b16 %v668, %v737
      %v739 = vrot.slane %v738, 1
      %v740 = vrot.slane %v671, 1
      %v741 = vsel %vm350, %v739, %v740
      %v743 = vsel %vm249, %v741, 0
      %v746 = vsel %vm253, %v735, 0
      %748 = vmatprep.subr.bf16.mxu0 0
      %749 = vmatpush1.bf16.msra.mxu0 %v746
      %750 = vmatprep.subr.bf16.mxu0 0
      %751 = vmatpush1.bf16.msra.mxu0 0
      %752 = vmatprep.subr.bf16.mxu0 0
      %753 = vmatpush1.bf16.msra.mxu0 0
      %754 = vmatprep.subr.bf16.mxu0 0
      %755 = vmatpush1.bf16.msra.mxu0 0
      %756 = vmatprep.subr.bf16.mxu0 0
      %757 = vmatpush1.bf16.msra.mxu0 0
      %758 = vmatprep.subr.bf16.mxu0 0
      %759 = vmatpush1.bf16.msra.mxu0 0
      %760 = vmatprep.subr.bf16.mxu0 0
      %761 = vmatpush1.bf16.msra.mxu0 0
      %762 = vmatprep.subr.bf16.mxu0 0
      %763 = vmatpush1.bf16.msra.mxu0 0
      %764 = vmatprep.subr.bf16.mxu0 0
      %765 = vmatpush1.bf16.msra.mxu0 0
      %766 = vmatprep.subr.bf16.mxu0 0
      %767 = vmatpush1.bf16.msra.mxu0 0
      %768 = vmatprep.subr.bf16.mxu0 0
      %769 = vmatpush1.bf16.msra.mxu0 0
      %770 = vmatprep.subr.bf16.mxu0 0
      %771 = vmatpush1.bf16.msra.mxu0 0
      %772 = vmatprep.subr.bf16.mxu0 0
      %773 = vmatpush1.bf16.msra.mxu0 0
      %774 = vmatprep.subr.bf16.mxu0 0
      %775 = vmatpush1.bf16.msra.mxu0 0
      %776 = vmatprep.subr.bf16.mxu0 0
      %777 = vmatpush1.bf16.msra.mxu0 0
      %778 = vmatprep.subr.bf16.mxu0 0
      %779 = vmatpush1.bf16.msra.mxu0 0
      %780 = vmatprep.mubr.bf16.mxu0 0
      %781 = vmatmul.mubr.bf16.gmra.mrb[0].mxu0 %v743
      %v782 = vpop.f32.mrb[0].mxu0
      %v783 = vadd.f32 0.0, %v782
      %v784 = vpop.f32.mrb[0].mxu0
      %v785 = vpop.f32.mrb[0].mxu0
      %v786 = vadd.f32 0.0, %v785
      %v787 = vpop.f32.mrb[0].mxu0
      %788 = vdwg.mxu0
      %v789 = vadd.f32 %v731, %v783
      %v790 = vadd.f32 %v732, %v786
      %v791 = vpack.c.bf16 %v790, %v789
      %v793 = vunpack.c.l.b16 %v791
      %v794 = vunpack.c.h.b16 %v791
      %v795 = vpack.c.b16 %v793, %v793
      %v796 = vpack.c.b16 %v794, %v794
      %799 = vst [vmem:[%s207] sm:$0xf] %v795
      %800 = vst [vmem:[%s207 + $0x4] sm:$0xf] %v796
      %p801 = scmp.lt.s32.totalorder %s218, 16
      %s802 = scalar_select %p801, 1, 0
      %s803 = scvt.s32.f32 %s802
      %v804 = vadd.f32 %v789, %v790
      %v805 = vrot.slane %v804, 4
      %v806 = vadd.f32 %v804, %v805
      %v807 = vrot.slane %v806, 2
      %v808 = vadd.f32 %v806, %v807
      %v809 = vrot.slane %v808, 1
      %v810 = vadd.f32 %v808, %v809
      %v811 = vstv %s803
      %v812 = vmul.f32 %v811, %v810
      %v813 = vadd.f32 %v812, 0.0
      %v814 = vmul.f32 %v789, %v789
      %v815 = vmul.f32 %v790, %v790
      %v816 = vadd.f32 %v814, %v815
      %v817 = vrot.slane %v816, 4
      %v818 = vadd.f32 %v816, %v817
      %v819 = vrot.slane %v818, 2
      %v820 = vadd.f32 %v818, %v819
      %v821 = vrot.slane %v820, 1
      %v822 = vadd.f32 %v820, %v821
      %v823 = vmul.f32 %v811, %v822
      %v824 = vadd.f32 %v823, 0.0
      %v825 = vld [vmem:[%s406] sm:$0xf]
      %v826 = vld [vmem:[%s406 + $0x4] sm:$0xf]
      %v827 = vld [vmem:[%s1] sm:$0x3]
      %v828 = vld [vmem:[%s406 + $0x8] sm:$0x1]
      %v829 = vld [vmem:[%s226] sm:$0x3]
      %v833 = vunpack.c.l.b16 %v825
      %v834 = vunpack.c.l.b16 %v826
      %v835 = vunpack.c.l.b16 %v828
      %v836 = vpack.c.b16 %v834, %v833
      %v837 = vpack.c.b16 %v835, %v835
      %v839 = vshrl.u32 %v836, 16
      %v841 = vshll.u32 %v836, 16
      %v843 = vrot.slane %v841, 1
      %v844 = vor.u32 %v839, %v843
      %v846 = vshll.u32 %v837, 16
      %v848 = vrot.slane %v846, 1
      %v849 = vsel %vm236, %v844, %v848
      %v851 = vsel %vm249, %v849, 0
      %v854 = vsel %vm253, %v829, 0
      %856 = vmatprep.subr.bf16.mxu0 0
      %857 = vmatpush1.bf16.msra.mxu0 %v854
      %858 = vmatprep.subr.bf16.mxu0 0
      %859 = vmatpush1.bf16.msra.mxu0 0
      %860 = vmatprep.subr.bf16.mxu0 0
      %861 = vmatpush1.bf16.msra.mxu0 0
      %862 = vmatprep.subr.bf16.mxu0 0
      %863 = vmatpush1.bf16.msra.mxu0 0
      %864 = vmatprep.subr.bf16.mxu0 0
      %865 = vmatpush1.bf16.msra.mxu0 0
      %866 = vmatprep.subr.bf16.mxu0 0
      %867 = vmatpush1.bf16.msra.mxu0 0
      %868 = vmatprep.subr.bf16.mxu0 0
      %869 = vmatpush1.bf16.msra.mxu0 0
      %870 = vmatprep.subr.bf16.mxu0 0
      %871 = vmatpush1.bf16.msra.mxu0 0
      %872 = vmatprep.subr.bf16.mxu0 0
      %873 = vmatpush1.bf16.msra.mxu0 0
      %874 = vmatprep.subr.bf16.mxu0 0
      %875 = vmatpush1.bf16.msra.mxu0 0
      %876 = vmatprep.subr.bf16.mxu0 0
      %877 = vmatpush1.bf16.msra.mxu0 0
      %878 = vmatprep.subr.bf16.mxu0 0
      %879 = vmatpush1.bf16.msra.mxu0 0
      %880 = vmatprep.subr.bf16.mxu0 0
      %881 = vmatpush1.bf16.msra.mxu0 0
      %882 = vmatprep.subr.bf16.mxu0 0
      %883 = vmatpush1.bf16.msra.mxu0 0
      %884 = vmatprep.subr.bf16.mxu0 0
      %885 = vmatpush1.bf16.msra.mxu0 0
      %886 = vmatprep.subr.bf16.mxu0 0
      %887 = vmatpush1.bf16.msra.mxu0 0
      %888 = vmatprep.mubr.bf16.mxu0 0
      %889 = vmatmul.mubr.bf16.gmra.mrb[0].mxu0 %v851
      %v890 = vpop.f32.mrb[0].mxu0
      %v891 = vadd.f32 0.0, %v890
      %v892 = vpop.f32.mrb[0].mxu0
      %v893 = vpop.f32.mrb[0].mxu0
      %v894 = vadd.f32 0.0, %v893
      %v895 = vpop.f32.mrb[0].mxu0
      %896 = vdwg.mxu0
      %v897 = vsel %vm249, %v836, 0
      %v900 = vsel %vm253, %v827, 0
      %902 = vmatprep.subr.bf16.mxu0 0
      %903 = vmatpush1.bf16.msra.mxu0 %v900
      %904 = vmatprep.subr.bf16.mxu0 0
      %905 = vmatpush1.bf16.msra.mxu0 0
      %906 = vmatprep.subr.bf16.mxu0 0
      %907 = vmatpush1.bf16.msra.mxu0 0
      %908 = vmatprep.subr.bf16.mxu0 0
      %909 = vmatpush1.bf16.msra.mxu0 0
      %910 = vmatprep.subr.bf16.mxu0 0
      %911 = vmatpush1.bf16.msra.mxu0 0
      %912 = vmatprep.subr.bf16.mxu0 0
      %913 = vmatpush1.bf16.msra.mxu0 0
      %914 = vmatprep.subr.bf16.mxu0 0
      %915 = vmatpush1.bf16.msra.mxu0 0
      %916 = vmatprep.subr.bf16.mxu0 0
      %917 = vmatpush1.bf16.msra.mxu0 0
      %918 = vmatprep.subr.bf16.mxu0 0
      %919 = vmatpush1.bf16.msra.mxu0 0
      %920 = vmatprep.subr.bf16.mxu0 0
      %921 = vmatpush1.bf16.msra.mxu0 0
      %922 = vmatprep.subr.bf16.mxu0 0
      %923 = vmatpush1.bf16.msra.mxu0 0
      %924 = vmatprep.subr.bf16.mxu0 0
      %925 = vmatpush1.bf16.msra.mxu0 0
      %926 = vmatprep.subr.bf16.mxu0 0
      %927 = vmatpush1.bf16.msra.mxu0 0
      %928 = vmatprep.subr.bf16.mxu0 0
      %929 = vmatpush1.bf16.msra.mxu0 0
      %930 = vmatprep.subr.bf16.mxu0 0
      %931 = vmatpush1.bf16.msra.mxu0 0
      %932 = vmatprep.subr.bf16.mxu0 0
      %933 = vmatpush1.bf16.msra.mxu0 0
      %934 = vmatprep.mubr.bf16.mxu0 0
      %935 = vmatmul.mubr.bf16.gmra.mrb[0].mxu0 %v897
      %v936 = vpop.f32.mrb[0].mxu0
      %v937 = vadd.f32 %v891, %v936
      %v938 = vpop.f32.mrb[0].mxu0
      %v939 = vpop.f32.mrb[0].mxu0
      %v940 = vadd.f32 %v894, %v939
      %v941 = vpop.f32.mrb[0].mxu0
      %942 = vdwg.mxu0
      %v943 = vld [vmem:[%s406] sm:$0xe]
      %v944 = vld [vmem:[%s345] sm:$0x3]
      %v946 = vunpack.c.l.b16 %v943
      %v947 = vpack.c.b16 %v834, %v946
      %v948 = vrot.slane %v947, 1
      %v949 = vrot.slane %v837, 1
      %v950 = vsel %vm350, %v948, %v949
      %v952 = vsel %vm249, %v950, 0
      %v955 = vsel %vm253, %v944, 0
      %957 = vmatprep.subr.bf16.mxu0 0
      %958 = vmatpush1.bf16.msra.mxu0 %v955
      %959 = vmatprep.subr.bf16.mxu0 0
      %960 = vmatpush1.bf16.msra.mxu0 0
      %961 = vmatprep.subr.bf16.mxu0 0
      %962 = vmatpush1.bf16.msra.mxu0 0
      %963 = vmatprep.subr.bf16.mxu0 0
      %964 = vmatpush1.bf16.msra.mxu0 0
      %965 = vmatprep.subr.bf16.mxu0 0
      %966 = vmatpush1.bf16.msra.mxu0 0
      %967 = vmatprep.subr.bf16.mxu0 0
      %968 = vmatpush1.bf16.msra.mxu0 0
      %969 = vmatprep.subr.bf16.mxu0 0
      %970 = vmatpush1.bf16.msra.mxu0 0
      %971 = vmatprep.subr.bf16.mxu0 0
      %972 = vmatpush1.bf16.msra.mxu0 0
      %973 = vmatprep.subr.bf16.mxu0 0
      %974 = vmatpush1.bf16.msra.mxu0 0
      %975 = vmatprep.subr.bf16.mxu0 0
      %976 = vmatpush1.bf16.msra.mxu0 0
      %977 = vmatprep.subr.bf16.mxu0 0
      %978 = vmatpush1.bf16.msra.mxu0 0
      %979 = vmatprep.subr.bf16.mxu0 0
      %980 = vmatpush1.bf16.msra.mxu0 0
      %981 = vmatprep.subr.bf16.mxu0 0
      %982 = vmatpush1.bf16.msra.mxu0 0
      %983 = vmatprep.subr.bf16.mxu0 0
      %984 = vmatpush1.bf16.msra.mxu0 0
      %985 = vmatprep.subr.bf16.mxu0 0
      %986 = vmatpush1.bf16.msra.mxu0 0
      %987 = vmatprep.subr.bf16.mxu0 0
      %988 = vmatpush1.bf16.msra.mxu0 0
      %989 = vmatprep.mubr.bf16.mxu0 0
      %990 = vmatmul.mubr.bf16.gmra.mrb[0].mxu0 %v952
      %v991 = vpop.f32.mrb[0].mxu0
      %v992 = vadd.f32 0.0, %v991
      %v993 = vpop.f32.mrb[0].mxu0
      %v994 = vpop.f32.mrb[0].mxu0
      %v995 = vadd.f32 0.0, %v994
      %v996 = vpop.f32.mrb[0].mxu0
      %997 = vdwg.mxu0
      %v998 = vadd.f32 %v937, %v992
      %v999 = vadd.f32 %v940, %v995
      %v1000 = vld [vmem:[%s600] sm:$0xf]
      %v1001 = vld [vmem:[%s600 + $0x4] sm:$0xf]
      %v1002 = vld [vmem:[%s409] sm:$0x3]
      %v1005 = vunpack.c.l.b16 %v1000
      %v1006 = vunpack.c.l.b16 %v1001
      %v1007 = vpack.c.b16 %v1006, %v1005
      %v1009 = vsel %vm249, %v1007, 0
      %v1012 = vsel %vm253, %v1002, 0
      %1014 = vmatprep.subr.bf16.mxu0 0
      %1015 = vmatpush1.bf16.msra.mxu0 %v1012
      %1016 = vmatprep.subr.bf16.mxu0 0
      %1017 = vmatpush1.bf16.msra.mxu0 0
      %1018 = vmatprep.subr.bf16.mxu0 0
      %1019 = vmatpush1.bf16.msra.mxu0 0
      %1020 = vmatprep.subr.bf16.mxu0 0
      %1021 = vmatpush1.bf16.msra.mxu0 0
      %1022 = vmatprep.subr.bf16.mxu0 0
      %1023 = vmatpush1.bf16.msra.mxu0 0
      %1024 = vmatprep.subr.bf16.mxu0 0
      %1025 = vmatpush1.bf16.msra.mxu0 0
      %1026 = vmatprep.subr.bf16.mxu0 0
      %1027 = vmatpush1.bf16.msra.mxu0 0
      %1028 = vmatprep.subr.bf16.mxu0 0
      %1029 = vmatpush1.bf16.msra.mxu0 0
      %1030 = vmatprep.subr.bf16.mxu0 0
      %1031 = vmatpush1.bf16.msra.mxu0 0
      %1032 = vmatprep.subr.bf16.mxu0 0
      %1033 = vmatpush1.bf16.msra.mxu0 0
      %1034 = vmatprep.subr.bf16.mxu0 0
      %1035 = vmatpush1.bf16.msra.mxu0 0
      %1036 = vmatprep.subr.bf16.mxu0 0
      %1037 = vmatpush1.bf16.msra.mxu0 0
      %1038 = vmatprep.subr.bf16.mxu0 0
      %1039 = vmatpush1.bf16.msra.mxu0 0
      %1040 = vmatprep.subr.bf16.mxu0 0
      %1041 = vmatpush1.bf16.msra.mxu0 0
      %1042 = vmatprep.subr.bf16.mxu0 0
      %1043 = vmatpush1.bf16.msra.mxu0 0
      %1044 = vmatprep.subr.bf16.mxu0 0
      %1045 = vmatpush1.bf16.msra.mxu0 0
      %1046 = vmatprep.mubr.bf16.mxu0 0
      %1047 = vmatmul.mubr.bf16.gmra.mrb[0].mxu0 %v1009
      %v1048 = vpop.f32.mrb[0].mxu0
      %v1049 = vadd.f32 0.0, %v1048
      %v1050 = vpop.f32.mrb[0].mxu0
      %v1051 = vpop.f32.mrb[0].mxu0
      %v1052 = vadd.f32 0.0, %v1051
      %v1053 = vpop.f32.mrb[0].mxu0
      %1054 = vdwg.mxu0
      %v1055 = vadd.f32 %v998, %v1049
      %v1056 = vadd.f32 %v999, %v1052
      %v1057 = vld [vmem:[%s600] sm:$0xf]
      %v1058 = vld [vmem:[%s600 + $0x4] sm:$0xf]
      %v1059 = vld [vmem:[%s600 + $0x8] sm:$0x1]
      %v1060 = vld [vmem:[%s468] sm:$0x3]
      %v1064 = vunpack.c.l.b16 %v1057
      %v1065 = vunpack.c.l.b16 %v1058
      %v1066 = vunpack.c.l.b16 %v1059
      %v1067 = vpack.c.b16 %v1065, %v1064
      %v1068 = vpack.c.b16 %v1066, %v1066
      %v1070 = vshrl.u32 %v1067, 16
      %v1072 = vshll.u32 %v1067, 16
      %v1074 = vrot.slane %v1072, 1
      %v1075 = vor.u32 %v1070, %v1074
      %v1077 = vshll.u32 %v1068, 16
      %v1079 = vrot.slane %v1077, 1
      %v1080 = vsel %vm236, %v1075, %v1079
      %v1082 = vsel %vm249, %v1080, 0
      %v1085 = vsel %vm253, %v1060, 0
      %1087 = vmatprep.subr.bf16.mxu0 0
      %1088 = vmatpush1.bf16.msra.mxu0 %v1085
      %1089 = vmatprep.subr.bf16.mxu0 0
      %1090 = vmatpush1.bf16.msra.mxu0 0
      %1091 = vmatprep.subr.bf16.mxu0 0
      %1092 = vmatpush1.bf16.msra.mxu0 0
      %1093 = vmatprep.subr.bf16.mxu0 0
      %1094 = vmatpush1.bf16.msra.mxu0 0
      %1095 = vmatprep.subr.bf16.mxu0 0
      %1096 = vmatpush1.bf16.msra.mxu0 0
      %1097 = vmatprep.subr.bf16.mxu0 0
      %1098 = vmatpush1.bf16.msra.mxu0 0
      %1099 = vmatprep.subr.bf16.mxu0 0
      %1100 = vmatpush1.bf16.msra.mxu0 0
      %1101 = vmatprep.subr.bf16.mxu0 0
      %1102 = vmatpush1.bf16.msra.mxu0 0
      %1103 = vmatprep.subr.bf16.mxu0 0
      %1104 = vmatpush1.bf16.msra.mxu0 0
      %1105 = vmatprep.subr.bf16.mxu0 0
      %1106 = vmatpush1.bf16.msra.mxu0 0
      %1107 = vmatprep.subr.bf16.mxu0 0
      %1108 = vmatpush1.bf16.msra.mxu0 0
      %1109 = vmatprep.subr.bf16.mxu0 0
      %1110 = vmatpush1.bf16.msra.mxu0 0
      %1111 = vmatprep.subr.bf16.mxu0 0
      %1112 = vmatpush1.bf16.msra.mxu0 0
      %1113 = vmatprep.subr.bf16.mxu0 0
      %1114 = vmatpush1.bf16.msra.mxu0 0
      %1115 = vmatprep.subr.bf16.mxu0 0
      %1116 = vmatpush1.bf16.msra.mxu0 0
      %1117 = vmatprep.subr.bf16.mxu0 0
      %1118 = vmatpush1.bf16.msra.mxu0 0
      %1119 = vmatprep.mubr.bf16.mxu0 0
      %1120 = vmatmul.mubr.bf16.gmra.mrb[0].mxu0 %v1082
      %v1121 = vpop.f32.mrb[0].mxu0
      %v1122 = vadd.f32 0.0, %v1121
      %v1123 = vpop.f32.mrb[0].mxu0
      %v1124 = vpop.f32.mrb[0].mxu0
      %v1125 = vadd.f32 0.0, %v1124
      %v1126 = vpop.f32.mrb[0].mxu0
      %1127 = vdwg.mxu0
      %v1128 = vadd.f32 %v1055, %v1122
      %v1129 = vadd.f32 %v1056, %v1125
      %v1130 = vld [vmem:[%s600] sm:$0xe]
      %v1131 = vld [vmem:[%s540] sm:$0x3]
      %v1133 = vunpack.c.l.b16 %v1130
      %v1134 = vpack.c.b16 %v1065, %v1133
      %v1135 = vrot.slane %v1134, 1
      %v1136 = vrot.slane %v1068, 1
      %v1137 = vsel %vm350, %v1135, %v1136
      %v1139 = vsel %vm249, %v1137, 0
      %v1142 = vsel %vm253, %v1131, 0
      %1144 = vmatprep.subr.bf16.mxu0 0
      %1145 = vmatpush1.bf16.msra.mxu0 %v1142
      %1146 = vmatprep.subr.bf16.mxu0 0
      %1147 = vmatpush1.bf16.msra.mxu0 0
      %1148 = vmatprep.subr.bf16.mxu0 0
      %1149 = vmatpush1.bf16.msra.mxu0 0
      %1150 = vmatprep.subr.bf16.mxu0 0
      %1151 = vmatpush1.bf16.msra.mxu0 0
      %1152 = vmatprep.subr.bf16.mxu0 0
      %1153 = vmatpush1.bf16.msra.mxu0 0
      %1154 = vmatprep.subr.bf16.mxu0 0
      %1155 = vmatpush1.bf16.msra.mxu0 0
      %1156 = vmatprep.subr.bf16.mxu0 0
      %1157 = vmatpush1.bf16.msra.mxu0 0
      %1158 = vmatprep.subr.bf16.mxu0 0
      %1159 = vmatpush1.bf16.msra.mxu0 0
      %1160 = vmatprep.subr.bf16.mxu0 0
      %1161 = vmatpush1.bf16.msra.mxu0 0
      %1162 = vmatprep.subr.bf16.mxu0 0
      %1163 = vmatpush1.bf16.msra.mxu0 0
      %1164 = vmatprep.subr.bf16.mxu0 0
      %1165 = vmatpush1.bf16.msra.mxu0 0
      %1166 = vmatprep.subr.bf16.mxu0 0
      %1167 = vmatpush1.bf16.msra.mxu0 0
      %1168 = vmatprep.subr.bf16.mxu0 0
      %1169 = vmatpush1.bf16.msra.mxu0 0
      %1170 = vmatprep.subr.bf16.mxu0 0
      %1171 = vmatpush1.bf16.msra.mxu0 0
      %1172 = vmatprep.subr.bf16.mxu0 0
      %1173 = vmatpush1.bf16.msra.mxu0 0
      %1174 = vmatprep.subr.bf16.mxu0 0
      %1175 = vmatpush1.bf16.msra.mxu0 0
      %1176 = vmatprep.mubr.bf16.mxu0 0
      %1177 = vmatmul.mubr.bf16.gmra.mrb[0].mxu0 %v1139
      %v1178 = vpop.f32.mrb[0].mxu0
      %v1179 = vadd.f32 0.0, %v1178
      %v1180 = vpop.f32.mrb[0].mxu0
      %v1181 = vpop.f32.mrb[0].mxu0
      %v1182 = vadd.f32 0.0, %v1181
      %v1183 = vpop.f32.mrb[0].mxu0
      %1184 = vdwg.mxu0
      %v1185 = vadd.f32 %v1128, %v1179
      %v1186 = vadd.f32 %v1129, %v1182
      %s1187 = sadd.s32 %s218, 3
      %s1188 = smul.u32 %s1187, 3
      %s1189 = smul.addr %s1188, 4
      %s1190 = scalar_lea.vmem %s197, %s1189
      %v1191 = vld [vmem:[%s1190] sm:$0xf]
      %v1192 = vld [vmem:[%s1190 + $0x4] sm:$0xf]
      %v1193 = vld [vmem:[%s603] sm:$0x3]
      %v1196 = vunpack.c.l.b16 %v1191
      %v1197 = vunpack.c.l.b16 %v1192
      %v1198 = vpack.c.b16 %v1197, %v1196
      %v1200 = vsel %vm249, %v1198, 0
      %v1203 = vsel %vm253, %v1193, 0
      %1205 = vmatprep.subr.bf16.mxu0 0
      %1206 = vmatpush1.bf16.msra.mxu0 %v1203
      %1207 = vmatprep.subr.bf16.mxu0 0
      %1208 = vmatpush1.bf16.msra.mxu0 0
      %1209 = vmatprep.subr.bf16.mxu0 0
      %1210 = vmatpush1.bf16.msra.mxu0 0
      %1211 = vmatprep.subr.bf16.mxu0 0
      %1212 = vmatpush1.bf16.msra.mxu0 0
      %1213 = vmatprep.subr.bf16.mxu0 0
      %1214 = vmatpush1.bf16.msra.mxu0 0
      %1215 = vmatprep.subr.bf16.mxu0 0
      %1216 = vmatpush1.bf16.msra.mxu0 0
      %1217 = vmatprep.subr.bf16.mxu0 0
      %1218 = vmatpush1.bf16.msra.mxu0 0
      %1219 = vmatprep.subr.bf16.mxu0 0
      %1220 = vmatpush1.bf16.msra.mxu0 0
      %1221 = vmatprep.subr.bf16.mxu0 0
      %1222 = vmatpush1.bf16.msra.mxu0 0
      %1223 = vmatprep.subr.bf16.mxu0 0
      %1224 = vmatpush1.bf16.msra.mxu0 0
      %1225 = vmatprep.subr.bf16.mxu0 0
      %1226 = vmatpush1.bf16.msra.mxu0 0
      %1227 = vmatprep.subr.bf16.mxu0 0
      %1228 = vmatpush1.bf16.msra.mxu0 0
      %1229 = vmatprep.subr.bf16.mxu0 0
      %1230 = vmatpush1.bf16.msra.mxu0 0
      %1231 = vmatprep.subr.bf16.mxu0 0
      %1232 = vmatpush1.bf16.msra.mxu0 0
      %1233 = vmatprep.subr.bf16.mxu0 0
      %1234 = vmatpush1.bf16.msra.mxu0 0
      %1235 = vmatprep.subr.bf16.mxu0 0
      %1236 = vmatpush1.bf16.msra.mxu0 0
      %1237 = vmatprep.mubr.bf16.mxu0 0
      %1238 = vmatmul.mubr.bf16.gmra.mrb[0].mxu0 %v1200
      %v1239 = vpop.f32.mrb[0].mxu0
      %v1240 = vadd.f32 0.0, %v1239
      %v1241 = vpop.f32.mrb[0].mxu0
      %v1242 = vpop.f32.mrb[0].mxu0
      %v1243 = vadd.f32 0.0, %v1242
      %v1244 = vpop.f32.mrb[0].mxu0
      %1245 = vdwg.mxu0
      %v1246 = vadd.f32 %v1185, %v1240
      %v1247 = vadd.f32 %v1186, %v1243
      %v1248 = vld [vmem:[%s1190] sm:$0xf]
      %v1249 = vld [vmem:[%s1190 + $0x4] sm:$0xf]
      %v1250 = vld [vmem:[%s1190 + $0x8] sm:$0x1]
      %v1251 = vld [vmem:[%s662] sm:$0x3]
      %v1255 = vunpack.c.l.b16 %v1248
      %v1256 = vunpack.c.l.b16 %v1249
      %v1257 = vunpack.c.l.b16 %v1250
      %v1258 = vpack.c.b16 %v1256, %v1255
      %v1259 = vpack.c.b16 %v1257, %v1257
      %v1261 = vshrl.u32 %v1258, 16
      %v1263 = vshll.u32 %v1258, 16
      %v1265 = vrot.slane %v1263, 1
      %v1266 = vor.u32 %v1261, %v1265
      %v1268 = vshll.u32 %v1259, 16
      %v1270 = vrot.slane %v1268, 1
      %v1271 = vsel %vm236, %v1266, %v1270
      %v1273 = vsel %vm249, %v1271, 0
      %v1276 = vsel %vm253, %v1251, 0
      %1278 = vmatprep.subr.bf16.mxu0 0
      %1279 = vmatpush1.bf16.msra.mxu0 %v1276
      %1280 = vmatprep.subr.bf16.mxu0 0
      %1281 = vmatpush1.bf16.msra.mxu0 0
      %1282 = vmatprep.subr.bf16.mxu0 0
      %1283 = vmatpush1.bf16.msra.mxu0 0
      %1284 = vmatprep.subr.bf16.mxu0 0
      %1285 = vmatpush1.bf16.msra.mxu0 0
      %1286 = vmatprep.subr.bf16.mxu0 0
      %1287 = vmatpush1.bf16.msra.mxu0 0
      %1288 = vmatprep.subr.bf16.mxu0 0
      %1289 = vmatpush1.bf16.msra.mxu0 0
      %1290 = vmatprep.subr.bf16.mxu0 0
      %1291 = vmatpush1.bf16.msra.mxu0 0
      %1292 = vmatprep.subr.bf16.mxu0 0
      %1293 = vmatpush1.bf16.msra.mxu0 0
      %1294 = vmatprep.subr.bf16.mxu0 0
      %1295 = vmatpush1.bf16.msra.mxu0 0
      %1296 = vmatprep.subr.bf16.mxu0 0
      %1297 = vmatpush1.bf16.msra.mxu0 0
      %1298 = vmatprep.subr.bf16.mxu0 0
      %1299 = vmatpush1.bf16.msra.mxu0 0
      %1300 = vmatprep.subr.bf16.mxu0 0
      %1301 = vmatpush1.bf16.msra.mxu0 0
      %1302 = vmatprep.subr.bf16.mxu0 0
      %1303 = vmatpush1.bf16.msra.mxu0 0
      %1304 = vmatprep.subr.bf16.mxu0 0
      %1305 = vmatpush1.bf16.msra.mxu0 0
      %1306 = vmatprep.subr.bf16.mxu0 0
      %1307 = vmatpush1.bf16.msra.mxu0 0
      %1308 = vmatprep.subr.bf16.mxu0 0
      %1309 = vmatpush1.bf16.msra.mxu0 0
      %1310 = vmatprep.mubr.bf16.mxu0 0
      %1311 = vmatmul.mubr.bf16.gmra.mrb[0].mxu0 %v1273
      %v1312 = vpop.f32.mrb[0].mxu0
      %v1313 = vadd.f32 0.0, %v1312
      %v1314 = vpop.f32.mrb[0].mxu0
      %v1315 = vpop.f32.mrb[0].mxu0
      %v1316 = vadd.f32 0.0, %v1315
      %v1317 = vpop.f32.mrb[0].mxu0
      %1318 = vdwg.mxu0
      %v1319 = vadd.f32 %v1246, %v1313
      %v1320 = vadd.f32 %v1247, %v1316
      %v1321 = vld [vmem:[%s1190] sm:$0xe]
      %v1322 = vld [vmem:[%s734] sm:$0x3]
      %v1324 = vunpack.c.l.b16 %v1321
      %v1325 = vpack.c.b16 %v1256, %v1324
      %v1326 = vrot.slane %v1325, 1
      %v1327 = vrot.slane %v1259, 1
      %v1328 = vsel %vm350, %v1326, %v1327
      %v1330 = vsel %vm249, %v1328, 0
      %v1333 = vsel %vm253, %v1322, 0
      %1335 = vmatprep.subr.bf16.mxu0 0
      %1336 = vmatpush1.bf16.msra.mxu0 %v1333
      %1337 = vmatprep.subr.bf16.mxu0 0
      %1338 = vmatpush1.bf16.msra.mxu0 0
      %1339 = vmatprep.subr.bf16.mxu0 0
      %1340 = vmatpush1.bf16.msra.mxu0 0
      %1341 = vmatprep.subr.bf16.mxu0 0
      %1342 = vmatpush1.bf16.msra.mxu0 0
      %1343 = vmatprep.subr.bf16.mxu0 0
      %1344 = vmatpush1.bf16.msra.mxu0 0
      %1345 = vmatprep.subr.bf16.mxu0 0
      %1346 = vmatpush1.bf16.msra.mxu0 0
      %1347 = vmatprep.subr.bf16.mxu0 0
      %1348 = vmatpush1.bf16.msra.mxu0 0
      %1349 = vmatprep.subr.bf16.mxu0 0
      %1350 = vmatpush1.bf16.msra.mxu0 0
      %1351 = vmatprep.subr.bf16.mxu0 0
      %1352 = vmatpush1.bf16.msra.mxu0 0
      %1353 = vmatprep.subr.bf16.mxu0 0
      %1354 = vmatpush1.bf16.msra.mxu0 0
      %1355 = vmatprep.subr.bf16.mxu0 0
      %1356 = vmatpush1.bf16.msra.mxu0 0
      %1357 = vmatprep.subr.bf16.mxu0 0
      %1358 = vmatpush1.bf16.msra.mxu0 0
      %1359 = vmatprep.subr.bf16.mxu0 0
      %1360 = vmatpush1.bf16.msra.mxu0 0
      %1361 = vmatprep.subr.bf16.mxu0 0
      %1362 = vmatpush1.bf16.msra.mxu0 0
      %1363 = vmatprep.subr.bf16.mxu0 0
      %1364 = vmatpush1.bf16.msra.mxu0 0
      %1365 = vmatprep.subr.bf16.mxu0 0
      %1366 = vmatpush1.bf16.msra.mxu0 0
      %1367 = vmatprep.mubr.bf16.mxu0 0
      %1368 = vmatmul.mubr.bf16.gmra.mrb[0].mxu0 %v1330
      %v1369 = vpop.f32.mrb[0].mxu0
      %v1370 = vadd.f32 0.0, %v1369
      %v1371 = vpop.f32.mrb[0].mxu0
      %v1372 = vpop.f32.mrb[0].mxu0
      %v1373 = vadd.f32 0.0, %v1372
      %v1374 = vpop.f32.mrb[0].mxu0
      %1375 = vdwg.mxu0
      %v1376 = vadd.f32 %v1319, %v1370
      %v1377 = vadd.f32 %v1320, %v1373
      %v1378 = vpack.c.bf16 %v1377, %v1376
      %v1380 = vunpack.c.l.b16 %v1378
      %v1381 = vunpack.c.h.b16 %v1378
      %v1382 = vpack.c.b16 %v1380, %v1380
      %v1383 = vpack.c.b16 %v1381, %v1381
      %s1386 = scalar_lea.vmem %s207, 8
      %1387 = vst [vmem:[%s1386] sm:$0xf] %v1382
      %1388 = vst [vmem:[%s1386 + $0x4] sm:$0xf] %v1383
      %p1389 = scmp.lt.s32.totalorder %s403, 16
      %s1390 = scalar_select %p1389, 1, 0
      %s1391 = scvt.s32.f32 %s1390
      %v1392 = vadd.f32 %v1376, %v1377
      %v1393 = vrot.slane %v1392, 4
      %v1394 = vadd.f32 %v1392, %v1393
      %v1395 = vrot.slane %v1394, 2
      %v1396 = vadd.f32 %v1394, %v1395
      %v1397 = vrot.slane %v1396, 1
      %v1398 = vadd.f32 %v1396, %v1397
      %v1399 = vstv %s1391
      %v1400 = vmul.f32 %v1399, %v1398
      %v1401 = vadd.f32 %v813, %v1400
      %v1402 = vmul.f32 %v1376, %v1376
      %v1403 = vmul.f32 %v1377, %v1377
      %v1404 = vadd.f32 %v1402, %v1403
      %v1405 = vrot.slane %v1404, 4
      %v1406 = vadd.f32 %v1404, %v1405
      %v1407 = vrot.slane %v1406, 2
      %v1408 = vadd.f32 %v1406, %v1407
      %v1409 = vrot.slane %v1408, 1
      %v1410 = vadd.f32 %v1408, %v1409
      %v1411 = vmul.f32 %v1399, %v1410
      %v1412 = vadd.f32 %v824, %v1411
      %v1413 = vld [vmem:[%s600] sm:$0xf]
      %v1414 = vld [vmem:[%s600 + $0x4] sm:$0xf]
      %v1415 = vld [vmem:[%s1] sm:$0x3]
      %v1416 = vld [vmem:[%s600 + $0x8] sm:$0x1]
      %v1417 = vld [vmem:[%s226] sm:$0x3]
      %v1421 = vunpack.c.l.b16 %v1413
      %v1422 = vunpack.c.l.b16 %v1414
      %v1423 = vunpack.c.l.b16 %v1416
      %v1424 = vpack.c.b16 %v1422, %v1421
      %v1425 = vpack.c.b16 %v1423, %v1423
      %v1427 = vshrl.u32 %v1424, 16
      %v1429 = vshll.u32 %v1424, 16
      %v1431 = vrot.slane %v1429, 1
      %v1432 = vor.u32 %v1427, %v1431
      %v1434 = vshll.u32 %v1425, 16
      %v1436 = vrot.slane %v1434, 1
      %v1437 = vsel %vm236, %v1432, %v1436
      %v1439 = vsel %vm249, %v1437, 0
      %v1442 = vsel %vm253, %v1417, 0
      %1444 = vmatprep.subr.bf16.mxu0 0
      %1445 = vmatpush1.bf16.msra.mxu0 %v1442
      %1446 = vmatprep.subr.bf16.mxu0 0
      %1447 = vmatpush1.bf16.msra.mxu0 0
      %1448 = vmatprep.subr.bf16.mxu0 0
      %1449 = vmatpush1.bf16.msra.mxu0 0
      %1450 = vmatprep.subr.bf16.mxu0 0
      %1451 = vmatpush1.bf16.msra.mxu0 0
      %1452 = vmatprep.subr.bf16.mxu0 0
      %1453 = vmatpush1.bf16.msra.mxu0 0
      %1454 = vmatprep.subr.bf16.mxu0 0
      %1455 = vmatpush1.bf16.msra.mxu0 0
      %1456 = vmatprep.subr.bf16.mxu0 0
      %1457 = vmatpush1.bf16.msra.mxu0 0
      %1458 = vmatprep.subr.bf16.mxu0 0
      %1459 = vmatpush1.bf16.msra.mxu0 0
      %1460 = vmatprep.subr.bf16.mxu0 0
      %1461 = vmatpush1.bf16.msra.mxu0 0
      %1462 = vmatprep.subr.bf16.mxu0 0
      %1463 = vmatpush1.bf16.msra.mxu0 0
      %1464 = vmatprep.subr.bf16.mxu0 0
      %1465 = vmatpush1.bf16.msra.mxu0 0
      %1466 = vmatprep.subr.bf16.mxu0 0
      %1467 = vmatpush1.bf16.msra.mxu0 0
      %1468 = vmatprep.subr.bf16.mxu0 0
      %1469 = vmatpush1.bf16.msra.mxu0 0
      %1470 = vmatprep.subr.bf16.mxu0 0
      %1471 = vmatpush1.bf16.msra.mxu0 0
      %1472 = vmatprep.subr.bf16.mxu0 0
      %1473 = vmatpush1.bf16.msra.mxu0 0
      %1474 = vmatprep.subr.bf16.mxu0 0
      %1475 = vmatpush1.bf16.msra.mxu0 0
      %1476 = vmatprep.mubr.bf16.mxu0 0
      %1477 = vmatmul.mubr.bf16.gmra.mrb[0].mxu0 %v1439
      %v1478 = vpop.f32.mrb[0].mxu0
      %v1479 = vadd.f32 0.0, %v1478
      %v1480 = vpop.f32.mrb[0].mxu0
      %v1481 = vpop.f32.mrb[0].mxu0
      %v1482 = vadd.f32 0.0, %v1481
      %v1483 = vpop.f32.mrb[0].mxu0
      %1484 = vdwg.mxu0
      %v1485 = vsel %vm249, %v1424, 0
      %v1488 = vsel %vm253, %v1415, 0
      %1490 = vmatprep.subr.bf16.mxu0 0
      %1491 = vmatpush1.bf16.msra.mxu0 %v1488
      %1492 = vmatprep.subr.bf16.mxu0 0
      %1493 = vmatpush1.bf16.msra.mxu0 0
      %1494 = vmatprep.subr.bf16.mxu0 0
      %1495 = vmatpush1.bf16.msra.mxu0 0
      %1496 = vmatprep.subr.bf16.mxu0 0
      %1497 = vmatpush1.bf16.msra.mxu0 0
      %1498 = vmatprep.subr.bf16.mxu0 0
      %1499 = vmatpush1.bf16.msra.mxu0 0
      %1500 = vmatprep.subr.bf16.mxu0 0
      %1501 = vmatpush1.bf16.msra.mxu0 0
      %1502 = vmatprep.subr.bf16.mxu0 0
      %1503 = vmatpush1.bf16.msra.mxu0 0
      %1504 = vmatprep.subr.bf16.mxu0 0
      %1505 = vmatpush1.bf16.msra.mxu0 0
      %1506 = vmatprep.subr.bf16.mxu0 0
      %1507 = vmatpush1.bf16.msra.mxu0 0
      %1508 = vmatprep.subr.bf16.mxu0 0
      %1509 = vmatpush1.bf16.msra.mxu0 0
      %1510 = vmatprep.subr.bf16.mxu0 0
      %1511 = vmatpush1.bf16.msra.mxu0 0
      %1512 = vmatprep.subr.bf16.mxu0 0
      %1513 = vmatpush1.bf16.msra.mxu0 0
      %1514 = vmatprep.subr.bf16.mxu0 0
      %1515 = vmatpush1.bf16.msra.mxu0 0
      %1516 = vmatprep.subr.bf16.mxu0 0
      %1517 = vmatpush1.bf16.msra.mxu0 0
      %1518 = vmatprep.subr.bf16.mxu0 0
      %1519 = vmatpush1.bf16.msra.mxu0 0
      %1520 = vmatprep.subr.bf16.mxu0 0
      %1521 = vmatpush1.bf16.msra.mxu0 0
      %1522 = vmatprep.mubr.bf16.mxu0 0
      %1523 = vmatmul.mubr.bf16.gmra.mrb[0].mxu0 %v1485
      %v1524 = vpop.f32.mrb[0].mxu0
      %v1525 = vadd.f32 %v1479, %v1524
      %v1526 = vpop.f32.mrb[0].mxu0
      %v1527 = vpop.f32.mrb[0].mxu0
      %v1528 = vadd.f32 %v1482, %v1527
      %v1529 = vpop.f32.mrb[0].mxu0
      %1530 = vdwg.mxu0
      %v1531 = vld [vmem:[%s600] sm:$0xe]
      %v1532 = vld [vmem:[%s345] sm:$0x3]
      %v1534 = vunpack.c.l.b16 %v1531
      %v1535 = vpack.c.b16 %v1422, %v1534
      %v1536 = vrot.slane %v1535, 1
      %v1537 = vrot.slane %v1425, 1
      %v1538 = vsel %vm350, %v1536, %v1537
      %v1540 = vsel %vm249, %v1538, 0
      %v1543 = vsel %vm253, %v1532, 0
      %1545 = vmatprep.subr.bf16.mxu0 0
      %1546 = vmatpush1.bf16.msra.mxu0 %v1543
      %1547 = vmatprep.subr.bf16.mxu0 0
      %1548 = vmatpush1.bf16.msra.mxu0 0
      %1549 = vmatprep.subr.bf16.mxu0 0
      %1550 = vmatpush1.bf16.msra.mxu0 0
      %1551 = vmatprep.subr.bf16.mxu0 0
      %1552 = vmatpush1.bf16.msra.mxu0 0
      %1553 = vmatprep.subr.bf16.mxu0 0
      %1554 = vmatpush1.bf16.msra.mxu0 0
      %1555 = vmatprep.subr.bf16.mxu0 0
      %1556 = vmatpush1.bf16.msra.mxu0 0
      %1557 = vmatprep.subr.bf16.mxu0 0
      %1558 = vmatpush1.bf16.msra.mxu0 0
      %1559 = vmatprep.subr.bf16.mxu0 0
      %1560 = vmatpush1.bf16.msra.mxu0 0
      %1561 = vmatprep.subr.bf16.mxu0 0
      %1562 = vmatpush1.bf16.msra.mxu0 0
      %1563 = vmatprep.subr.bf16.mxu0 0
      %1564 = vmatpush1.bf16.msra.mxu0 0
      %1565 = vmatprep.subr.bf16.mxu0 0
      %1566 = vmatpush1.bf16.msra.mxu0 0
      %1567 = vmatprep.subr.bf16.mxu0 0
      %1568 = vmatpush1.bf16.msra.mxu0 0
      %1569 = vmatprep.subr.bf16.mxu0 0
      %1570 = vmatpush1.bf16.msra.mxu0 0
      %1571 = vmatprep.subr.bf16.mxu0 0
      %1572 = vmatpush1.bf16.msra.mxu0 0
      %1573 = vmatprep.subr.bf16.mxu0 0
      %1574 = vmatpush1.bf16.msra.mxu0 0
      %1575 = vmatprep.subr.bf16.mxu0 0
      %1576 = vmatpush1.bf16.msra.mxu0 0
      %1577 = vmatprep.mubr.bf16.mxu0 0
      %1578 = vmatmul.mubr.bf16.gmra.mrb[0].mxu0 %v1540
      %v1579 = vpop.f32.mrb[0].mxu0
      %v1580 = vadd.f32 0.0, %v1579
      %v1581 = vpop.f32.mrb[0].mxu0
      %v1582 = vpop.f32.mrb[0].mxu0
      %v1583 = vadd.f32 0.0, %v1582
      %v1584 = vpop.f32.mrb[0].mxu0
      %1585 = vdwg.mxu0
      %v1586 = vadd.f32 %v1525, %v1580
      %v1587 = vadd.f32 %v1528, %v1583
      %v1588 = vld [vmem:[%s1190] sm:$0xf]
      %v1589 = vld [vmem:[%s1190 + $0x4] sm:$0xf]
      %v1590 = vld [vmem:[%s409] sm:$0x3]
      %v1593 = vunpack.c.l.b16 %v1588
      %v1594 = vunpack.c.l.b16 %v1589
      %v1595 = vpack.c.b16 %v1594, %v1593
      %v1597 = vsel %vm249, %v1595, 0
      %v1600 = vsel %vm253, %v1590, 0
      %1602 = vmatprep.subr.bf16.mxu0 0
      %1603 = vmatpush1.bf16.msra.mxu0 %v1600
      %1604 = vmatprep.subr.bf16.mxu0 0
      %1605 = vmatpush1.bf16.msra.mxu0 0
      %1606 = vmatprep.subr.bf16.mxu0 0
      %1607 = vmatpush1.bf16.msra.mxu0 0
      %1608 = vmatprep.subr.bf16.mxu0 0
      %1609 = vmatpush1.bf16.msra.mxu0 0
      %1610 = vmatprep.subr.bf16.mxu0 0
      %1611 = vmatpush1.bf16.msra.mxu0 0
      %1612 = vmatprep.subr.bf16.mxu0 0
      %1613 = vmatpush1.bf16.msra.mxu0 0
      %1614 = vmatprep.subr.bf16.mxu0 0
      %1615 = vmatpush1.bf16.msra.mxu0 0
      %1616 = vmatprep.subr.bf16.mxu0 0
      %1617 = vmatpush1.bf16.msra.mxu0 0
      %1618 = vmatprep.subr.bf16.mxu0 0
      %1619 = vmatpush1.bf16.msra.mxu0 0
      %1620 = vmatprep.subr.bf16.mxu0 0
      %1621 = vmatpush1.bf16.msra.mxu0 0
      %1622 = vmatprep.subr.bf16.mxu0 0
      %1623 = vmatpush1.bf16.msra.mxu0 0
      %1624 = vmatprep.subr.bf16.mxu0 0
      %1625 = vmatpush1.bf16.msra.mxu0 0
      %1626 = vmatprep.subr.bf16.mxu0 0
      %1627 = vmatpush1.bf16.msra.mxu0 0
      %1628 = vmatprep.subr.bf16.mxu0 0
      %1629 = vmatpush1.bf16.msra.mxu0 0
      %1630 = vmatprep.subr.bf16.mxu0 0
      %1631 = vmatpush1.bf16.msra.mxu0 0
      %1632 = vmatprep.subr.bf16.mxu0 0
      %1633 = vmatpush1.bf16.msra.mxu0 0
      %1634 = vmatprep.mubr.bf16.mxu0 0
      %1635 = vmatmul.mubr.bf16.gmra.mrb[0].mxu0 %v1597
      %v1636 = vpop.f32.mrb[0].mxu0
      %v1637 = vadd.f32 0.0, %v1636
      %v1638 = vpop.f32.mrb[0].mxu0
      %v1639 = vpop.f32.mrb[0].mxu0
      %v1640 = vadd.f32 0.0, %v1639
      %v1641 = vpop.f32.mrb[0].mxu0
      %1642 = vdwg.mxu0
      %v1643 = vadd.f32 %v1586, %v1637
      %v1644 = vadd.f32 %v1587, %v1640
      %v1645 = vld [vmem:[%s1190] sm:$0xf]
      %v1646 = vld [vmem:[%s1190 + $0x4] sm:$0xf]
      %v1647 = vld [vmem:[%s1190 + $0x8] sm:$0x1]
      %v1648 = vld [vmem:[%s468] sm:$0x3]
      %v1652 = vunpack.c.l.b16 %v1645
      %v1653 = vunpack.c.l.b16 %v1646
      %v1654 = vunpack.c.l.b16 %v1647
      %v1655 = vpack.c.b16 %v1653, %v1652
      %v1656 = vpack.c.b16 %v1654, %v1654
      %v1658 = vshrl.u32 %v1655, 16
      %v1660 = vshll.u32 %v1655, 16
      %v1662 = vrot.slane %v1660, 1
      %v1663 = vor.u32 %v1658, %v1662
      %v1665 = vshll.u32 %v1656, 16
      %v1667 = vrot.slane %v1665, 1
      %v1668 = vsel %vm236, %v1663, %v1667
      %v1670 = vsel %vm249, %v1668, 0
      %v1673 = vsel %vm253, %v1648, 0
      %1675 = vmatprep.subr.bf16.mxu0 0
      %1676 = vmatpush1.bf16.msra.mxu0 %v1673
      %1677 = vmatprep.subr.bf16.mxu0 0
      %1678 = vmatpush1.bf16.msra.mxu0 0
      %1679 = vmatprep.subr.bf16.mxu0 0
      %1680 = vmatpush1.bf16.msra.mxu0 0
      %1681 = vmatprep.subr.bf16.mxu0 0
      %1682 = vmatpush1.bf16.msra.mxu0 0
      %1683 = vmatprep.subr.bf16.mxu0 0
      %1684 = vmatpush1.bf16.msra.mxu0 0
      %1685 = vmatprep.subr.bf16.mxu0 0
      %1686 = vmatpush1.bf16.msra.mxu0 0
      %1687 = vmatprep.subr.bf16.mxu0 0
      %1688 = vmatpush1.bf16.msra.mxu0 0
      %1689 = vmatprep.subr.bf16.mxu0 0
      %1690 = vmatpush1.bf16.msra.mxu0 0
      %1691 = vmatprep.subr.bf16.mxu0 0
      %1692 = vmatpush1.bf16.msra.mxu0 0
      %1693 = vmatprep.subr.bf16.mxu0 0
      %1694 = vmatpush1.bf16.msra.mxu0 0
      %1695 = vmatprep.subr.bf16.mxu0 0
      %1696 = vmatpush1.bf16.msra.mxu0 0
      %1697 = vmatprep.subr.bf16.mxu0 0
      %1698 = vmatpush1.bf16.msra.mxu0 0
      %1699 = vmatprep.subr.bf16.mxu0 0
      %1700 = vmatpush1.bf16.msra.mxu0 0
      %1701 = vmatprep.subr.bf16.mxu0 0
      %1702 = vmatpush1.bf16.msra.mxu0 0
      %1703 = vmatprep.subr.bf16.mxu0 0
      %1704 = vmatpush1.bf16.msra.mxu0 0
      %1705 = vmatprep.subr.bf16.mxu0 0
      %1706 = vmatpush1.bf16.msra.mxu0 0
      %1707 = vmatprep.mubr.bf16.mxu0 0
      %1708 = vmatmul.mubr.bf16.gmra.mrb[0].mxu0 %v1670
      %v1709 = vpop.f32.mrb[0].mxu0
      %v1710 = vadd.f32 0.0, %v1709
      %v1711 = vpop.f32.mrb[0].mxu0
      %v1712 = vpop.f32.mrb[0].mxu0
      %v1713 = vadd.f32 0.0, %v1712
      %v1714 = vpop.f32.mrb[0].mxu0
      %1715 = vdwg.mxu0
      %v1716 = vadd.f32 %v1643, %v1710
      %v1717 = vadd.f32 %v1644, %v1713
      %v1718 = vld [vmem:[%s1190] sm:$0xe]
      %v1719 = vld [vmem:[%s540] sm:$0x3]
      %v1721 = vunpack.c.l.b16 %v1718
      %v1722 = vpack.c.b16 %v1653, %v1721
      %v1723 = vrot.slane %v1722, 1
      %v1724 = vrot.slane %v1656, 1
      %v1725 = vsel %vm350, %v1723, %v1724
      %v1727 = vsel %vm249, %v1725, 0
      %v1730 = vsel %vm253, %v1719, 0
      %1732 = vmatprep.subr.bf16.mxu0 0
      %1733 = vmatpush1.bf16.msra.mxu0 %v1730
      %1734 = vmatprep.subr.bf16.mxu0 0
      %1735 = vmatpush1.bf16.msra.mxu0 0
      %1736 = vmatprep.subr.bf16.mxu0 0
      %1737 = vmatpush1.bf16.msra.mxu0 0
      %1738 = vmatprep.subr.bf16.mxu0 0
      %1739 = vmatpush1.bf16.msra.mxu0 0
      %1740 = vmatprep.subr.bf16.mxu0 0
      %1741 = vmatpush1.bf16.msra.mxu0 0
      %1742 = vmatprep.subr.bf16.mxu0 0
      %1743 = vmatpush1.bf16.msra.mxu0 0
      %1744 = vmatprep.subr.bf16.mxu0 0
      %1745 = vmatpush1.bf16.msra.mxu0 0
      %1746 = vmatprep.subr.bf16.mxu0 0
      %1747 = vmatpush1.bf16.msra.mxu0 0
      %1748 = vmatprep.subr.bf16.mxu0 0
      %1749 = vmatpush1.bf16.msra.mxu0 0
      %1750 = vmatprep.subr.bf16.mxu0 0
      %1751 = vmatpush1.bf16.msra.mxu0 0
      %1752 = vmatprep.subr.bf16.mxu0 0
      %1753 = vmatpush1.bf16.msra.mxu0 0
      %1754 = vmatprep.subr.bf16.mxu0 0
      %1755 = vmatpush1.bf16.msra.mxu0 0
      %1756 = vmatprep.subr.bf16.mxu0 0
      %1757 = vmatpush1.bf16.msra.mxu0 0
      %1758 = vmatprep.subr.bf16.mxu0 0
      %1759 = vmatpush1.bf16.msra.mxu0 0
      %1760 = vmatprep.subr.bf16.mxu0 0
      %1761 = vmatpush1.bf16.msra.mxu0 0
      %1762 = vmatprep.subr.bf16.mxu0 0
      %1763 = vmatpush1.bf16.msra.mxu0 0
      %1764 = vmatprep.mubr.bf16.mxu0 0
      %1765 = vmatmul.mubr.bf16.gmra.mrb[0].mxu0 %v1727
      %v1766 = vpop.f32.mrb[0].mxu0
      %v1767 = vadd.f32 0.0, %v1766
      %v1768 = vpop.f32.mrb[0].mxu0
      %v1769 = vpop.f32.mrb[0].mxu0
      %v1770 = vadd.f32 0.0, %v1769
      %v1771 = vpop.f32.mrb[0].mxu0
      %1772 = vdwg.mxu0
      %v1773 = vadd.f32 %v1716, %v1767
      %v1774 = vadd.f32 %v1717, %v1770
      %s1775 = sadd.s32 %s218, 4
      %s1776 = smul.u32 %s1775, 3
      %s1777 = smul.addr %s1776, 4
      %s1778 = scalar_lea.vmem %s197, %s1777
      %v1779 = vld [vmem:[%s1778] sm:$0xf]
      %v1780 = vld [vmem:[%s1778 + $0x4] sm:$0xf]
      %v1781 = vld [vmem:[%s603] sm:$0x3]
      %v1784 = vunpack.c.l.b16 %v1779
      %v1785 = vunpack.c.l.b16 %v1780
      %v1786 = vpack.c.b16 %v1785, %v1784
      %v1788 = vsel %vm249, %v1786, 0
      %v1791 = vsel %vm253, %v1781, 0
      %1793 = vmatprep.subr.bf16.mxu0 0
      %1794 = vmatpush1.bf16.msra.mxu0 %v1791
      %1795 = vmatprep.subr.bf16.mxu0 0
      %1796 = vmatpush1.bf16.msra.mxu0 0
      %1797 = vmatprep.subr.bf16.mxu0 0
      %1798 = vmatpush1.bf16.msra.mxu0 0
      %1799 = vmatprep.subr.bf16.mxu0 0
      %1800 = vmatpush1.bf16.msra.mxu0 0
      %1801 = vmatprep.subr.bf16.mxu0 0
      %1802 = vmatpush1.bf16.msra.mxu0 0
      %1803 = vmatprep.subr.bf16.mxu0 0
      %1804 = vmatpush1.bf16.msra.mxu0 0
      %1805 = vmatprep.subr.bf16.mxu0 0
      %1806 = vmatpush1.bf16.msra.mxu0 0
      %1807 = vmatprep.subr.bf16.mxu0 0
      %1808 = vmatpush1.bf16.msra.mxu0 0
      %1809 = vmatprep.subr.bf16.mxu0 0
      %1810 = vmatpush1.bf16.msra.mxu0 0
      %1811 = vmatprep.subr.bf16.mxu0 0
      %1812 = vmatpush1.bf16.msra.mxu0 0
      %1813 = vmatprep.subr.bf16.mxu0 0
      %1814 = vmatpush1.bf16.msra.mxu0 0
      %1815 = vmatprep.subr.bf16.mxu0 0
      %1816 = vmatpush1.bf16.msra.mxu0 0
      %1817 = vmatprep.subr.bf16.mxu0 0
      %1818 = vmatpush1.bf16.msra.mxu0 0
      %1819 = vmatprep.subr.bf16.mxu0 0
      %1820 = vmatpush1.bf16.msra.mxu0 0
      %1821 = vmatprep.subr.bf16.mxu0 0
      %1822 = vmatpush1.bf16.msra.mxu0 0
      %1823 = vmatprep.subr.bf16.mxu0 0
      %1824 = vmatpush1.bf16.msra.mxu0 0
      %1825 = vmatprep.mubr.bf16.mxu0 0
      %1826 = vmatmul.mubr.bf16.gmra.mrb[0].mxu0 %v1788
      %v1827 = vpop.f32.mrb[0].mxu0
      %v1828 = vadd.f32 0.0, %v1827
      %v1829 = vpop.f32.mrb[0].mxu0
      %v1830 = vpop.f32.mrb[0].mxu0
      %v1831 = vadd.f32 0.0, %v1830
      %v1832 = vpop.f32.mrb[0].mxu0
      %1833 = vdwg.mxu0
      %v1834 = vadd.f32 %v1773, %v1828
      %v1835 = vadd.f32 %v1774, %v1831
      %v1836 = vld [vmem:[%s1778] sm:$0xf]
      %v1837 = vld [vmem:[%s1778 + $0x4] sm:$0xf]
      %v1838 = vld [vmem:[%s1778 + $0x8] sm:$0x1]
      %v1839 = vld [vmem:[%s662] sm:$0x3]
      %v1843 = vunpack.c.l.b16 %v1836
      %v1844 = vunpack.c.l.b16 %v1837
      %v1845 = vunpack.c.l.b16 %v1838
      %v1846 = vpack.c.b16 %v1844, %v1843
      %v1847 = vpack.c.b16 %v1845, %v1845
      %v1849 = vshrl.u32 %v1846, 16
      %v1851 = vshll.u32 %v1846, 16
      %v1853 = vrot.slane %v1851, 1
      %v1854 = vor.u32 %v1849, %v1853
      %v1856 = vshll.u32 %v1847, 16
      %v1858 = vrot.slane %v1856, 1
      %v1859 = vsel %vm236, %v1854, %v1858
      %v1861 = vsel %vm249, %v1859, 0
      %v1864 = vsel %vm253, %v1839, 0
      %1866 = vmatprep.subr.bf16.mxu0 0
      %1867 = vmatpush1.bf16.msra.mxu0 %v1864
      %1868 = vmatprep.subr.bf16.mxu0 0
      %1869 = vmatpush1.bf16.msra.mxu0 0
      %1870 = vmatprep.subr.bf16.mxu0 0
      %1871 = vmatpush1.bf16.msra.mxu0 0
      %1872 = vmatprep.subr.bf16.mxu0 0
      %1873 = vmatpush1.bf16.msra.mxu0 0
      %1874 = vmatprep.subr.bf16.mxu0 0
      %1875 = vmatpush1.bf16.msra.mxu0 0
      %1876 = vmatprep.subr.bf16.mxu0 0
      %1877 = vmatpush1.bf16.msra.mxu0 0
      %1878 = vmatprep.subr.bf16.mxu0 0
      %1879 = vmatpush1.bf16.msra.mxu0 0
      %1880 = vmatprep.subr.bf16.mxu0 0
      %1881 = vmatpush1.bf16.msra.mxu0 0
      %1882 = vmatprep.subr.bf16.mxu0 0
      %1883 = vmatpush1.bf16.msra.mxu0 0
      %1884 = vmatprep.subr.bf16.mxu0 0
      %1885 = vmatpush1.bf16.msra.mxu0 0
      %1886 = vmatprep.subr.bf16.mxu0 0
      %1887 = vmatpush1.bf16.msra.mxu0 0
      %1888 = vmatprep.subr.bf16.mxu0 0
      %1889 = vmatpush1.bf16.msra.mxu0 0
      %1890 = vmatprep.subr.bf16.mxu0 0
      %1891 = vmatpush1.bf16.msra.mxu0 0
      %1892 = vmatprep.subr.bf16.mxu0 0
      %1893 = vmatpush1.bf16.msra.mxu0 0
      %1894 = vmatprep.subr.bf16.mxu0 0
      %1895 = vmatpush1.bf16.msra.mxu0 0
      %1896 = vmatprep.subr.bf16.mxu0 0
      %1897 = vmatpush1.bf16.msra.mxu0 0
      %1898 = vmatprep.mubr.bf16.mxu0 0
      %1899 = vmatmul.mubr.bf16.gmra.mrb[0].mxu0 %v1861
      %v1900 = vpop.f32.mrb[0].mxu0
      %v1901 = vadd.f32 0.0, %v1900
      %v1902 = vpop.f32.mrb[0].mxu0
      %v1903 = vpop.f32.mrb[0].mxu0
      %v1904 = vadd.f32 0.0, %v1903
      %v1905 = vpop.f32.mrb[0].mxu0
      %1906 = vdwg.mxu0
      %v1907 = vadd.f32 %v1834, %v1901
      %v1908 = vadd.f32 %v1835, %v1904
      %v1909 = vld [vmem:[%s1778] sm:$0xe]
      %v1910 = vld [vmem:[%s734] sm:$0x3]
      %v1912 = vunpack.c.l.b16 %v1909
      %v1913 = vpack.c.b16 %v1844, %v1912
      %v1914 = vrot.slane %v1913, 1
      %v1915 = vrot.slane %v1847, 1
      %v1916 = vsel %vm350, %v1914, %v1915
      %v1918 = vsel %vm249, %v1916, 0
      %v1921 = vsel %vm253, %v1910, 0
      %1923 = vmatprep.subr.bf16.mxu0 0
      %1924 = vmatpush1.bf16.msra.mxu0 %v1921
      %1925 = vmatprep.subr.bf16.mxu0 0
      %1926 = vmatpush1.bf16.msra.mxu0 0
      %1927 = vmatprep.subr.bf16.mxu0 0
      %1928 = vmatpush1.bf16.msra.mxu0 0
      %1929 = vmatprep.subr.bf16.mxu0 0
      %1930 = vmatpush1.bf16.msra.mxu0 0
      %1931 = vmatprep.subr.bf16.mxu0 0
      %1932 = vmatpush1.bf16.msra.mxu0 0
      %1933 = vmatprep.subr.bf16.mxu0 0
      %1934 = vmatpush1.bf16.msra.mxu0 0
      %1935 = vmatprep.subr.bf16.mxu0 0
      %1936 = vmatpush1.bf16.msra.mxu0 0
      %1937 = vmatprep.subr.bf16.mxu0 0
      %1938 = vmatpush1.bf16.msra.mxu0 0
      %1939 = vmatprep.subr.bf16.mxu0 0
      %1940 = vmatpush1.bf16.msra.mxu0 0
      %1941 = vmatprep.subr.bf16.mxu0 0
      %1942 = vmatpush1.bf16.msra.mxu0 0
      %1943 = vmatprep.subr.bf16.mxu0 0
      %1944 = vmatpush1.bf16.msra.mxu0 0
      %1945 = vmatprep.subr.bf16.mxu0 0
      %1946 = vmatpush1.bf16.msra.mxu0 0
      %1947 = vmatprep.subr.bf16.mxu0 0
      %1948 = vmatpush1.bf16.msra.mxu0 0
      %1949 = vmatprep.subr.bf16.mxu0 0
      %1950 = vmatpush1.bf16.msra.mxu0 0
      %1951 = vmatprep.subr.bf16.mxu0 0
      %1952 = vmatpush1.bf16.msra.mxu0 0
      %1953 = vmatprep.subr.bf16.mxu0 0
      %1954 = vmatpush1.bf16.msra.mxu0 0
      %1955 = vmatprep.mubr.bf16.mxu0 0
      %1956 = vmatmul.mubr.bf16.gmra.mrb[0].mxu0 %v1918
      %v1957 = vpop.f32.mrb[0].mxu0
      %v1958 = vadd.f32 0.0, %v1957
      %v1959 = vpop.f32.mrb[0].mxu0
      %v1960 = vpop.f32.mrb[0].mxu0
      %v1961 = vadd.f32 0.0, %v1960
      %v1962 = vpop.f32.mrb[0].mxu0
      %1963 = vdwg.mxu0
      %v1964 = vadd.f32 %v1907, %v1958
      %v1965 = vadd.f32 %v1908, %v1961
      %v1966 = vpack.c.bf16 %v1965, %v1964
      %v1968 = vunpack.c.l.b16 %v1966
      %v1969 = vunpack.c.h.b16 %v1966
      %v1970 = vpack.c.b16 %v1968, %v1968
      %v1971 = vpack.c.b16 %v1969, %v1969
      %s1974 = scalar_lea.vmem %s207, 16
      %1975 = vst [vmem:[%s1974] sm:$0xf] %v1970
      %1976 = vst [vmem:[%s1974 + $0x4] sm:$0xf] %v1971
      %p1977 = scmp.lt.s32.totalorder %s597, 16
      %s1978 = scalar_select %p1977, 1, 0
      %s1979 = scvt.s32.f32 %s1978
      %v1980 = vadd.f32 %v1964, %v1965
      %v1981 = vrot.slane %v1980, 4
      %v1982 = vadd.f32 %v1980, %v1981
      %v1983 = vrot.slane %v1982, 2
      %v1984 = vadd.f32 %v1982, %v1983
      %v1985 = vrot.slane %v1984, 1
      %v1986 = vadd.f32 %v1984, %v1985
      %v1987 = vstv %s1979
      %v1988 = vmul.f32 %v1987, %v1986
      %v1989 = vadd.f32 %v1401, %v1988
      %v1990 = vmul.f32 %v1964, %v1964
      %v1991 = vmul.f32 %v1965, %v1965
      %v1992 = vadd.f32 %v1990, %v1991
      %v1993 = vrot.slane %v1992, 4
      %v1994 = vadd.f32 %v1992, %v1993
      %v1995 = vrot.slane %v1994, 2
      %v1996 = vadd.f32 %v1994, %v1995
      %v1997 = vrot.slane %v1996, 1
      %v1998 = vadd.f32 %v1996, %v1997
      %v1999 = vmul.f32 %v1987, %v1998
      %v2000 = vadd.f32 %v1412, %v1999
      %v2001 = vld [vmem:[%s1190] sm:$0xf]
      %v2002 = vld [vmem:[%s1190 + $0x4] sm:$0xf]
      %v2003 = vld [vmem:[%s1] sm:$0x3]
      %v2004 = vld [vmem:[%s1190 + $0x8] sm:$0x1]
      %v2005 = vld [vmem:[%s226] sm:$0x3]
      %v2009 = vunpack.c.l.b16 %v2001
      %v2010 = vunpack.c.l.b16 %v2002
      %v2011 = vunpack.c.l.b16 %v2004
      %v2012 = vpack.c.b16 %v2010, %v2009
      %v2013 = vpack.c.b16 %v2011, %v2011
      %v2015 = vshrl.u32 %v2012, 16
      %v2017 = vshll.u32 %v2012, 16
      %v2019 = vrot.slane %v2017, 1
      %v2020 = vor.u32 %v2015, %v2019
      %v2022 = vshll.u32 %v2013, 16
      %v2024 = vrot.slane %v2022, 1
      %v2025 = vsel %vm236, %v2020, %v2024
      %v2027 = vsel %vm249, %v2025, 0
      %v2030 = vsel %vm253, %v2005, 0
      %2032 = vmatprep.subr.bf16.mxu0 0
      %2033 = vmatpush1.bf16.msra.mxu0 %v2030
      %2034 = vmatprep.subr.bf16.mxu0 0
      %2035 = vmatpush1.bf16.msra.mxu0 0
      %2036 = vmatprep.subr.bf16.mxu0 0
      %2037 = vmatpush1.bf16.msra.mxu0 0
      %2038 = vmatprep.subr.bf16.mxu0 0
      %2039 = vmatpush1.bf16.msra.mxu0 0
      %2040 = vmatprep.subr.bf16.mxu0 0
      %2041 = vmatpush1.bf16.msra.mxu0 0
      %2042 = vmatprep.subr.bf16.mxu0 0
      %2043 = vmatpush1.bf16.msra.mxu0 0
      %2044 = vmatprep.subr.bf16.mxu0 0
      %2045 = vmatpush1.bf16.msra.mxu0 0
      %2046 = vmatprep.subr.bf16.mxu0 0
      %2047 = vmatpush1.bf16.msra.mxu0 0
      %2048 = vmatprep.subr.bf16.mxu0 0
      %2049 = vmatpush1.bf16.msra.mxu0 0
      %2050 = vmatprep.subr.bf16.mxu0 0
      %2051 = vmatpush1.bf16.msra.mxu0 0
      %2052 = vmatprep.subr.bf16.mxu0 0
      %2053 = vmatpush1.bf16.msra.mxu0 0
      %2054 = vmatprep.subr.bf16.mxu0 0
      %2055 = vmatpush1.bf16.msra.mxu0 0
      %2056 = vmatprep.subr.bf16.mxu0 0
      %2057 = vmatpush1.bf16.msra.mxu0 0
      %2058 = vmatprep.subr.bf16.mxu0 0
      %2059 = vmatpush1.bf16.msra.mxu0 0
      %2060 = vmatprep.subr.bf16.mxu0 0
      %2061 = vmatpush1.bf16.msra.mxu0 0
      %2062 = vmatprep.subr.bf16.mxu0 0
      %2063 = vmatpush1.bf16.msra.mxu0 0
      %2064 = vmatprep.mubr.bf16.mxu0 0
      %2065 = vmatmul.mubr.bf16.gmra.mrb[0].mxu0 %v2027
      %v2066 = vpop.f32.mrb[0].mxu0
      %v2067 = vadd.f32 0.0, %v2066
      %v2068 = vpop.f32.mrb[0].mxu0
      %v2069 = vpop.f32.mrb[0].mxu0
      %v2070 = vadd.f32 0.0, %v2069
      %v2071 = vpop.f32.mrb[0].mxu0
      %2072 = vdwg.mxu0
      %v2073 = vsel %vm249, %v2012, 0
      %v2076 = vsel %vm253, %v2003, 0
      %2078 = vmatprep.subr.bf16.mxu0 0
      %2079 = vmatpush1.bf16.msra.mxu0 %v2076
      %2080 = vmatprep.subr.bf16.mxu0 0
      %2081 = vmatpush1.bf16.msra.mxu0 0
      %2082 = vmatprep.subr.bf16.mxu0 0
      %2083 = vmatpush1.bf16.msra.mxu0 0
      %2084 = vmatprep.subr.bf16.mxu0 0
      %2085 = vmatpush1.bf16.msra.mxu0 0
      %2086 = vmatprep.subr.bf16.mxu0 0
      %2087 = vmatpush1.bf16.msra.mxu0 0
      %2088 = vmatprep.subr.bf16.mxu0 0
      %2089 = vmatpush1.bf16.msra.mxu0 0
      %2090 = vmatprep.subr.bf16.mxu0 0
      %2091 = vmatpush1.bf16.msra.mxu0 0
      %2092 = vmatprep.subr.bf16.mxu0 0
      %2093 = vmatpush1.bf16.msra.mxu0 0
      %2094 = vmatprep.subr.bf16.mxu0 0
      %2095 = vmatpush1.bf16.msra.mxu0 0
      %2096 = vmatprep.subr.bf16.mxu0 0
      %2097 = vmatpush1.bf16.msra.mxu0 0
      %2098 = vmatprep.subr.bf16.mxu0 0
      %2099 = vmatpush1.bf16.msra.mxu0 0
      %2100 = vmatprep.subr.bf16.mxu0 0
      %2101 = vmatpush1.bf16.msra.mxu0 0
      %2102 = vmatprep.subr.bf16.mxu0 0
      %2103 = vmatpush1.bf16.msra.mxu0 0
      %2104 = vmatprep.subr.bf16.mxu0 0
      %2105 = vmatpush1.bf16.msra.mxu0 0
      %2106 = vmatprep.subr.bf16.mxu0 0
      %2107 = vmatpush1.bf16.msra.mxu0 0
      %2108 = vmatprep.subr.bf16.mxu0 0
      %2109 = vmatpush1.bf16.msra.mxu0 0
      %2110 = vmatprep.mubr.bf16.mxu0 0
      %2111 = vmatmul.mubr.bf16.gmra.mrb[0].mxu0 %v2073
      %v2112 = vpop.f32.mrb[0].mxu0
      %v2113 = vadd.f32 %v2067, %v2112
      %v2114 = vpop.f32.mrb[0].mxu0
      %v2115 = vpop.f32.mrb[0].mxu0
      %v2116 = vadd.f32 %v2070, %v2115
      %v2117 = vpop.f32.mrb[0].mxu0
      %2118 = vdwg.mxu0
      %v2119 = vld [vmem:[%s1190] sm:$0xe]
      %v2120 = vld [vmem:[%s345] sm:$0x3]
      %v2122 = vunpack.c.l.b16 %v2119
      %v2123 = vpack.c.b16 %v2010, %v2122
      %v2124 = vrot.slane %v2123, 1
      %v2125 = vrot.slane %v2013, 1
      %v2126 = vsel %vm350, %v2124, %v2125
      %v2128 = vsel %vm249, %v2126, 0
      %v2131 = vsel %vm253, %v2120, 0
      %2133 = vmatprep.subr.bf16.mxu0 0
      %2134 = vmatpush1.bf16.msra.mxu0 %v2131
      %2135 = vmatprep.subr.bf16.mxu0 0
      %2136 = vmatpush1.bf16.msra.mxu0 0
      %2137 = vmatprep.subr.bf16.mxu0 0
      %2138 = vmatpush1.bf16.msra.mxu0 0
      %2139 = vmatprep.subr.bf16.mxu0 0
      %2140 = vmatpush1.bf16.msra.mxu0 0
      %2141 = vmatprep.subr.bf16.mxu0 0
      %2142 = vmatpush1.bf16.msra.mxu0 0
      %2143 = vmatprep.subr.bf16.mxu0 0
      %2144 = vmatpush1.bf16.msra.mxu0 0
      %2145 = vmatprep.subr.bf16.mxu0 0
      %2146 = vmatpush1.bf16.msra.mxu0 0
      %2147 = vmatprep.subr.bf16.mxu0 0
      %2148 = vmatpush1.bf16.msra.mxu0 0
      %2149 = vmatprep.subr.bf16.mxu0 0
      %2150 = vmatpush1.bf16.msra.mxu0 0
      %2151 = vmatprep.subr.bf16.mxu0 0
      %2152 = vmatpush1.bf16.msra.mxu0 0
      %2153 = vmatprep.subr.bf16.mxu0 0
      %2154 = vmatpush1.bf16.msra.mxu0 0
      %2155 = vmatprep.subr.bf16.mxu0 0
      %2156 = vmatpush1.bf16.msra.mxu0 0
      %2157 = vmatprep.subr.bf16.mxu0 0
      %2158 = vmatpush1.bf16.msra.mxu0 0
      %2159 = vmatprep.subr.bf16.mxu0 0
      %2160 = vmatpush1.bf16.msra.mxu0 0
      %2161 = vmatprep.subr.bf16.mxu0 0
      %2162 = vmatpush1.bf16.msra.mxu0 0
      %2163 = vmatprep.subr.bf16.mxu0 0
      %2164 = vmatpush1.bf16.msra.mxu0 0
      %2165 = vmatprep.mubr.bf16.mxu0 0
      %2166 = vmatmul.mubr.bf16.gmra.mrb[0].mxu0 %v2128
      %v2167 = vpop.f32.mrb[0].mxu0
      %v2168 = vadd.f32 0.0, %v2167
      %v2169 = vpop.f32.mrb[0].mxu0
      %v2170 = vpop.f32.mrb[0].mxu0
      %v2171 = vadd.f32 0.0, %v2170
      %v2172 = vpop.f32.mrb[0].mxu0
      %2173 = vdwg.mxu0
      %v2174 = vadd.f32 %v2113, %v2168
      %v2175 = vadd.f32 %v2116, %v2171
      %v2176 = vld [vmem:[%s1778] sm:$0xf]
      %v2177 = vld [vmem:[%s1778 + $0x4] sm:$0xf]
      %v2178 = vld [vmem:[%s409] sm:$0x3]
      %v2181 = vunpack.c.l.b16 %v2176
      %v2182 = vunpack.c.l.b16 %v2177
      %v2183 = vpack.c.b16 %v2182, %v2181
      %v2185 = vsel %vm249, %v2183, 0
      %v2188 = vsel %vm253, %v2178, 0
      %2190 = vmatprep.subr.bf16.mxu0 0
      %2191 = vmatpush1.bf16.msra.mxu0 %v2188
      %2192 = vmatprep.subr.bf16.mxu0 0
      %2193 = vmatpush1.bf16.msra.mxu0 0
      %2194 = vmatprep.subr.bf16.mxu0 0
      %2195 = vmatpush1.bf16.msra.mxu0 0
      %2196 = vmatprep.subr.bf16.mxu0 0
      %2197 = vmatpush1.bf16.msra.mxu0 0
      %2198 = vmatprep.subr.bf16.mxu0 0
      %2199 = vmatpush1.bf16.msra.mxu0 0
      %2200 = vmatprep.subr.bf16.mxu0 0
      %2201 = vmatpush1.bf16.msra.mxu0 0
      %2202 = vmatprep.subr.bf16.mxu0 0
      %2203 = vmatpush1.bf16.msra.mxu0 0
      %2204 = vmatprep.subr.bf16.mxu0 0
      %2205 = vmatpush1.bf16.msra.mxu0 0
      %2206 = vmatprep.subr.bf16.mxu0 0
      %2207 = vmatpush1.bf16.msra.mxu0 0
      %2208 = vmatprep.subr.bf16.mxu0 0
      %2209 = vmatpush1.bf16.msra.mxu0 0
      %2210 = vmatprep.subr.bf16.mxu0 0
      %2211 = vmatpush1.bf16.msra.mxu0 0
      %2212 = vmatprep.subr.bf16.mxu0 0
      %2213 = vmatpush1.bf16.msra.mxu0 0
      %2214 = vmatprep.subr.bf16.mxu0 0
      %2215 = vmatpush1.bf16.msra.mxu0 0
      %2216 = vmatprep.subr.bf16.mxu0 0
      %2217 = vmatpush1.bf16.msra.mxu0 0
      %2218 = vmatprep.subr.bf16.mxu0 0
      %2219 = vmatpush1.bf16.msra.mxu0 0
      %2220 = vmatprep.subr.bf16.mxu0 0
      %2221 = vmatpush1.bf16.msra.mxu0 0
      %2222 = vmatprep.mubr.bf16.mxu0 0
      %2223 = vmatmul.mubr.bf16.gmra.mrb[0].mxu0 %v2185
      %v2224 = vpop.f32.mrb[0].mxu0
      %v2225 = vadd.f32 0.0, %v2224
      %v2226 = vpop.f32.mrb[0].mxu0
      %v2227 = vpop.f32.mrb[0].mxu0
      %v2228 = vadd.f32 0.0, %v2227
      %v2229 = vpop.f32.mrb[0].mxu0
      %2230 = vdwg.mxu0
      %v2231 = vadd.f32 %v2174, %v2225
      %v2232 = vadd.f32 %v2175, %v2228
      %v2233 = vld [vmem:[%s1778] sm:$0xf]
      %v2234 = vld [vmem:[%s1778 + $0x4] sm:$0xf]
      %v2235 = vld [vmem:[%s1778 + $0x8] sm:$0x1]
      %v2236 = vld [vmem:[%s468] sm:$0x3]
      %v2240 = vunpack.c.l.b16 %v2233
      %v2241 = vunpack.c.l.b16 %v2234
      %v2242 = vunpack.c.l.b16 %v2235
      %v2243 = vpack.c.b16 %v2241, %v2240
      %v2244 = vpack.c.b16 %v2242, %v2242
      %v2246 = vshrl.u32 %v2243, 16
      %v2248 = vshll.u32 %v2243, 16
      %v2250 = vrot.slane %v2248, 1
      %v2251 = vor.u32 %v2246, %v2250
      %v2253 = vshll.u32 %v2244, 16
      %v2255 = vrot.slane %v2253, 1
      %v2256 = vsel %vm236, %v2251, %v2255
      %v2258 = vsel %vm249, %v2256, 0
      %v2261 = vsel %vm253, %v2236, 0
      %2263 = vmatprep.subr.bf16.mxu0 0
      %2264 = vmatpush1.bf16.msra.mxu0 %v2261
      %2265 = vmatprep.subr.bf16.mxu0 0
      %2266 = vmatpush1.bf16.msra.mxu0 0
      %2267 = vmatprep.subr.bf16.mxu0 0
      %2268 = vmatpush1.bf16.msra.mxu0 0
      %2269 = vmatprep.subr.bf16.mxu0 0
      %2270 = vmatpush1.bf16.msra.mxu0 0
      %2271 = vmatprep.subr.bf16.mxu0 0
      %2272 = vmatpush1.bf16.msra.mxu0 0
      %2273 = vmatprep.subr.bf16.mxu0 0
      %2274 = vmatpush1.bf16.msra.mxu0 0
      %2275 = vmatprep.subr.bf16.mxu0 0
      %2276 = vmatpush1.bf16.msra.mxu0 0
      %2277 = vmatprep.subr.bf16.mxu0 0
      %2278 = vmatpush1.bf16.msra.mxu0 0
      %2279 = vmatprep.subr.bf16.mxu0 0
      %2280 = vmatpush1.bf16.msra.mxu0 0
      %2281 = vmatprep.subr.bf16.mxu0 0
      %2282 = vmatpush1.bf16.msra.mxu0 0
      %2283 = vmatprep.subr.bf16.mxu0 0
      %2284 = vmatpush1.bf16.msra.mxu0 0
      %2285 = vmatprep.subr.bf16.mxu0 0
      %2286 = vmatpush1.bf16.msra.mxu0 0
      %2287 = vmatprep.subr.bf16.mxu0 0
      %2288 = vmatpush1.bf16.msra.mxu0 0
      %2289 = vmatprep.subr.bf16.mxu0 0
      %2290 = vmatpush1.bf16.msra.mxu0 0
      %2291 = vmatprep.subr.bf16.mxu0 0
      %2292 = vmatpush1.bf16.msra.mxu0 0
      %2293 = vmatprep.subr.bf16.mxu0 0
      %2294 = vmatpush1.bf16.msra.mxu0 0
      %2295 = vmatprep.mubr.bf16.mxu0 0
      %2296 = vmatmul.mubr.bf16.gmra.mrb[0].mxu0 %v2258
      %v2297 = vpop.f32.mrb[0].mxu0
      %v2298 = vadd.f32 0.0, %v2297
      %v2299 = vpop.f32.mrb[0].mxu0
      %v2300 = vpop.f32.mrb[0].mxu0
      %v2301 = vadd.f32 0.0, %v2300
      %v2302 = vpop.f32.mrb[0].mxu0
      %2303 = vdwg.mxu0
      %v2304 = vadd.f32 %v2231, %v2298
      %v2305 = vadd.f32 %v2232, %v2301
      %v2306 = vld [vmem:[%s1778] sm:$0xe]
      %v2307 = vld [vmem:[%s540] sm:$0x3]
      %v2309 = vunpack.c.l.b16 %v2306
      %v2310 = vpack.c.b16 %v2241, %v2309
      %v2311 = vrot.slane %v2310, 1
      %v2312 = vrot.slane %v2244, 1
      %v2313 = vsel %vm350, %v2311, %v2312
      %v2315 = vsel %vm249, %v2313, 0
      %v2318 = vsel %vm253, %v2307, 0
      %2320 = vmatprep.subr.bf16.mxu0 0
      %2321 = vmatpush1.bf16.msra.mxu0 %v2318
      %2322 = vmatprep.subr.bf16.mxu0 0
      %2323 = vmatpush1.bf16.msra.mxu0 0
      %2324 = vmatprep.subr.bf16.mxu0 0
      %2325 = vmatpush1.bf16.msra.mxu0 0
      %2326 = vmatprep.subr.bf16.mxu0 0
      %2327 = vmatpush1.bf16.msra.mxu0 0
      %2328 = vmatprep.subr.bf16.mxu0 0
      %2329 = vmatpush1.bf16.msra.mxu0 0
      %2330 = vmatprep.subr.bf16.mxu0 0
      %2331 = vmatpush1.bf16.msra.mxu0 0
      %2332 = vmatprep.subr.bf16.mxu0 0
      %2333 = vmatpush1.bf16.msra.mxu0 0
      %2334 = vmatprep.subr.bf16.mxu0 0
      %2335 = vmatpush1.bf16.msra.mxu0 0
      %2336 = vmatprep.subr.bf16.mxu0 0
      %2337 = vmatpush1.bf16.msra.mxu0 0
      %2338 = vmatprep.subr.bf16.mxu0 0
      %2339 = vmatpush1.bf16.msra.mxu0 0
      %2340 = vmatprep.subr.bf16.mxu0 0
      %2341 = vmatpush1.bf16.msra.mxu0 0
      %2342 = vmatprep.subr.bf16.mxu0 0
      %2343 = vmatpush1.bf16.msra.mxu0 0
      %2344 = vmatprep.subr.bf16.mxu0 0
      %2345 = vmatpush1.bf16.msra.mxu0 0
      %2346 = vmatprep.subr.bf16.mxu0 0
      %2347 = vmatpush1.bf16.msra.mxu0 0
      %2348 = vmatprep.subr.bf16.mxu0 0
      %2349 = vmatpush1.bf16.msra.mxu0 0
      %2350 = vmatprep.subr.bf16.mxu0 0
      %2351 = vmatpush1.bf16.msra.mxu0 0
      %2352 = vmatprep.mubr.bf16.mxu0 0
      %2353 = vmatmul.mubr.bf16.gmra.mrb[0].mxu0 %v2315
      %v2354 = vpop.f32.mrb[0].mxu0
      %v2355 = vadd.f32 0.0, %v2354
      %v2356 = vpop.f32.mrb[0].mxu0
      %v2357 = vpop.f32.mrb[0].mxu0
      %v2358 = vadd.f32 0.0, %v2357
      %v2359 = vpop.f32.mrb[0].mxu0
      %2360 = vdwg.mxu0
      %v2361 = vadd.f32 %v2304, %v2355
      %v2362 = vadd.f32 %v2305, %v2358
      %s2363 = sadd.s32 %s218, 5
      %s2364 = smul.u32 %s2363, 3
      %s2365 = smul.addr %s2364, 4
      %s2366 = scalar_lea.vmem %s197, %s2365
      %v2367 = vld [vmem:[%s2366] sm:$0xf]
      %v2368 = vld [vmem:[%s2366 + $0x4] sm:$0xf]
      %v2369 = vld [vmem:[%s603] sm:$0x3]
      %v2372 = vunpack.c.l.b16 %v2367
      %v2373 = vunpack.c.l.b16 %v2368
      %v2374 = vpack.c.b16 %v2373, %v2372
      %v2376 = vsel %vm249, %v2374, 0
      %v2379 = vsel %vm253, %v2369, 0
      %2381 = vmatprep.subr.bf16.mxu0 0
      %2382 = vmatpush1.bf16.msra.mxu0 %v2379
      %2383 = vmatprep.subr.bf16.mxu0 0
      %2384 = vmatpush1.bf16.msra.mxu0 0
      %2385 = vmatprep.subr.bf16.mxu0 0
      %2386 = vmatpush1.bf16.msra.mxu0 0
      %2387 = vmatprep.subr.bf16.mxu0 0
      %2388 = vmatpush1.bf16.msra.mxu0 0
      %2389 = vmatprep.subr.bf16.mxu0 0
      %2390 = vmatpush1.bf16.msra.mxu0 0
      %2391 = vmatprep.subr.bf16.mxu0 0
      %2392 = vmatpush1.bf16.msra.mxu0 0
      %2393 = vmatprep.subr.bf16.mxu0 0
      %2394 = vmatpush1.bf16.msra.mxu0 0
      %2395 = vmatprep.subr.bf16.mxu0 0
      %2396 = vmatpush1.bf16.msra.mxu0 0
      %2397 = vmatprep.subr.bf16.mxu0 0
      %2398 = vmatpush1.bf16.msra.mxu0 0
      %2399 = vmatprep.subr.bf16.mxu0 0
      %2400 = vmatpush1.bf16.msra.mxu0 0
      %2401 = vmatprep.subr.bf16.mxu0 0
      %2402 = vmatpush1.bf16.msra.mxu0 0
      %2403 = vmatprep.subr.bf16.mxu0 0
      %2404 = vmatpush1.bf16.msra.mxu0 0
      %2405 = vmatprep.subr.bf16.mxu0 0
      %2406 = vmatpush1.bf16.msra.mxu0 0
      %2407 = vmatprep.subr.bf16.mxu0 0
      %2408 = vmatpush1.bf16.msra.mxu0 0
      %2409 = vmatprep.subr.bf16.mxu0 0
      %2410 = vmatpush1.bf16.msra.mxu0 0
      %2411 = vmatprep.subr.bf16.mxu0 0
      %2412 = vmatpush1.bf16.msra.mxu0 0
      %2413 = vmatprep.mubr.bf16.mxu0 0
      %2414 = vmatmul.mubr.bf16.gmra.mrb[0].mxu0 %v2376
      %v2415 = vpop.f32.mrb[0].mxu0
      %v2416 = vadd.f32 0.0, %v2415
      %v2417 = vpop.f32.mrb[0].mxu0
      %v2418 = vpop.f32.mrb[0].mxu0
      %v2419 = vadd.f32 0.0, %v2418
      %v2420 = vpop.f32.mrb[0].mxu0
      %2421 = vdwg.mxu0
      %v2422 = vadd.f32 %v2361, %v2416
      %v2423 = vadd.f32 %v2362, %v2419
      %v2424 = vld [vmem:[%s2366] sm:$0xf]
      %v2425 = vld [vmem:[%s2366 + $0x4] sm:$0xf]
      %v2426 = vld [vmem:[%s2366 + $0x8] sm:$0x1]
      %v2427 = vld [vmem:[%s662] sm:$0x3]
      %v2431 = vunpack.c.l.b16 %v2424
      %v2432 = vunpack.c.l.b16 %v2425
      %v2433 = vunpack.c.l.b16 %v2426
      %v2434 = vpack.c.b16 %v2432, %v2431
      %v2435 = vpack.c.b16 %v2433, %v2433
      %v2437 = vshrl.u32 %v2434, 16
      %v2439 = vshll.u32 %v2434, 16
      %v2441 = vrot.slane %v2439, 1
      %v2442 = vor.u32 %v2437, %v2441
      %v2444 = vshll.u32 %v2435, 16
      %v2446 = vrot.slane %v2444, 1
      %v2447 = vsel %vm236, %v2442, %v2446
      %v2449 = vsel %vm249, %v2447, 0
      %v2452 = vsel %vm253, %v2427, 0
      %2454 = vmatprep.subr.bf16.mxu0 0
      %2455 = vmatpush1.bf16.msra.mxu0 %v2452
      %2456 = vmatprep.subr.bf16.mxu0 0
      %2457 = vmatpush1.bf16.msra.mxu0 0
      %2458 = vmatprep.subr.bf16.mxu0 0
      %2459 = vmatpush1.bf16.msra.mxu0 0
      %2460 = vmatprep.subr.bf16.mxu0 0
      %2461 = vmatpush1.bf16.msra.mxu0 0
      %2462 = vmatprep.subr.bf16.mxu0 0
      %2463 = vmatpush1.bf16.msra.mxu0 0
      %2464 = vmatprep.subr.bf16.mxu0 0
      %2465 = vmatpush1.bf16.msra.mxu0 0
      %2466 = vmatprep.subr.bf16.mxu0 0
      %2467 = vmatpush1.bf16.msra.mxu0 0
      %2468 = vmatprep.subr.bf16.mxu0 0
      %2469 = vmatpush1.bf16.msra.mxu0 0
      %2470 = vmatprep.subr.bf16.mxu0 0
      %2471 = vmatpush1.bf16.msra.mxu0 0
      %2472 = vmatprep.subr.bf16.mxu0 0
      %2473 = vmatpush1.bf16.msra.mxu0 0
      %2474 = vmatprep.subr.bf16.mxu0 0
      %2475 = vmatpush1.bf16.msra.mxu0 0
      %2476 = vmatprep.subr.bf16.mxu0 0
      %2477 = vmatpush1.bf16.msra.mxu0 0
      %2478 = vmatprep.subr.bf16.mxu0 0
      %2479 = vmatpush1.bf16.msra.mxu0 0
      %2480 = vmatprep.subr.bf16.mxu0 0
      %2481 = vmatpush1.bf16.msra.mxu0 0
      %2482 = vmatprep.subr.bf16.mxu0 0
      %2483 = vmatpush1.bf16.msra.mxu0 0
      %2484 = vmatprep.subr.bf16.mxu0 0
      %2485 = vmatpush1.bf16.msra.mxu0 0
      %2486 = vmatprep.mubr.bf16.mxu0 0
      %2487 = vmatmul.mubr.bf16.gmra.mrb[0].mxu0 %v2449
      %v2488 = vpop.f32.mrb[0].mxu0
      %v2489 = vadd.f32 0.0, %v2488
      %v2490 = vpop.f32.mrb[0].mxu0
      %v2491 = vpop.f32.mrb[0].mxu0
      %v2492 = vadd.f32 0.0, %v2491
      %v2493 = vpop.f32.mrb[0].mxu0
      %2494 = vdwg.mxu0
      %v2495 = vadd.f32 %v2422, %v2489
      %v2496 = vadd.f32 %v2423, %v2492
      %v2497 = vld [vmem:[%s2366] sm:$0xe]
      %v2498 = vld [vmem:[%s734] sm:$0x3]
      %v2500 = vunpack.c.l.b16 %v2497
      %v2501 = vpack.c.b16 %v2432, %v2500
      %v2502 = vrot.slane %v2501, 1
      %v2503 = vrot.slane %v2435, 1
      %v2504 = vsel %vm350, %v2502, %v2503
      %v2506 = vsel %vm249, %v2504, 0
      %v2509 = vsel %vm253, %v2498, 0
      %2511 = vmatprep.subr.bf16.mxu0 0
      %2512 = vmatpush1.bf16.msra.mxu0 %v2509
      %2513 = vmatprep.subr.bf16.mxu0 0
      %2514 = vmatpush1.bf16.msra.mxu0 0
      %2515 = vmatprep.subr.bf16.mxu0 0
      %2516 = vmatpush1.bf16.msra.mxu0 0
      %2517 = vmatprep.subr.bf16.mxu0 0
      %2518 = vmatpush1.bf16.msra.mxu0 0
      %2519 = vmatprep.subr.bf16.mxu0 0
      %2520 = vmatpush1.bf16.msra.mxu0 0
      %2521 = vmatprep.subr.bf16.mxu0 0
      %2522 = vmatpush1.bf16.msra.mxu0 0
      %2523 = vmatprep.subr.bf16.mxu0 0
      %2524 = vmatpush1.bf16.msra.mxu0 0
      %2525 = vmatprep.subr.bf16.mxu0 0
      %2526 = vmatpush1.bf16.msra.mxu0 0
      %2527 = vmatprep.subr.bf16.mxu0 0
      %2528 = vmatpush1.bf16.msra.mxu0 0
      %2529 = vmatprep.subr.bf16.mxu0 0
      %2530 = vmatpush1.bf16.msra.mxu0 0
      %2531 = vmatprep.subr.bf16.mxu0 0
      %2532 = vmatpush1.bf16.msra.mxu0 0
      %2533 = vmatprep.subr.bf16.mxu0 0
      %2534 = vmatpush1.bf16.msra.mxu0 0
      %2535 = vmatprep.subr.bf16.mxu0 0
      %2536 = vmatpush1.bf16.msra.mxu0 0
      %2537 = vmatprep.subr.bf16.mxu0 0
      %2538 = vmatpush1.bf16.msra.mxu0 0
      %2539 = vmatprep.subr.bf16.mxu0 0
      %2540 = vmatpush1.bf16.msra.mxu0 0
      %2541 = vmatprep.subr.bf16.mxu0 0
      %2542 = vmatpush1.bf16.msra.mxu0 0
      %2543 = vmatprep.mubr.bf16.mxu0 0
      %2544 = vmatmul.mubr.bf16.gmra.mrb[0].mxu0 %v2506
      %v2545 = vpop.f32.mrb[0].mxu0
      %v2546 = vadd.f32 0.0, %v2545
      %v2547 = vpop.f32.mrb[0].mxu0
      %v2548 = vpop.f32.mrb[0].mxu0
      %v2549 = vadd.f32 0.0, %v2548
      %v2550 = vpop.f32.mrb[0].mxu0
      %2551 = vdwg.mxu0
      %v2552 = vadd.f32 %v2495, %v2546
      %v2553 = vadd.f32 %v2496, %v2549
      %v2554 = vpack.c.bf16 %v2553, %v2552
      %v2556 = vunpack.c.l.b16 %v2554
      %v2557 = vunpack.c.h.b16 %v2554
      %v2558 = vpack.c.b16 %v2556, %v2556
      %v2559 = vpack.c.b16 %v2557, %v2557
      %s2562 = scalar_lea.vmem %s207, 24
      %2563 = vst [vmem:[%s2562] sm:$0xf] %v2558
      %2564 = vst [vmem:[%s2562 + $0x4] sm:$0xf] %v2559
      %p2565 = scmp.lt.s32.totalorder %s1187, 16
      %s2566 = scalar_select %p2565, 1, 0
      %s2567 = scvt.s32.f32 %s2566
      %v2568 = vadd.f32 %v2552, %v2553
      %v2569 = vrot.slane %v2568, 4
      %v2570 = vadd.f32 %v2568, %v2569
      %v2571 = vrot.slane %v2570, 2
      %v2572 = vadd.f32 %v2570, %v2571
      %v2573 = vrot.slane %v2572, 1
      %v2574 = vadd.f32 %v2572, %v2573
      %v2575 = vstv %s2567
      %v2576 = vmul.f32 %v2575, %v2574
      %v2577 = vadd.f32 %v1989, %v2576
      %v2578 = vmul.f32 %v2552, %v2552
      %v2579 = vmul.f32 %v2553, %v2553
      %v2580 = vadd.f32 %v2578, %v2579
      %v2581 = vrot.slane %v2580, 4
      %v2582 = vadd.f32 %v2580, %v2581
      %v2583 = vrot.slane %v2582, 2
      %v2584 = vadd.f32 %v2582, %v2583
      %v2585 = vrot.slane %v2584, 1
      %v2586 = vadd.f32 %v2584, %v2585
      %v2587 = vmul.f32 %v2575, %v2586
      %v2588 = vadd.f32 %v2000, %v2587
      %vm2589 = vcmask 1040384
      %v2590 = vsel %vm2589, %v2577, %v2588
      %v2591 = vsel %vm253, %v2590, 0.0
      %2592 = vst [vmem:[%s216] sm:$0xff] %v2591
      %s2593 = smul.u32 4, %s20
      %p2594 = scmp.lt.s32.totalorder %s19, 1
      %s2595 = scalar_select %p2594, %s19, 1
      %p2596 = scmp.lt.s32.totalorder %s2593, 15
      %s2597 = scalar_select %p2596, %s2593, 15
      %s2598 = smul.addr %s2597, 2
      %s2599 = smul.addr %s2595, 32
      %s2600 = sadd.s32 %s2598, %s2599
      %s2601 = smul.addr %s2600, 4
      %s2602 = scalar_lea.vmem %s2, %s2601
      %p2603 = scmp.lt.s32.totalorder %s19, 1
      %s2604 = scalar_select %p2603, %s19, 1
      %p2605 = scmp.lt.s32.totalorder %s20, 3
      %s2606 = scalar_select %p2605, %s20, 3
      %s2607 = smul.addr %s2604, 4
      %s2608 = sadd.s32 %s2606, %s2607
      %s2609 = smul.addr %s2608, 8
      %s2610 = scalar_lea.vmem %s3, %s2609
      // Predicated region
      $region29: #{conv_bn_relu.2} parent=27 // pred_check
        %p2611 = pneg %p94
      $region30: #{conv_bn_relu.2} parent=27 // pred_check_branch
        %2613 = sbr.rel (%p2611) target = $region32
      $region31: #{conv_bn_relu.2} parent=27 // pred_region
        %s2614 = smul.u32 4, %s20
      $region32: #{conv_bn_relu.2} parent=27 // pred_fallthru
        _
      // Predicated region
      $region33: #{conv_bn_relu.2} parent=27 // pred_check
        %p2615 = pneg %p122
      $region34: #{conv_bn_relu.2} parent=27 // pred_check_branch
        %2617 = sbr.rel (%p2615) target = $region36
      $region35: #{conv_bn_relu.2} parent=27 // pred_region
        _
      $region36: #{conv_bn_relu.2} parent=27 // pred_fallthru
        _
    $region28: #{conv_bn_relu.2} parent=5 // pred_fallthru
      _
    %p2618 = scmp.le.s32.totalorder 2, %s10
    // Predicated region
    $region37: #{conv_bn_relu.2} parent=5 // pred_check
      %p2619 = pneg %p2618
    $region38: #{conv_bn_relu.2} parent=5 // pred_check_branch
      %2621 = sbr.rel (%p2619) target = $region40
    $region39: #{conv_bn_relu.2} parent=5 // pred_region
      %s2622 = ssub.s32 %s10, 2
      // Predicated region
      $region41: #{conv_bn_relu.2} parent=39 // pred_check
        %p2623 = pneg %p100
      $region42: #{conv_bn_relu.2} parent=39 // pred_check_branch
        %2625 = sbr.rel (%p2623) target = $region44
      $region43: #{conv_bn_relu.2} parent=39 // pred_region
        %s2626 = smul.u32 4, %s22
        %p2627 = scmp.lt.s32.totalorder %s21, 1
        %s2628 = scalar_select %p2627, %s21, 1
        %p2629 = scmp.lt.s32.totalorder %s2626, 15
        %s2630 = scalar_select %p2629, %s2626, 15
        %s2631 = smul.addr %s2630, 2
        %s2632 = smul.addr %s2628, 32
        %s2633 = sadd.s32 %s2631, %s2632
        %s2634 = smul.addr %s2633, 4
        %s2635 = scalar_lea.vmem %s2, %s2634
      $region44: #{conv_bn_relu.2} parent=39 // pred_fallthru
        _
      // Predicated region
      $region45: #{conv_bn_relu.2} parent=39 // pred_check
        %p2636 = pneg %p128
      $region46: #{conv_bn_relu.2} parent=39 // pred_check_branch
        %2638 = sbr.rel (%p2636) target = $region48
      $region47: #{conv_bn_relu.2} parent=39 // pred_region
        %p2639 = scmp.lt.s32.totalorder %s21, 1
        %s2640 = scalar_select %p2639, %s21, 1
        %p2641 = scmp.lt.s32.totalorder %s22, 3
        %s2642 = scalar_select %p2641, %s22, 3
        %s2643 = smul.addr %s2640, 4
        %s2644 = sadd.s32 %s2642, %s2643
        %s2645 = smul.addr %s2644, 8
        %s2646 = scalar_lea.vmem %s3, %s2645
      $region48: #{conv_bn_relu.2} parent=39 // pred_fallthru
        _
    $region40: #{conv_bn_relu.2} parent=5 // pred_fallthru
      _
  $region6: #{conv_bn_relu.2} parent=0 // loop_footer
    %s14 = sadd.s32 1, %s10
  $region7: #{conv_bn_relu.2} parent=0 // loop_footer_branch
    %9 = sbr.rel target = $region3
  $region8: #{conv_bn_relu.2} parent=0 // loop_exit
    _

</llo_original>
